<compile_context>
chip_gen: v7x
topology: tpu7x:2x2x1
jax: 0.10.0
libtpu: 0.0.40
codegen_flags: <defaults>
</compile_context>

<pallas_src>
import functools

import jax
import jax.numpy as jnp
from jax.experimental import pallas as pl
from jax.experimental.pallas import tpu as pltpu

LANE = 128                      # pad output channels to the 128-lane vreg width
MATMUL_TM = 512                 # M tile (rows); small enough for v7x 64 MiB VMEM
VMEM_LIMIT = 32 * 1024 * 1024   # explicit scoped-VMEM budget (safe on v5e/v6e/v7x)


# ----------------------------------------------------------------------------
# Pallas kernels
# ----------------------------------------------------------------------------
def _matmul_bias_kernel(x_ref, w_ref, b_ref, o_ref, *, apply_relu):
    acc = jnp.dot(x_ref[...], w_ref[...], preferred_element_type=jnp.float32)
    acc = acc + b_ref[...]                      # bias (1, N) f32, broadcasts over rows
    if apply_relu:
        acc = jnp.maximum(acc, 0.0)
    o_ref[...] = acc.astype(o_ref.dtype)


def matmul_bias(x, w, b, *, relu, out_dtype=jnp.bfloat16, tm=MATMUL_TM):
    """y = x @ w + b (optionally ReLU). x:(M,K) bf16, w:(K,N) bf16, b:(1,N) f32.

    Tiled over M with resident weights/bias; N must be a multiple of 128.
    """
    M, K = x.shape
    K2, N = w.shape
    assert K == K2 and b.shape == (1, N) and N % LANE == 0
    tm = min(tm, M)
    grid_m = pl.cdiv(M, tm)
    bytes_accessed = (
        M * K * jnp.dtype(x.dtype).itemsize
        + K * N * jnp.dtype(w.dtype).itemsize
        + N * 4
        + M * N * jnp.dtype(out_dtype).itemsize
    )
    cost = pl.CostEstimate(flops=2 * M * K * N, transcendentals=0,
                           bytes_accessed=bytes_accessed)
    return pl.pallas_call(
        functools.partial(_matmul_bias_kernel, apply_relu=relu),
        out_shape=jax.ShapeDtypeStruct((M, N), out_dtype),
        grid=(grid_m,),
        in_specs=[
            pl.BlockSpec((tm, K), lambda i: (i, 0)),   # activation tile (double-buffered)
            pl.BlockSpec((K, N), lambda i: (0, 0)),    # weights stay VMEM-resident
            pl.BlockSpec((1, N), lambda i: (0, 0)),    # bias stays VMEM-resident
        ],
        out_specs=pl.BlockSpec((tm, N), lambda i: (i, 0)),
        compiler_params=pltpu.CompilerParams(
            dimension_semantics=("parallel",),
            vmem_limit_bytes=VMEM_LIMIT,
        ),
        cost_estimate=cost,
    )(x, w, b)


def _max4_kernel(a_ref, b_ref, c_ref, d_ref, o_ref):
    o_ref[...] = jnp.maximum(
        jnp.maximum(a_ref[...], b_ref[...]),
        jnp.maximum(c_ref[...], d_ref[...]),
    )


def maxpool2x2(x_nhwc, c_real):
    """MaxPool2d(2) on NHWC. Input may carry zero-padded channels; only the first
    `c_real` channels are pooled. Views are flattened to a lane-dense last axis."""
    B, H, W, C = x_nhwc.shape
    Hp, Wp = H // 2, W // 2
    views = [
        x_nhwc[:, i:2 * Hp:2, j:2 * Wp:2, :c_real].reshape(B, Hp, Wp * c_real)
        for i in (0, 1)
        for j in (0, 1)
    ]
    spec = pl.BlockSpec((1, Hp, Wp * c_real), lambda b: (b, 0, 0))
    out = pl.pallas_call(
        _max4_kernel,
        out_shape=jax.ShapeDtypeStruct((B, Hp, Wp * c_real), x_nhwc.dtype),
        grid=(B,),
        in_specs=[spec, spec, spec, spec],
        out_specs=spec,
        compiler_params=pltpu.CompilerParams(
            dimension_semantics=("parallel",),
            vmem_limit_bytes=VMEM_LIMIT,
        ),
    )(*views)
    return out.reshape(B, Hp, Wp, c_real)


# ----------------------------------------------------------------------------
# Glue: im2col, conv wrapper
# ----------------------------------------------------------------------------
def _im2col(x_nhwc, k):
    B, H, W, C = x_nhwc.shape
    Ho, Wo = H - k + 1, W - k + 1
    patches = [
        x_nhwc[:, di:di + Ho, dj:dj + Wo, :]
        for di in range(k)
        for dj in range(k)
    ]
    p = jnp.stack(patches, axis=3)                     # (B, Ho, Wo, k*k, C)
    return p.reshape(B * Ho * Wo, k * k * C), (B, Ho, Wo)


def conv3x3_relu(x_nhwc, wk, bk):
    """3x3 valid conv, stride 1, fused bias+ReLU. wk is pre-reordered/padded (9*Cin, 128)."""
    cols, (B, Ho, Wo) = _im2col(x_nhwc, 3)             # (B*Ho*Wo, 9*Cin) bf16
    out = matmul_bias(cols, wk, bk, relu=True)         # (M, 128) bf16, lane-dense
    return out.reshape(B, Ho, Wo, LANE)


# ----------------------------------------------------------------------------
# Parameters: PyTorch-layout init + one-time repack into kernel layout
# ----------------------------------------------------------------------------
def init_params(key):
    keys = jax.random.split(key, 10)

    def u(k, shape, fan_in):
        bound = 1.0 / jnp.sqrt(jnp.float32(fan_in))
        return jax.random.uniform(k, shape, jnp.float32, -bound, bound)

    return {
        "conv1_w": u(keys[0], (32, 1, 3, 3), 1 * 9),
        "conv1_b": u(keys[1], (32,), 1 * 9),
        "conv2_w": u(keys[2], (64, 32, 3, 3), 32 * 9),
        "conv2_b": u(keys[3], (64,), 32 * 9),
        "conv3_w": u(keys[4], (64, 64, 3, 3), 64 * 9),
        "conv3_b": u(keys[5], (64,), 64 * 9),
        "fc1_w": u(keys[6], (64, 64 * 3 * 3), 64 * 3 * 3),
        "fc1_b": u(keys[7], (64,), 64 * 3 * 3),
        "fc2_w": u(keys[8], (10, 64), 64),
        "fc2_b": u(keys[9], (10,), 64),
    }


def _prep_conv(w_oihw, b):
    """(O,I,kh,kw) torch conv weight -> (kh*kw*I, 128) bf16 matmul weight (O padded),
    bias -> (1,128) f32 (pad region zero so padded channels stay exactly 0 after ReLU)."""
    O, I, kh, kw = w_oihw.shape
    wk = jnp.transpose(w_oihw, (2, 3, 1, 0)).reshape(kh * kw * I, O)
    wk = jnp.pad(wk, ((0, 0), (0, LANE - O))).astype(jnp.bfloat16)
    bk = jnp.pad(b, (0, LANE - O)).astype(jnp.float32).reshape(1, LANE)
    return wk, bk


def _prep_fc1(w, b, c_real=64, hw=3):
    """Fold the PyTorch NCHW flatten order AND the channel padding (64->128) into the
    weight rows so the runtime flatten of the padded NHWC conv3 output is a free reshape."""
    n_out = w.shape[0]
    w4 = w.reshape(n_out, c_real, hw, hw)                       # (N, C, H, W)
    w4 = jnp.pad(w4, ((0, 0), (0, LANE - c_real), (0, 0), (0, 0)))
    wk = jnp.transpose(w4, (2, 3, 1, 0)).reshape(hw * hw * LANE, n_out)  # rows = (h,w,c)
    wk = jnp.pad(wk, ((0, 0), (0, LANE - n_out))).astype(jnp.bfloat16)   # (1152, 128)
    bk = jnp.pad(b, (0, LANE - n_out)).astype(jnp.float32).reshape(1, LANE)
    return wk, bk


def _prep_fc2(w, b):
    n_out, k_in = w.shape                                       # (10, 64)
    wk = jnp.zeros((LANE, LANE), jnp.float32).at[:k_in, :n_out].set(w.T)
    wk = wk.astype(jnp.bfloat16)                                # (128, 128)
    bk = jnp.pad(b, (0, LANE - n_out)).astype(jnp.float32).reshape(1, LANE)
    return wk, bk


def prepare_params(params):
    """One-time host-side repack: transpose / pad / fold / cast to bf16."""
    kp = {}
    kp["conv1_w"], kp["conv1_b"] = _prep_conv(params["conv1_w"], params["conv1_b"])
    kp["conv2_w"], kp["conv2_b"] = _prep_conv(params["conv2_w"], params["conv2_b"])
    kp["conv3_w"], kp["conv3_b"] = _prep_conv(params["conv3_w"], params["conv3_b"])
    kp["fc1_w"], kp["fc1_b"] = _prep_fc1(params["fc1_w"], params["fc1_b"])
    kp["fc2_w"], kp["fc2_b"] = _prep_fc2(params["fc2_w"], params["fc2_b"])
    return kp


# ----------------------------------------------------------------------------
# Forward pass
# ----------------------------------------------------------------------------
def teacher_forward(kparams, x_nchw):
    # NCHW (PyTorch) -> NHWC (kernel layout), bf16 activations
    x = jnp.transpose(x_nchw, (0, 2, 3, 1)).astype(jnp.bfloat16)        # (B,28,28,1)
    x = conv3x3_relu(x, kparams["conv1_w"], kparams["conv1_b"])         # (B,26,26,128)
    x = maxpool2x2(x, c_real=32)                                        # (B,13,13,32)
    x = conv3x3_relu(x, kparams["conv2_w"], kparams["conv2_b"])         # (B,11,11,128)
    x = maxpool2x2(x, c_real=64)                                        # (B,5,5,64)
    x = conv3x3_relu(x, kparams["conv3_w"], kparams["conv3_b"])         # (B,3,3,128)
    B = x.shape[0]
    # Flatten in (h, w, c_pad) order; the PyTorch channel-major permutation and the
    # channel padding are already folded into fc1_w's rows, so this reshape is free.
    x = x.reshape(B, 3 * 3 * LANE)                                      # (B,1152)
    # dropout1 (p=0.25): identity at inference
    x = matmul_bias(x, kparams["fc1_w"], kparams["fc1_b"], relu=True)   # (B,128) bf16
    # dropout2 (p=0.5): identity at inference
    x = matmul_bias(x, kparams["fc2_w"], kparams["fc2_b"], relu=False,
                    out_dtype=jnp.float32)                              # (B,128) f32
    return x[:, :10]
    # TODO(synk): dropout implemented as identity (eval-mode semantics); training-mode
    # stochastic masking would use pltpu.prng_seed/prng_random_bits.


if __name__ == "__main__":
    key = jax.random.PRNGKey(0)
    pkey, xkey = jax.random.split(key)
    params = init_params(pkey)              # PyTorch-layout parameters
    kparams = prepare_params(params)        # one-time repack into kernel layout
    # Input shape implied by fc1 = Linear(64*3*3, 64): MNIST-style (B, 1, 28, 28)
    x = jax.random.normal(xkey, (2, 1, 28, 28), dtype=jnp.float32)

    fwd = jax.jit(teacher_forward)
    out = fwd(kparams, x)
    jax.block_until_ready(out)
    assert out.shape == (2, 10) and out.dtype == jnp.float32
    print("KERNEL_OK")
</pallas_src>

<mosaic_0001>
module attributes {stable_mosaic.version = 11 : i64} {
  func.func @_matmul_bias_kernel(%arg0: i32, %arg1: memref<512x9xbf16, #tpu.memory_space<vmem>>, %arg2: memref<9x128xbf16, #tpu.memory_space<vmem>>, %arg3: memref<1x128xf32, #tpu.memory_space<vmem>>, %arg4: memref<512x128xbf16, #tpu.memory_space<vmem>>) attributes {dimension_semantics = [#tpu.dimension_semantics<parallel>], iteration_bounds = array<i64: 3>, scalar_prefetch = 0 : i64, scratch_operands = 0 : i64, tpu.core_type = #tpu.core_type<tc>, window_params = [{transform_indices = @transform_0, window_bounds = array<i64: 512, 9>}, {pipeline_mode = #tpu.pipeline_mode<synchronous>, transform_indices = @transform_1, window_bounds = array<i64: 9, 128>}, {pipeline_mode = #tpu.pipeline_mode<synchronous>, transform_indices = @transform_2, window_bounds = array<i64: 1, 128>}, {transform_indices = @transform_3, window_bounds = array<i64: 512, 128>}]} {
    %c0 = arith.constant 0 : index
    %c0_0 = arith.constant 0 : index
    %0 = vector.load %arg1[%c0, %c0_0] : memref<512x9xbf16, #tpu.memory_space<vmem>>, vector<512x9xbf16>
    %c0_1 = arith.constant 0 : index
    %c0_2 = arith.constant 0 : index
    %1 = vector.load %arg2[%c0_1, %c0_2] : memref<9x128xbf16, #tpu.memory_space<vmem>>, vector<9x128xbf16>
    %cst = arith.constant dense<0.000000e+00> : vector<512x128xf32>
    %2 = tpu.matmul %0, %1, %cst {dimension_numbers = #tpu.dot_dimension_numbers<[1], [0], [0], [1], [0, 0, 1, 1], [], []>} : vector<512x9xbf16>, vector<9x128xbf16>, vector<512x128xf32> -> vector<512x128xf32>
    %c0_3 = arith.constant 0 : index
    %c0_4 = arith.constant 0 : index
    %3 = vector.load %arg3[%c0_3, %c0_4] : memref<1x128xf32, #tpu.memory_space<vmem>>, vector<1x128xf32>
    %4 = vector.broadcast %3 : vector<1x128xf32> to vector<512x128xf32>
    %5 = arith.addf %2, %4 : vector<512x128xf32>
    %cst_5 = arith.constant 0.000000e+00 : f32
    %6 = vector.broadcast %cst_5 : f32 to vector<512x128xf32>
    %7 = arith.maximumf %5, %6 : vector<512x128xf32>
    %8 = arith.truncf %7 : vector<512x128xf32> to vector<512x128xbf16>
    %c0_6 = arith.constant 0 : index
    %c0_7 = arith.constant 0 : index
    %9 = vector.load %arg4[%c0_6, %c0_7] : memref<512x128xbf16, #tpu.memory_space<vmem>>, vector<512x128xbf16>
    tpu.vector_store %arg4[%c0_6, %c0_7], %8 {strides = array<i32>} : memref<512x128xbf16, #tpu.memory_space<vmem>>, vector<512x128xbf16>,
    return
  }
  func.func @transform_0(%arg0: i32) -> (i32, i32) {
    %c0_i32 = arith.constant 0 : i32
    %c0_i32_0 = arith.constant 0 : i32
    return %arg0, %c0_i32 : i32, i32
  }
  func.func @transform_1(%arg0: i32) -> (i32, i32) {
    %c0_i32 = arith.constant 0 : i32
    %c0_i32_0 = arith.constant 0 : i32
    %c0_i32_1 = arith.constant 0 : i32
    return %c0_i32, %c0_i32_0 : i32, i32
  }
  func.func @transform_2(%arg0: i32) -> (i32, i32) {
    %c0_i32 = arith.constant 0 : i32
    %c0_i32_0 = arith.constant 0 : i32
    %c0_i32_1 = arith.constant 0 : i32
    return %c0_i32, %c0_i32_0 : i32, i32
  }
  func.func @transform_3(%arg0: i32) -> (i32, i32) {
    %c0_i32 = arith.constant 0 : i32
    %c0_i32_0 = arith.constant 0 : i32
    return %arg0, %c0_i32 : i32, i32
  }
}

module attributes {stable_mosaic.version = 11 : i64} {
  func.func @_max4_kernel(%arg0: i32, %arg1: memref<1x13x416xbf16, #tpu.memory_space<vmem>>, %arg2: memref<1x13x416xbf16, #tpu.memory_space<vmem>>, %arg3: memref<1x13x416xbf16, #tpu.memory_space<vmem>>, %arg4: memref<1x13x416xbf16, #tpu.memory_space<vmem>>, %arg5: memref<1x13x416xbf16, #tpu.memory_space<vmem>>) attributes {dimension_semantics = [#tpu.dimension_semantics<parallel>], iteration_bounds = array<i64: 2>, scalar_prefetch = 0 : i64, scratch_operands = 0 : i64, tpu.core_type = #tpu.core_type<tc>, window_params = [{transform_indices = @transform_0, window_bounds = array<i64: 1, 13, 416>}, {transform_indices = @transform_1, window_bounds = array<i64: 1, 13, 416>}, {transform_indices = @transform_2, window_bounds = array<i64: 1, 13, 416>}, {transform_indices = @transform_3, window_bounds = array<i64: 1, 13, 416>}, {transform_indices = @transform_4, window_bounds = array<i64: 1, 13, 416>}]} {
    %c0 = arith.constant 0 : index
    %c0_0 = arith.constant 0 : index
    %c0_1 = arith.constant 0 : index
    %0 = vector.load %arg1[%c0, %c0_0, %c0_1] : memref<1x13x416xbf16, #tpu.memory_space<vmem>>, vector<1x13x416xbf16>
    %c0_2 = arith.constant 0 : index
    %c0_3 = arith.constant 0 : index
    %c0_4 = arith.constant 0 : index
    %1 = vector.load %arg2[%c0_2, %c0_3, %c0_4] : memref<1x13x416xbf16, #tpu.memory_space<vmem>>, vector<1x13x416xbf16>
    %2 = arith.maximumf %0, %1 : vector<1x13x416xbf16>
    %c0_5 = arith.constant 0 : index
    %c0_6 = arith.constant 0 : index
    %c0_7 = arith.constant 0 : index
    %3 = vector.load %arg3[%c0_5, %c0_6, %c0_7] : memref<1x13x416xbf16, #tpu.memory_space<vmem>>, vector<1x13x416xbf16>
    %c0_8 = arith.constant 0 : index
    %c0_9 = arith.constant 0 : index
    %c0_10 = arith.constant 0 : index
    %4 = vector.load %arg4[%c0_8, %c0_9, %c0_10] : memref<1x13x416xbf16, #tpu.memory_space<vmem>>, vector<1x13x416xbf16>
    %5 = arith.maximumf %3, %4 : vector<1x13x416xbf16>
    %6 = arith.maximumf %2, %5 : vector<1x13x416xbf16>
    %c0_11 = arith.constant 0 : index
    %c0_12 = arith.constant 0 : index
    %c0_13 = arith.constant 0 : index
    %7 = vector.load %arg5[%c0_11, %c0_12, %c0_13] : memref<1x13x416xbf16, #tpu.memory_space<vmem>>, vector<1x13x416xbf16>
    tpu.vector_store %arg5[%c0_11, %c0_12, %c0_13], %6 {strides = array<i32>} : memref<1x13x416xbf16, #tpu.memory_space<vmem>>, vector<1x13x416xbf16>,
    return
  }
  func.func @transform_0(%arg0: i32) -> (i32, i32, i32) {
    %c0_i32 = arith.constant 0 : i32
    %c0_i32_0 = arith.constant 0 : i32
    %c0_i32_1 = arith.constant 0 : i32
    return %arg0, %c0_i32, %c0_i32_0 : i32, i32, i32
  }
  func.func @transform_1(%arg0: i32) -> (i32, i32, i32) {
    %c0_i32 = arith.constant 0 : i32
    %c0_i32_0 = arith.constant 0 : i32
    %c0_i32_1 = arith.constant 0 : i32
    return %arg0, %c0_i32, %c0_i32_0 : i32, i32, i32
  }
  func.func @transform_2(%arg0: i32) -> (i32, i32, i32) {
    %c0_i32 = arith.constant 0 : i32
    %c0_i32_0 = arith.constant 0 : i32
    %c0_i32_1 = arith.constant 0 : i32
    return %arg0, %c0_i32, %c0_i32_0 : i32, i32, i32
  }
  func.func @transform_3(%arg0: i32) -> (i32, i32, i32) {
    %c0_i32 = arith.constant 0 : i32
    %c0_i32_0 = arith.constant 0 : i32
    %c0_i32_1 = arith.constant 0 : i32
    return %arg0, %c0_i32, %c0_i32_0 : i32, i32, i32
  }
  func.func @transform_4(%arg0: i32) -> (i32, i32, i32) {
    %c0_i32 = arith.constant 0 : i32
    %c0_i32_0 = arith.constant 0 : i32
    %c0_i32_1 = arith.constant 0 : i32
    return %arg0, %c0_i32, %c0_i32_0 : i32, i32, i32
  }
}

module attributes {stable_mosaic.version = 11 : i64} {
  func.func @_matmul_bias_kernel(%arg0: i32, %arg1: memref<242x288xbf16, #tpu.memory_space<vmem>>, %arg2: memref<288x128xbf16, #tpu.memory_space<vmem>>, %arg3: memref<1x128xf32, #tpu.memory_space<vmem>>, %arg4: memref<242x128xbf16, #tpu.memory_space<vmem>>) attributes {dimension_semantics = [#tpu.dimension_semantics<parallel>], iteration_bounds = array<i64: 1>, scalar_prefetch = 0 : i64, scratch_operands = 0 : i64, tpu.core_type = #tpu.core_type<tc>, window_params = [{transform_indices = @transform_0, window_bounds = array<i64: 242, 288>}, {pipeline_mode = #tpu.pipeline_mode<synchronous>, transform_indices = @transform_1, window_bounds = array<i64: 288, 128>}, {pipeline_mode = #tpu.pipeline_mode<synchronous>, transform_indices = @transform_2, window_bounds = array<i64: 1, 128>}, {transform_indices = @transform_3, window_bounds = array<i64: 242, 128>}]} {
    %c0 = arith.constant 0 : index
    %c0_0 = arith.constant 0 : index
    %0 = vector.load %arg1[%c0, %c0_0] : memref<242x288xbf16, #tpu.memory_space<vmem>>, vector<242x288xbf16>
    %c0_1 = arith.constant 0 : index
    %c0_2 = arith.constant 0 : index
    %1 = vector.load %arg2[%c0_1, %c0_2] : memref<288x128xbf16, #tpu.memory_space<vmem>>, vector<288x128xbf16>
    %cst = arith.constant dense<0.000000e+00> : vector<242x128xf32>
    %2 = tpu.matmul %0, %1, %cst {dimension_numbers = #tpu.dot_dimension_numbers<[1], [0], [0], [1], [0, 0, 1, 1], [], []>} : vector<242x288xbf16>, vector<288x128xbf16>, vector<242x128xf32> -> vector<242x128xf32>
    %c0_3 = arith.constant 0 : index
    %c0_4 = arith.constant 0 : index
    %3 = vector.load %arg3[%c0_3, %c0_4] : memref<1x128xf32, #tpu.memory_space<vmem>>, vector<1x128xf32>
    %4 = vector.broadcast %3 : vector<1x128xf32> to vector<242x128xf32>
    %5 = arith.addf %2, %4 : vector<242x128xf32>
    %cst_5 = arith.constant 0.000000e+00 : f32
    %6 = vector.broadcast %cst_5 : f32 to vector<242x128xf32>
    %7 = arith.maximumf %5, %6 : vector<242x128xf32>
    %8 = arith.truncf %7 : vector<242x128xf32> to vector<242x128xbf16>
    %c0_6 = arith.constant 0 : index
    %c0_7 = arith.constant 0 : index
    %9 = vector.load %arg4[%c0_6, %c0_7] : memref<242x128xbf16, #tpu.memory_space<vmem>>, vector<242x128xbf16>
    tpu.vector_store %arg4[%c0_6, %c0_7], %8 {strides = array<i32>} : memref<242x128xbf16, #tpu.memory_space<vmem>>, vector<242x128xbf16>,
    return
  }
  func.func @transform_0(%arg0: i32) -> (i32, i32) {
    %c0_i32 = arith.constant 0 : i32
    %c0_i32_0 = arith.constant 0 : i32
    return %arg0, %c0_i32 : i32, i32
  }
  func.func @transform_1(%arg0: i32) -> (i32, i32) {
    %c0_i32 = arith.constant 0 : i32
    %c0_i32_0 = arith.constant 0 : i32
    %c0_i32_1 = arith.constant 0 : i32
    return %c0_i32, %c0_i32_0 : i32, i32
  }
  func.func @transform_2(%arg0: i32) -> (i32, i32) {
    %c0_i32 = arith.constant 0 : i32
    %c0_i32_0 = arith.constant 0 : i32
    %c0_i32_1 = arith.constant 0 : i32
    return %c0_i32, %c0_i32_0 : i32, i32
  }
  func.func @transform_3(%arg0: i32) -> (i32, i32) {
    %c0_i32 = arith.constant 0 : i32
    %c0_i32_0 = arith.constant 0 : i32
    return %arg0, %c0_i32 : i32, i32
  }
}

module attributes {stable_mosaic.version = 11 : i64} {
  func.func @_max4_kernel(%arg0: i32, %arg1: memref<1x5x320xbf16, #tpu.memory_space<vmem>>, %arg2: memref<1x5x320xbf16, #tpu.memory_space<vmem>>, %arg3: memref<1x5x320xbf16, #tpu.memory_space<vmem>>, %arg4: memref<1x5x320xbf16, #tpu.memory_space<vmem>>, %arg5: memref<1x5x320xbf16, #tpu.memory_space<vmem>>) attributes {dimension_semantics = [#tpu.dimension_semantics<parallel>], iteration_bounds = array<i64: 2>, scalar_prefetch = 0 : i64, scratch_operands = 0 : i64, tpu.core_type = #tpu.core_type<tc>, window_params = [{transform_indices = @transform_0, window_bounds = array<i64: 1, 5, 320>}, {transform_indices = @transform_1, window_bounds = array<i64: 1, 5, 320>}, {transform_indices = @transform_2, window_bounds = array<i64: 1, 5, 320>}, {transform_indices = @transform_3, window_bounds = array<i64: 1, 5, 320>}, {transform_indices = @transform_4, window_bounds = array<i64: 1, 5, 320>}]} {
    %c0 = arith.constant 0 : index
    %c0_0 = arith.constant 0 : index
    %c0_1 = arith.constant 0 : index
    %0 = vector.load %arg1[%c0, %c0_0, %c0_1] : memref<1x5x320xbf16, #tpu.memory_space<vmem>>, vector<1x5x320xbf16>
    %c0_2 = arith.constant 0 : index
    %c0_3 = arith.constant 0 : index
    %c0_4 = arith.constant 0 : index
    %1 = vector.load %arg2[%c0_2, %c0_3, %c0_4] : memref<1x5x320xbf16, #tpu.memory_space<vmem>>, vector<1x5x320xbf16>
    %2 = arith.maximumf %0, %1 : vector<1x5x320xbf16>
    %c0_5 = arith.constant 0 : index
    %c0_6 = arith.constant 0 : index
    %c0_7 = arith.constant 0 : index
    %3 = vector.load %arg3[%c0_5, %c0_6, %c0_7] : memref<1x5x320xbf16, #tpu.memory_space<vmem>>, vector<1x5x320xbf16>
    %c0_8 = arith.constant 0 : index
    %c0_9 = arith.constant 0 : index
    %c0_10 = arith.constant 0 : index
    %4 = vector.load %arg4[%c0_8, %c0_9, %c0_10] : memref<1x5x320xbf16, #tpu.memory_space<vmem>>, vector<1x5x320xbf16>
    %5 = arith.maximumf %3, %4 : vector<1x5x320xbf16>
    %6 = arith.maximumf %2, %5 : vector<1x5x320xbf16>
    %c0_11 = arith.constant 0 : index
    %c0_12 = arith.constant 0 : index
    %c0_13 = arith.constant 0 : index
    %7 = vector.load %arg5[%c0_11, %c0_12, %c0_13] : memref<1x5x320xbf16, #tpu.memory_space<vmem>>, vector<1x5x320xbf16>
    tpu.vector_store %arg5[%c0_11, %c0_12, %c0_13], %6 {strides = array<i32>} : memref<1x5x320xbf16, #tpu.memory_space<vmem>>, vector<1x5x320xbf16>,
    return
  }
  func.func @transform_0(%arg0: i32) -> (i32, i32, i32) {
    %c0_i32 = arith.constant 0 : i32
    %c0_i32_0 = arith.constant 0 : i32
    %c0_i32_1 = arith.constant 0 : i32
    return %arg0, %c0_i32, %c0_i32_0 : i32, i32, i32
  }
  func.func @transform_1(%arg0: i32) -> (i32, i32, i32) {
    %c0_i32 = arith.constant 0 : i32
    %c0_i32_0 = arith.constant 0 : i32
    %c0_i32_1 = arith.constant 0 : i32
    return %arg0, %c0_i32, %c0_i32_0 : i32, i32, i32
  }
  func.func @transform_2(%arg0: i32) -> (i32, i32, i32) {
    %c0_i32 = arith.constant 0 : i32
    %c0_i32_0 = arith.constant 0 : i32
    %c0_i32_1 = arith.constant 0 : i32
    return %arg0, %c0_i32, %c0_i32_0 : i32, i32, i32
  }
  func.func @transform_3(%arg0: i32) -> (i32, i32, i32) {
    %c0_i32 = arith.constant 0 : i32
    %c0_i32_0 = arith.constant 0 : i32
    %c0_i32_1 = arith.constant 0 : i32
    return %arg0, %c0_i32, %c0_i32_0 : i32, i32, i32
  }
  func.func @transform_4(%arg0: i32) -> (i32, i32, i32) {
    %c0_i32 = arith.constant 0 : i32
    %c0_i32_0 = arith.constant 0 : i32
    %c0_i32_1 = arith.constant 0 : i32
    return %arg0, %c0_i32, %c0_i32_0 : i32, i32, i32
  }
}

module attributes {stable_mosaic.version = 11 : i64} {
  func.func @_matmul_bias_kernel(%arg0: i32, %arg1: memref<18x576xbf16, #tpu.memory_space<vmem>>, %arg2: memref<576x128xbf16, #tpu.memory_space<vmem>>, %arg3: memref<1x128xf32, #tpu.memory_space<vmem>>, %arg4: memref<18x128xbf16, #tpu.memory_space<vmem>>) attributes {dimension_semantics = [#tpu.dimension_semantics<parallel>], iteration_bounds = array<i64: 1>, scalar_prefetch = 0 : i64, scratch_operands = 0 : i64, tpu.core_type = #tpu.core_type<tc>, window_params = [{transform_indices = @transform_0, window_bounds = array<i64: 18, 576>}, {pipeline_mode = #tpu.pipeline_mode<synchronous>, transform_indices = @transform_1, window_bounds = array<i64: 576, 128>}, {pipeline_mode = #tpu.pipeline_mode<synchronous>, transform_indices = @transform_2, window_bounds = array<i64: 1, 128>}, {transform_indices = @transform_3, window_bounds = array<i64: 18, 128>}]} {
    %c0 = arith.constant 0 : index
    %c0_0 = arith.constant 0 : index
    %0 = vector.load %arg1[%c0, %c0_0] : memref<18x576xbf16, #tpu.memory_space<vmem>>, vector<18x576xbf16>
    %c0_1 = arith.constant 0 : index
    %c0_2 = arith.constant 0 : index
    %1 = vector.load %arg2[%c0_1, %c0_2] : memref<576x128xbf16, #tpu.memory_space<vmem>>, vector<576x128xbf16>
    %cst = arith.constant dense<0.000000e+00> : vector<18x128xf32>
    %2 = tpu.matmul %0, %1, %cst {dimension_numbers = #tpu.dot_dimension_numbers<[1], [0], [0], [1], [0, 0, 1, 1], [], []>} : vector<18x576xbf16>, vector<576x128xbf16>, vector<18x128xf32> -> vector<18x128xf32>
    %c0_3 = arith.constant 0 : index
    %c0_4 = arith.constant 0 : index
    %3 = vector.load %arg3[%c0_3, %c0_4] : memref<1x128xf32, #tpu.memory_space<vmem>>, vector<1x128xf32>
    %4 = vector.broadcast %3 : vector<1x128xf32> to vector<18x128xf32>
    %5 = arith.addf %2, %4 : vector<18x128xf32>
    %cst_5 = arith.constant 0.000000e+00 : f32
    %6 = vector.broadcast %cst_5 : f32 to vector<18x128xf32>
    %7 = arith.maximumf %5, %6 : vector<18x128xf32>
    %8 = arith.truncf %7 : vector<18x128xf32> to vector<18x128xbf16>
    %c0_6 = arith.constant 0 : index
    %c0_7 = arith.constant 0 : index
    %9 = vector.load %arg4[%c0_6, %c0_7] : memref<18x128xbf16, #tpu.memory_space<vmem>>, vector<18x128xbf16>
    tpu.vector_store %arg4[%c0_6, %c0_7], %8 {strides = array<i32>} : memref<18x128xbf16, #tpu.memory_space<vmem>>, vector<18x128xbf16>,
    return
  }
  func.func @transform_0(%arg0: i32) -> (i32, i32) {
    %c0_i32 = arith.constant 0 : i32
    %c0_i32_0 = arith.constant 0 : i32
    return %arg0, %c0_i32 : i32, i32
  }
  func.func @transform_1(%arg0: i32) -> (i32, i32) {
    %c0_i32 = arith.constant 0 : i32
    %c0_i32_0 = arith.constant 0 : i32
    %c0_i32_1 = arith.constant 0 : i32
    return %c0_i32, %c0_i32_0 : i32, i32
  }
  func.func @transform_2(%arg0: i32) -> (i32, i32) {
    %c0_i32 = arith.constant 0 : i32
    %c0_i32_0 = arith.constant 0 : i32
    %c0_i32_1 = arith.constant 0 : i32
    return %c0_i32, %c0_i32_0 : i32, i32
  }
  func.func @transform_3(%arg0: i32) -> (i32, i32) {
    %c0_i32 = arith.constant 0 : i32
    %c0_i32_0 = arith.constant 0 : i32
    return %arg0, %c0_i32 : i32, i32
  }
}

module attributes {stable_mosaic.version = 11 : i64} {
  func.func @_matmul_bias_kernel(%arg0: i32, %arg1: memref<2x1152xbf16, #tpu.memory_space<vmem>>, %arg2: memref<1152x128xbf16, #tpu.memory_space<vmem>>, %arg3: memref<1x128xf32, #tpu.memory_space<vmem>>, %arg4: memref<2x128xbf16, #tpu.memory_space<vmem>>) attributes {dimension_semantics = [#tpu.dimension_semantics<parallel>], iteration_bounds = array<i64: 1>, scalar_prefetch = 0 : i64, scratch_operands = 0 : i64, tpu.core_type = #tpu.core_type<tc>, window_params = [{transform_indices = @transform_0, window_bounds = array<i64: 2, 1152>}, {pipeline_mode = #tpu.pipeline_mode<synchronous>, transform_indices = @transform_1, window_bounds = array<i64: 1152, 128>}, {pipeline_mode = #tpu.pipeline_mode<synchronous>, transform_indices = @transform_2, window_bounds = array<i64: 1, 128>}, {transform_indices = @transform_3, window_bounds = array<i64: 2, 128>}]} {
    %c0 = arith.constant 0 : index
    %c0_0 = arith.constant 0 : index
    %0 = vector.load %arg1[%c0, %c0_0] : memref<2x1152xbf16, #tpu.memory_space<vmem>>, vector<2x1152xbf16>
    %c0_1 = arith.constant 0 : index
    %c0_2 = arith.constant 0 : index
    %1 = vector.load %arg2[%c0_1, %c0_2] : memref<1152x128xbf16, #tpu.memory_space<vmem>>, vector<1152x128xbf16>
    %cst = arith.constant dense<0.000000e+00> : vector<2x128xf32>
    %2 = tpu.matmul %0, %1, %cst {dimension_numbers = #tpu.dot_dimension_numbers<[1], [0], [0], [1], [0, 0, 1, 1], [], []>} : vector<2x1152xbf16>, vector<1152x128xbf16>, vector<2x128xf32> -> vector<2x128xf32>
    %c0_3 = arith.constant 0 : index
    %c0_4 = arith.constant 0 : index
    %3 = vector.load %arg3[%c0_3, %c0_4] : memref<1x128xf32, #tpu.memory_space<vmem>>, vector<1x128xf32>
    %4 = vector.broadcast %3 : vector<1x128xf32> to vector<2x128xf32>
    %5 = arith.addf %2, %4 : vector<2x128xf32>
    %cst_5 = arith.constant 0.000000e+00 : f32
    %6 = vector.broadcast %cst_5 : f32 to vector<2x128xf32>
    %7 = arith.maximumf %5, %6 : vector<2x128xf32>
    %8 = arith.truncf %7 : vector<2x128xf32> to vector<2x128xbf16>
    %c0_6 = arith.constant 0 : index
    %c0_7 = arith.constant 0 : index
    %9 = vector.load %arg4[%c0_6, %c0_7] : memref<2x128xbf16, #tpu.memory_space<vmem>>, vector<2x128xbf16>
    tpu.vector_store %arg4[%c0_6, %c0_7], %8 {strides = array<i32>} : memref<2x128xbf16, #tpu.memory_space<vmem>>, vector<2x128xbf16>,
    return
  }
  func.func @transform_0(%arg0: i32) -> (i32, i32) {
    %c0_i32 = arith.constant 0 : i32
    %c0_i32_0 = arith.constant 0 : i32
    return %arg0, %c0_i32 : i32, i32
  }
  func.func @transform_1(%arg0: i32) -> (i32, i32) {
    %c0_i32 = arith.constant 0 : i32
    %c0_i32_0 = arith.constant 0 : i32
    %c0_i32_1 = arith.constant 0 : i32
    return %c0_i32, %c0_i32_0 : i32, i32
  }
  func.func @transform_2(%arg0: i32) -> (i32, i32) {
    %c0_i32 = arith.constant 0 : i32
    %c0_i32_0 = arith.constant 0 : i32
    %c0_i32_1 = arith.constant 0 : i32
    return %c0_i32, %c0_i32_0 : i32, i32
  }
  func.func @transform_3(%arg0: i32) -> (i32, i32) {
    %c0_i32 = arith.constant 0 : i32
    %c0_i32_0 = arith.constant 0 : i32
    return %arg0, %c0_i32 : i32, i32
  }
}

module attributes {stable_mosaic.version = 11 : i64} {
  func.func @_matmul_bias_kernel(%arg0: i32, %arg1: memref<2x128xbf16, #tpu.memory_space<vmem>>, %arg2: memref<128x128xbf16, #tpu.memory_space<vmem>>, %arg3: memref<1x128xf32, #tpu.memory_space<vmem>>, %arg4: memref<2x128xf32, #tpu.memory_space<vmem>>) attributes {dimension_semantics = [#tpu.dimension_semantics<parallel>], iteration_bounds = array<i64: 1>, scalar_prefetch = 0 : i64, scratch_operands = 0 : i64, tpu.core_type = #tpu.core_type<tc>, window_params = [{transform_indices = @transform_0, window_bounds = array<i64: 2, 128>}, {pipeline_mode = #tpu.pipeline_mode<synchronous>, transform_indices = @transform_1, window_bounds = array<i64: 128, 128>}, {pipeline_mode = #tpu.pipeline_mode<synchronous>, transform_indices = @transform_2, window_bounds = array<i64: 1, 128>}, {transform_indices = @transform_3, window_bounds = array<i64: 2, 128>}]} {
    %c0 = arith.constant 0 : index
    %c0_0 = arith.constant 0 : index
    %0 = vector.load %arg1[%c0, %c0_0] : memref<2x128xbf16, #tpu.memory_space<vmem>>, vector<2x128xbf16>
    %c0_1 = arith.constant 0 : index
    %c0_2 = arith.constant 0 : index
    %1 = vector.load %arg2[%c0_1, %c0_2] : memref<128x128xbf16, #tpu.memory_space<vmem>>, vector<128x128xbf16>
    %cst = arith.constant dense<0.000000e+00> : vector<2x128xf32>
    %2 = tpu.matmul %0, %1, %cst {dimension_numbers = #tpu.dot_dimension_numbers<[1], [0], [0], [1], [0, 0, 1, 1], [], []>} : vector<2x128xbf16>, vector<128x128xbf16>, vector<2x128xf32> -> vector<2x128xf32>
    %c0_3 = arith.constant 0 : index
    %c0_4 = arith.constant 0 : index
    %3 = vector.load %arg3[%c0_3, %c0_4] : memref<1x128xf32, #tpu.memory_space<vmem>>, vector<1x128xf32>
    %4 = vector.broadcast %3 : vector<1x128xf32> to vector<2x128xf32>
    %5 = arith.addf %2, %4 : vector<2x128xf32>
    %c0_5 = arith.constant 0 : index
    %c0_6 = arith.constant 0 : index
    %6 = vector.load %arg4[%c0_5, %c0_6] : memref<2x128xf32, #tpu.memory_space<vmem>>, vector<2x128xf32>
    tpu.vector_store %arg4[%c0_5, %c0_6], %5 {strides = array<i32>} : memref<2x128xf32, #tpu.memory_space<vmem>>, vector<2x128xf32>,
    return
  }
  func.func @transform_0(%arg0: i32) -> (i32, i32) {
    %c0_i32 = arith.constant 0 : i32
    %c0_i32_0 = arith.constant 0 : i32
    return %arg0, %c0_i32 : i32, i32
  }
  func.func @transform_1(%arg0: i32) -> (i32, i32) {
    %c0_i32 = arith.constant 0 : i32
    %c0_i32_0 = arith.constant 0 : i32
    %c0_i32_1 = arith.constant 0 : i32
    return %c0_i32, %c0_i32_0 : i32, i32
  }
  func.func @transform_2(%arg0: i32) -> (i32, i32) {
    %c0_i32 = arith.constant 0 : i32
    %c0_i32_0 = arith.constant 0 : i32
    %c0_i32_1 = arith.constant 0 : i32
    return %c0_i32, %c0_i32_0 : i32, i32
  }
  func.func @transform_3(%arg0: i32) -> (i32, i32) {
    %c0_i32 = arith.constant 0 : i32
    %c0_i32_0 = arith.constant 0 : i32
    return %arg0, %c0_i32 : i32, i32
  }
}

</mosaic_0001>

<llo_original>
// kernel: teacher_forward.7
$region0: #{teacher_forward.7}
  #allocation0 [shape = 'u32[]', space=smem, size = 0x4, offset = 0x4, fixed_abs, tag = 'smem constant byte address 0x4 - core index']
  #allocation1 [shape = 'u32[144,128]{1,0:T(1,128)}', space=vmem, size = 0x12000, scoped, tag = 'internal scratch']
  %s0 = inlined_call_operand.vmem [shape: bf16[1352,9], index: 0, kind: input, shape index: {}]
  %s1 = inlined_call_operand.vmem [shape: bf16[9,128], index: 1, kind: input, shape index: {}]
  %s2 = inlined_call_operand.vmem [shape: f32[1,128], index: 2, kind: input, shape index: {}]
  %s3 = inlined_call_operand.vmem [shape: bf16[1352,128], index: 3, kind: output, shape index: {}]
  %s4 = sld [smem:[#allocation0]]
  $region89: #{teacher_forward.7} parent=0
    _
  %s6 = ssub.s32 1, %s4
  %s7 = scalar_select 0, %s6, %s4
  $region1: #{teacher_forward.7} parent=0
    #allocation2 [shape = 'u8[262144]{0}', space=vmem, size = 0x40000, scoped, tag = 'output window, operand 0']
    loop: start=0, step=1, limit=5
    $region2: #{teacher_forward.7} parent=1 // loop_pre_header
      _
    $region3: #{teacher_forward.7} parent=1 // loop_header
      %s9 = sphi 0, %s13
      %p10 = scmp.ge.s32.totalorder %s9, 5
      %s19 = sphi 0, %s21
      %s22 = sphi 0, %s19
      %s23 = sphi 0, %s22
      %s39 = sphi 0, %s23
      %s43 = sphi 0, %s43
      %s45 = sphi 0, %s43
      %s46 = sphi 0, %s45
      %s60 = sphi 0, %s46
      %s64 = sphi 0, %s64
      %s66 = sphi 0, %s64
      %s67 = sphi 0, %s66
      %s81 = sphi 0, %s67
      %s87 = sphi 0, %s89
      %s90 = sphi 0, %s87
      %s91 = sphi 0, %s90
      %s107 = sphi 0, %s91
    $region4: #{teacher_forward.7} parent=1 // loop_header_branch
      %12 = sbr.rel (%p10) target = $region8
    $region5: #{teacher_forward.7} parent=1 // loop_body
      %s14 = ssub.s32 %s9, 1
      %s15 = ssub.s32 %s9, 2
      %s16 = sadd.s32 %s9, 1
      %s17 = ssub.s32 %s9, %s16
      %p18 = scmp.eq.s32.totalorder %s17, 0
      %s20 = sadd.s32 %s19, 1
      %s21 = scalar_select %p18, %s19, %s20
      %p24 = pneg %p18
      %p25 = scmp.eq.s32.totalorder %s9, 2
      %p26 = por %p24, %p25
      %p27 = scmp.ne.s32.totalorder %s19, %s22
      %p28 = scmp.eq.s32.totalorder %s9, 0
      %p29 = por %p27, %p28
      %p30 = scmp.ne.s32.totalorder %s19, %s22
      %p31 = scmp.eq.s32.totalorder %s14, 2
      %p32 = por %p30, %p31
      %p33 = scmp.ne.s32.totalorder %s22, %s23
      %p34 = scmp.eq.s32.totalorder %s14, 0
      %p35 = por %p33, %p34
      %p36 = scmp.ne.s32.totalorder %s22, %s23
      %p37 = scmp.eq.s32.totalorder %s15, 2
      %p38 = por %p36, %p37
      %p40 = scmp.ne.s32.totalorder %s23, %s39
      %p41 = scmp.eq.s32.totalorder %s15, 0
      %p42 = por %p40, %p41
      %s44 = sadd.s32 %s43, 1
      %p47 = scmp.eq.s32.totalorder %s9, 2
      %p48 = scmp.ne.s32.totalorder %s43, %s45
      %p49 = scmp.eq.s32.totalorder %s9, 0
      %p50 = por %p48, %p49
      %p51 = scmp.ne.s32.totalorder %s43, %s45
      %p52 = scmp.eq.s32.totalorder %s14, 2
      %p53 = por %p51, %p52
      %p54 = scmp.ne.s32.totalorder %s45, %s46
      %p55 = scmp.eq.s32.totalorder %s14, 0
      %p56 = por %p54, %p55
      %p57 = scmp.ne.s32.totalorder %s45, %s46
      %p58 = scmp.eq.s32.totalorder %s15, 2
      %p59 = por %p57, %p58
      %p61 = scmp.ne.s32.totalorder %s46, %s60
      %p62 = scmp.eq.s32.totalorder %s15, 0
      %p63 = por %p61, %p62
      %s65 = sadd.s32 %s64, 1
      %p68 = scmp.eq.s32.totalorder %s9, 2
      %p69 = scmp.ne.s32.totalorder %s64, %s66
      %p70 = scmp.eq.s32.totalorder %s9, 0
      %p71 = por %p69, %p70
      %p72 = scmp.ne.s32.totalorder %s64, %s66
      %p73 = scmp.eq.s32.totalorder %s14, 2
      %p74 = por %p72, %p73
      %p75 = scmp.ne.s32.totalorder %s66, %s67
      %p76 = scmp.eq.s32.totalorder %s14, 0
      %p77 = por %p75, %p76
      %p78 = scmp.ne.s32.totalorder %s66, %s67
      %p79 = scmp.eq.s32.totalorder %s15, 2
      %p80 = por %p78, %p79
      %p82 = scmp.ne.s32.totalorder %s67, %s81
      %p83 = scmp.eq.s32.totalorder %s15, 0
      %p84 = por %p82, %p83
      %s85 = ssub.s32 %s9, %s16
      %p86 = scmp.eq.s32.totalorder %s85, 0
      %s88 = sadd.s32 %s87, 1
      %s89 = scalar_select %p86, %s87, %s88
      %p92 = pneg %p86
      %p93 = scmp.eq.s32.totalorder %s9, 2
      %p94 = por %p92, %p93
      %p95 = scmp.ne.s32.totalorder %s87, %s90
      %p96 = scmp.eq.s32.totalorder %s9, 0
      %p97 = por %p95, %p96
      %p98 = scmp.ne.s32.totalorder %s87, %s90
      %p99 = scmp.eq.s32.totalorder %s14, 2
      %p100 = por %p98, %p99
      %p101 = scmp.ne.s32.totalorder %s90, %s91
      %p102 = scmp.eq.s32.totalorder %s14, 0
      %p103 = por %p101, %p102
      %p104 = scmp.ne.s32.totalorder %s90, %s91
      %p105 = scmp.eq.s32.totalorder %s15, 2
      %p106 = por %p104, %p105
      %p108 = scmp.ne.s32.totalorder %s91, %s107
      %p109 = scmp.eq.s32.totalorder %s15, 0
      %p110 = por %p108, %p109
      %p111 = scmp.le.s32.totalorder 1, %s9
      %p112 = scmp.lt.s32.totalorder %s9, 4
      %p113 = pnand %p111, %p112
      %p114 = pneg %p113
      // Predicated region
      $region9: #{teacher_forward.7} parent=5 // pred_check
        _
      $region10: #{teacher_forward.7} parent=5 // pred_check_branch
        %116 = sbr.rel (%p113) target = $region12
      $region11: #{teacher_forward.7} parent=5 // pred_region
        %s117 = ssub.s32 %s9, 1
        // Predicated region
        $region13: #{teacher_forward.7} parent=11 // pred_check
          %p118 = pneg %p56
        $region14: #{teacher_forward.7} parent=11 // pred_check_branch
          %120 = sbr.rel (%p118) target = $region16
        $region15: #{teacher_forward.7} parent=11 // pred_region
          _
        $region16: #{teacher_forward.7} parent=11 // pred_fallthru
          _
        // Predicated region
        $region17: #{teacher_forward.7} parent=11 // pred_check
          %p121 = pneg %p77
        $region18: #{teacher_forward.7} parent=11 // pred_check_branch
          %123 = sbr.rel (%p121) target = $region20
        $region19: #{teacher_forward.7} parent=11 // pred_region
          _
        $region20: #{teacher_forward.7} parent=11 // pred_fallthru
          _
      $region12: #{teacher_forward.7} parent=5 // pred_fallthru
        _
      %p124 = scmp.lt.s32.totalorder %s9, 3
      // Predicated region
      $region21: #{teacher_forward.7} parent=5 // pred_check
        %p125 = pneg %p124
      $region22: #{teacher_forward.7} parent=5 // pred_check_branch
        %127 = sbr.rel (%p125) target = $region24
      $region23: #{teacher_forward.7} parent=5 // pred_region
        // Predicated region
        $region25: #{teacher_forward.7} parent=23 // pred_check
          %p128 = pneg %p29
        $region26: #{teacher_forward.7} parent=23 // pred_check_branch
          %130 = sbr.rel (%p128) target = $region28
        $region27: #{teacher_forward.7} parent=23 // pred_region
          %s131 = smul.u32 64, %s9
          %s132 = ssub.s32 169, %s131
          %p133 = scmp.lt.s32.totalorder %s132, 64
          %s134 = scalar_select %p133, %s132, 64
          %s135 = smul.u32 64, %s134
          %p136 = scmp.lt.s32.totalorder %s131, 168
          %s137 = scalar_select %p136, %s131, 168
          %s138 = smul.addr %s137, 4
          %s139 = scalar_lea.vmem %s0, %s138
          %s140 = smul.u32 64, %s9
          %s141 = ssub.s32 169, %s140
          %p142 = scmp.lt.s32.totalorder %s141, 64
          %s143 = scalar_select %p142, %s141, 64
          %s144 = smul.u32 64, %s143
        $region28: #{teacher_forward.7} parent=23 // pred_fallthru
          _
      $region24: #{teacher_forward.7} parent=5 // pred_fallthru
        _
      %p145 = scmp.le.s32.totalorder 1, %s9
      %p146 = scmp.lt.s32.totalorder %s9, 4
      %p147 = pnand %p145, %p146
      %p148 = pneg %p147
      // Predicated region
      $region29: #{teacher_forward.7} parent=5 // pred_check
        _
      $region30: #{teacher_forward.7} parent=5 // pred_check_branch
        %150 = sbr.rel (%p147) target = $region32
      $region31: #{teacher_forward.7} parent=5 // pred_region
        %s151 = ssub.s32 %s9, 1
        %s152 = smul.u32 64, %s14
        %s153 = ssub.s32 169, %s152
        %p154 = scmp.lt.s32.totalorder %s153, 64
        %s155 = scalar_select %p154, %s153, 64
        %s156 = smul.u32 64, %s155
        %p157 = scmp.lt.s32.totalorder %s152, 168
        %s158 = scalar_select %p157, %s152, 168
        %s159 = smul.addr %s158, 4
        %s160 = scalar_lea.vmem %s0, %s159
        %p161 = pneg %p35
        %p162 = pneg %p32
        %p163 = pneg %p56
        %p164 = pneg %p53
        %p165 = pneg %p77
        %p166 = pneg %p74
        %p167 = pneg %p103
        %p168 = pneg %p100
        %s169 = sand.u32 %s90, 1
        %s170 = sand.u32 %s90, 1
        %s171 = smul.addr %s170, 256
        %s172 = scalar_lea.vmem [#allocation2], %s171
        %s173 = smul.u32 64, %s14
        %s174 = ssub.s32 169, %s173
        %p175 = scmp.lt.s32.totalorder %s174, 64
        %s176 = scalar_select %p175, %s174, 64
        %s177 = smul.u32 64, %s176
        %p178 = scmp.lt.s32.totalorder %s173, 168
        %s179 = scalar_select %p178, %s173, 168
        %s180 = smul.addr %s179, 4
        %s181 = scalar_lea.vmem %s0, %s180
        %s182 = smul.u32 64, %s14
        %s183 = ssub.s32 169, %s182
        %p184 = scmp.lt.s32.totalorder %s183, 64
        %s185 = scalar_select %p184, %s183, 64
        %s186 = smul.u32 64, %s185
        %s187 = smul.u32 64, %s14
        %s188 = ssub.s32 169, %s187
        %p189 = scmp.lt.s32.totalorder %s188, 64
        %s190 = scalar_select %p189, %s188, 64
        %s191 = smul.u32 64, %s190
        %v193 = vld [vmem:[%s181] sm:$0xf]
        %v194 = vld [vmem:[%s181 + $0x4] sm:$0xf]
        %v195 = vld [vmem:[%s181 + $0x8] sm:$0xf]
        %v196 = vld [vmem:[%s181 + $0xc] sm:$0xf]
        %v197 = vld [vmem:[%s181 + $0x10] sm:$0xf]
        %v198 = vld [vmem:[%s181 + $0x14] sm:$0xf]
        %v199 = vld [vmem:[%s181 + $0x18] sm:$0xf]
        %v200 = vld [vmem:[%s181 + $0x1c] sm:$0xf]
        %v201 = vld [vmem:[%s181 + $0x20] sm:$0xf]
        %v202 = vld [vmem:[%s181 + $0x24] sm:$0xf]
        %v203 = vld [vmem:[%s181 + $0x28] sm:$0xf]
        %v204 = vld [vmem:[%s181 + $0x2c] sm:$0xf]
        %v205 = vld [vmem:[%s181 + $0x30] sm:$0xf]
        %v206 = vld [vmem:[%s181 + $0x34] sm:$0xf]
        %v207 = vld [vmem:[%s181 + $0x38] sm:$0xf]
        %v208 = vld [vmem:[%s181 + $0x3c] sm:$0xf]
        %v209 = vld [vmem:[%s181 + $0x40] sm:$0xf]
        %v210 = vld [vmem:[%s181 + $0x44] sm:$0xf]
        %v211 = vld [vmem:[%s181 + $0x48] sm:$0xf]
        %v212 = vld [vmem:[%s181 + $0x4c] sm:$0xf]
        %v213 = vld [vmem:[%s181 + $0x50] sm:$0xf]
        %v214 = vld [vmem:[%s181 + $0x54] sm:$0xf]
        %v215 = vld [vmem:[%s181 + $0x58] sm:$0xf]
        %v216 = vld [vmem:[%s181 + $0x5c] sm:$0xf]
        %v217 = vld [vmem:[%s181 + $0x60] sm:$0xf]
        %v218 = vld [vmem:[%s181 + $0x64] sm:$0xf]
        %v219 = vld [vmem:[%s181 + $0x68] sm:$0xf]
        %v220 = vld [vmem:[%s181 + $0x6c] sm:$0xf]
        %v221 = vld [vmem:[%s181 + $0x70] sm:$0xf]
        %v222 = vld [vmem:[%s181 + $0x74] sm:$0xf]
        %v223 = vld [vmem:[%s181 + $0x78] sm:$0xf]
        %v224 = vld [vmem:[%s181 + $0x7c] sm:$0xf]
        %v225 = vld [vmem:[%s181 + $0x80] sm:$0xf]
        %v226 = vld [vmem:[%s181 + $0x84] sm:$0xf]
        %v227 = vld [vmem:[%s181 + $0x88] sm:$0xf]
        %v228 = vld [vmem:[%s181 + $0x8c] sm:$0xf]
        %v229 = vld [vmem:[%s181 + $0x90] sm:$0xf]
        %v230 = vld [vmem:[%s181 + $0x94] sm:$0xf]
        %v231 = vld [vmem:[%s181 + $0x98] sm:$0xf]
        %v232 = vld [vmem:[%s181 + $0x9c] sm:$0xf]
        %v233 = vld [vmem:[%s181 + $0xa0] sm:$0xf]
        %v234 = vld [vmem:[%s181 + $0xa4] sm:$0xf]
        %v235 = vld [vmem:[%s181 + $0xa8] sm:$0xf]
        %v236 = vld [vmem:[%s181 + $0xac] sm:$0xf]
        %v237 = vld [vmem:[%s181 + $0xb0] sm:$0xf]
        %v238 = vld [vmem:[%s181 + $0xb4] sm:$0xf]
        %v239 = vld [vmem:[%s181 + $0xb8] sm:$0xf]
        %v240 = vld [vmem:[%s181 + $0xbc] sm:$0xf]
        %v241 = vld [vmem:[%s181 + $0xc0] sm:$0xf]
        %v242 = vld [vmem:[%s181 + $0xc4] sm:$0xf]
        %v243 = vld [vmem:[%s181 + $0xc8] sm:$0xf]
        %v244 = vld [vmem:[%s181 + $0xcc] sm:$0xf]
        %v245 = vld [vmem:[%s181 + $0xd0] sm:$0xf]
        %v246 = vld [vmem:[%s181 + $0xd4] sm:$0xf]
        %v247 = vld [vmem:[%s181 + $0xd8] sm:$0xf]
        %v248 = vld [vmem:[%s181 + $0xdc] sm:$0xf]
        %v249 = vld [vmem:[%s181 + $0xe0] sm:$0xf]
        %v250 = vld [vmem:[%s181 + $0xe4] sm:$0xf]
        %v251 = vld [vmem:[%s181 + $0xe8] sm:$0xf]
        %v252 = vld [vmem:[%s181 + $0xec] sm:$0xf]
        %v253 = vld [vmem:[%s181 + $0xf0] sm:$0xf]
        %v254 = vld [vmem:[%s181 + $0xf4] sm:$0xf]
        %v255 = vld [vmem:[%s181 + $0xf8] sm:$0xf]
        %v256 = vld [vmem:[%s181 + $0xfc] sm:$0xf]
        %v257 = vld [vmem:[%s1] sm:$0xf]
        %v258 = vld [vmem:[%s1 + $0x4] sm:$0x1]
        %v259 = vld [vmem:[%s2] sm:$0x1]
        %v261 = vlaneseq
        %v262 = vshrl.u32 %v261, 7
        %v263 = vsub.s32 0, %v262
        %v264 = vrot.slane %v259, %v263
        %v330 = vunpack.c.l.b16 %v193
        %v331 = vunpack.c.l.b16 %v194
        %v332 = vunpack.c.l.b16 %v195
        %v333 = vunpack.c.l.b16 %v196
        %v334 = vunpack.c.l.b16 %v197
        %v335 = vunpack.c.l.b16 %v198
        %v336 = vunpack.c.l.b16 %v199
        %v337 = vunpack.c.l.b16 %v200
        %v338 = vunpack.c.l.b16 %v201
        %v339 = vunpack.c.l.b16 %v202
        %v340 = vunpack.c.l.b16 %v203
        %v341 = vunpack.c.l.b16 %v204
        %v342 = vunpack.c.l.b16 %v205
        %v343 = vunpack.c.l.b16 %v206
        %v344 = vunpack.c.l.b16 %v207
        %v345 = vunpack.c.l.b16 %v208
        %v346 = vunpack.c.l.b16 %v209
        %v347 = vunpack.c.l.b16 %v210
        %v348 = vunpack.c.l.b16 %v211
        %v349 = vunpack.c.l.b16 %v212
        %v350 = vunpack.c.l.b16 %v213
        %v351 = vunpack.c.l.b16 %v214
        %v352 = vunpack.c.l.b16 %v215
        %v353 = vunpack.c.l.b16 %v216
        %v354 = vunpack.c.l.b16 %v217
        %v355 = vunpack.c.l.b16 %v218
        %v356 = vunpack.c.l.b16 %v219
        %v357 = vunpack.c.l.b16 %v220
        %v358 = vunpack.c.l.b16 %v221
        %v359 = vunpack.c.l.b16 %v222
        %v360 = vunpack.c.l.b16 %v223
        %v361 = vunpack.c.l.b16 %v224
        %v362 = vunpack.c.l.b16 %v225
        %v363 = vunpack.c.l.b16 %v226
        %v364 = vunpack.c.l.b16 %v227
        %v365 = vunpack.c.l.b16 %v228
        %v366 = vunpack.c.l.b16 %v229
        %v367 = vunpack.c.l.b16 %v230
        %v368 = vunpack.c.l.b16 %v231
        %v369 = vunpack.c.l.b16 %v232
        %v370 = vunpack.c.l.b16 %v233
        %v371 = vunpack.c.l.b16 %v234
        %v372 = vunpack.c.l.b16 %v235
        %v373 = vunpack.c.l.b16 %v236
        %v374 = vunpack.c.l.b16 %v237
        %v375 = vunpack.c.l.b16 %v238
        %v376 = vunpack.c.l.b16 %v239
        %v377 = vunpack.c.l.b16 %v240
        %v378 = vunpack.c.l.b16 %v241
        %v379 = vunpack.c.l.b16 %v242
        %v380 = vunpack.c.l.b16 %v243
        %v381 = vunpack.c.l.b16 %v244
        %v382 = vunpack.c.l.b16 %v245
        %v383 = vunpack.c.l.b16 %v246
        %v384 = vunpack.c.l.b16 %v247
        %v385 = vunpack.c.l.b16 %v248
        %v386 = vunpack.c.l.b16 %v249
        %v387 = vunpack.c.l.b16 %v250
        %v388 = vunpack.c.l.b16 %v251
        %v389 = vunpack.c.l.b16 %v252
        %v390 = vunpack.c.l.b16 %v253
        %v391 = vunpack.c.l.b16 %v254
        %v392 = vunpack.c.l.b16 %v255
        %v393 = vunpack.c.l.b16 %v256
        %v394 = vpack.c.b16 %v331, %v330
        %v395 = vpack.c.b16 %v333, %v332
        %v396 = vpack.c.b16 %v335, %v334
        %v397 = vpack.c.b16 %v337, %v336
        %v398 = vpack.c.b16 %v339, %v338
        %v399 = vpack.c.b16 %v341, %v340
        %v400 = vpack.c.b16 %v343, %v342
        %v401 = vpack.c.b16 %v345, %v344
        %v402 = vpack.c.b16 %v347, %v346
        %v403 = vpack.c.b16 %v349, %v348
        %v404 = vpack.c.b16 %v351, %v350
        %v405 = vpack.c.b16 %v353, %v352
        %v406 = vpack.c.b16 %v355, %v354
        %v407 = vpack.c.b16 %v357, %v356
        %v408 = vpack.c.b16 %v359, %v358
        %v409 = vpack.c.b16 %v361, %v360
        %v410 = vpack.c.b16 %v363, %v362
        %v411 = vpack.c.b16 %v365, %v364
        %v412 = vpack.c.b16 %v367, %v366
        %v413 = vpack.c.b16 %v369, %v368
        %v414 = vpack.c.b16 %v371, %v370
        %v415 = vpack.c.b16 %v373, %v372
        %v416 = vpack.c.b16 %v375, %v374
        %v417 = vpack.c.b16 %v377, %v376
        %v418 = vpack.c.b16 %v379, %v378
        %v419 = vpack.c.b16 %v381, %v380
        %v420 = vpack.c.b16 %v383, %v382
        %v421 = vpack.c.b16 %v385, %v384
        %v422 = vpack.c.b16 %v387, %v386
        %v423 = vpack.c.b16 %v389, %v388
        %v424 = vpack.c.b16 %v391, %v390
        %v425 = vpack.c.b16 %v393, %v392
        %v428 = vunpack.c.l.b16 %v257
        %v429 = vunpack.c.l.b16 %v258
        %v430 = vpack.c.b16 %v429, %v428
        %vm431 = vcmask 72704
        %v433 = vsel %vm431, %v394, 0
        %v436 = vsel %vm431, %v395, 0
        %v439 = vsel %vm431, %v396, 0
        %v442 = vsel %vm431, %v397, 0
        %v445 = vsel %vm431, %v398, 0
        %v448 = vsel %vm431, %v399, 0
        %v451 = vsel %vm431, %v400, 0
        %v454 = vsel %vm431, %v401, 0
        %v457 = vsel %vm431, %v402, 0
        %v460 = vsel %vm431, %v403, 0
        %v463 = vsel %vm431, %v404, 0
        %v466 = vsel %vm431, %v405, 0
        %v469 = vsel %vm431, %v406, 0
        %v472 = vsel %vm431, %v407, 0
        %v475 = vsel %vm431, %v408, 0
        %v478 = vsel %vm431, %v409, 0
        %v481 = vsel %vm431, %v410, 0
        %v484 = vsel %vm431, %v411, 0
        %v487 = vsel %vm431, %v412, 0
        %v490 = vsel %vm431, %v413, 0
        %v493 = vsel %vm431, %v414, 0
        %v496 = vsel %vm431, %v415, 0
        %v499 = vsel %vm431, %v416, 0
        %v502 = vsel %vm431, %v417, 0
        %v505 = vsel %vm431, %v418, 0
        %v508 = vsel %vm431, %v419, 0
        %v511 = vsel %vm431, %v420, 0
        %v514 = vsel %vm431, %v421, 0
        %v517 = vsel %vm431, %v422, 0
        %v520 = vsel %vm431, %v423, 0
        %v523 = vsel %vm431, %v424, 0
        %v526 = vsel %vm431, %v425, 0
        %vm528 = vcmask 1043456
        %vm529 = vcmask 1044480
        %v530 = vsel %vm528, 4294967295, 65535
        %v531 = vsel %vm529, %v530, 0
        %v533 = vand.u32 %v430, %v531
        %535 = vmatprep.subr.bf16.mxu0 0
        %536 = vmatpush1.bf16.msra.mxu0 %v533
        %537 = vmatprep.subr.bf16.mxu0 0
        %538 = vmatpush1.bf16.msra.mxu0 0
        %539 = vmatprep.subr.bf16.mxu0 0
        %540 = vmatpush1.bf16.msra.mxu0 0
        %541 = vmatprep.subr.bf16.mxu0 0
        %542 = vmatpush1.bf16.msra.mxu0 0
        %543 = vmatprep.subr.bf16.mxu0 0
        %544 = vmatpush1.bf16.msra.mxu0 0
        %545 = vmatprep.subr.bf16.mxu0 0
        %546 = vmatpush1.bf16.msra.mxu0 0
        %547 = vmatprep.subr.bf16.mxu0 0
        %548 = vmatpush1.bf16.msra.mxu0 0
        %549 = vmatprep.subr.bf16.mxu0 0
        %550 = vmatpush1.bf16.msra.mxu0 0
        %551 = vmatprep.subr.bf16.mxu0 0
        %552 = vmatpush1.bf16.msra.mxu0 0
        %553 = vmatprep.subr.bf16.mxu0 0
        %554 = vmatpush1.bf16.msra.mxu0 0
        %555 = vmatprep.subr.bf16.mxu0 0
        %556 = vmatpush1.bf16.msra.mxu0 0
        %557 = vmatprep.subr.bf16.mxu0 0
        %558 = vmatpush1.bf16.msra.mxu0 0
        %559 = vmatprep.subr.bf16.mxu0 0
        %560 = vmatpush1.bf16.msra.mxu0 0
        %561 = vmatprep.subr.bf16.mxu0 0
        %562 = vmatpush1.bf16.msra.mxu0 0
        %563 = vmatprep.subr.bf16.mxu0 0
        %564 = vmatpush1.bf16.msra.mxu0 0
        %565 = vmatprep.subr.bf16.mxu0 0
        %566 = vmatpush1.bf16.msra.mxu0 0
        %567 = vmatprep.mubr.bf16.mxu0 0
        %568 = vmatmul.mubr.bf16.gmra.mrb[0].mxu0 %v433
        %v569 = vpop.f32.mrb[0].mxu0
        %v570 = vadd.f32 %v264, %v569
        %v571 = vpop.f32.mrb[0].mxu0
        %v572 = vpop.f32.mrb[0].mxu0
        %v573 = vadd.f32 %v264, %v572
        %v574 = vpop.f32.mrb[0].mxu0
        %575 = vmatprep.mubr.bf16.mxu0 0
        %576 = vmatmul.mubr.bf16.gmra.mrb[0].mxu0 %v436
        %v577 = vpop.f32.mrb[0].mxu0
        %v578 = vadd.f32 %v264, %v577
        %v579 = vpop.f32.mrb[0].mxu0
        %v580 = vpop.f32.mrb[0].mxu0
        %v581 = vadd.f32 %v264, %v580
        %v582 = vpop.f32.mrb[0].mxu0
        %583 = vmatprep.mubr.bf16.mxu0 0
        %584 = vmatmul.mubr.bf16.gmra.mrb[0].mxu0 %v439
        %v585 = vpop.f32.mrb[0].mxu0
        %v586 = vadd.f32 %v264, %v585
        %v587 = vpop.f32.mrb[0].mxu0
        %v588 = vpop.f32.mrb[0].mxu0
        %v589 = vadd.f32 %v264, %v588
        %v590 = vpop.f32.mrb[0].mxu0
        %591 = vmatprep.mubr.bf16.mxu0 0
        %592 = vmatmul.mubr.bf16.gmra.mrb[0].mxu0 %v442
        %v593 = vpop.f32.mrb[0].mxu0
        %v594 = vadd.f32 %v264, %v593
        %v595 = vpop.f32.mrb[0].mxu0
        %v596 = vpop.f32.mrb[0].mxu0
        %v597 = vadd.f32 %v264, %v596
        %v598 = vpop.f32.mrb[0].mxu0
        %599 = vmatprep.mubr.bf16.mxu0 0
        %600 = vmatmul.mubr.bf16.gmra.mrb[0].mxu0 %v445
        %v601 = vpop.f32.mrb[0].mxu0
        %v602 = vadd.f32 %v264, %v601
        %v603 = vpop.f32.mrb[0].mxu0
        %v604 = vpop.f32.mrb[0].mxu0
        %v605 = vadd.f32 %v264, %v604
        %v606 = vpop.f32.mrb[0].mxu0
        %607 = vmatprep.mubr.bf16.mxu0 0
        %608 = vmatmul.mubr.bf16.gmra.mrb[0].mxu0 %v448
        %v609 = vpop.f32.mrb[0].mxu0
        %v610 = vadd.f32 %v264, %v609
        %v611 = vpop.f32.mrb[0].mxu0
        %v612 = vpop.f32.mrb[0].mxu0
        %v613 = vadd.f32 %v264, %v612
        %v614 = vpop.f32.mrb[0].mxu0
        %615 = vmatprep.mubr.bf16.mxu0 0
        %616 = vmatmul.mubr.bf16.gmra.mrb[0].mxu0 %v451
        %v617 = vpop.f32.mrb[0].mxu0
        %v618 = vadd.f32 %v264, %v617
        %v619 = vpop.f32.mrb[0].mxu0
        %v620 = vpop.f32.mrb[0].mxu0
        %v621 = vadd.f32 %v264, %v620
        %v622 = vpop.f32.mrb[0].mxu0
        %623 = vmatprep.mubr.bf16.mxu0 0
        %624 = vmatmul.mubr.bf16.gmra.mrb[0].mxu0 %v454
        %v625 = vpop.f32.mrb[0].mxu0
        %v626 = vadd.f32 %v264, %v625
        %v627 = vpop.f32.mrb[0].mxu0
        %v628 = vpop.f32.mrb[0].mxu0
        %v629 = vadd.f32 %v264, %v628
        %v630 = vpop.f32.mrb[0].mxu0
        %631 = vmatprep.mubr.bf16.mxu0 0
        %632 = vmatmul.mubr.bf16.gmra.mrb[0].mxu0 %v457
        %v633 = vpop.f32.mrb[0].mxu0
        %v634 = vadd.f32 %v264, %v633
        %v635 = vpop.f32.mrb[0].mxu0
        %v636 = vpop.f32.mrb[0].mxu0
        %v637 = vadd.f32 %v264, %v636
        %v638 = vpop.f32.mrb[0].mxu0
        %639 = vmatprep.mubr.bf16.mxu0 0
        %640 = vmatmul.mubr.bf16.gmra.mrb[0].mxu0 %v460
        %v641 = vpop.f32.mrb[0].mxu0
        %v642 = vadd.f32 %v264, %v641
        %v643 = vpop.f32.mrb[0].mxu0
        %v644 = vpop.f32.mrb[0].mxu0
        %v645 = vadd.f32 %v264, %v644
        %v646 = vpop.f32.mrb[0].mxu0
        %647 = vmatprep.mubr.bf16.mxu0 0
        %648 = vmatmul.mubr.bf16.gmra.mrb[0].mxu0 %v463
        %v649 = vpop.f32.mrb[0].mxu0
        %v650 = vadd.f32 %v264, %v649
        %v651 = vpop.f32.mrb[0].mxu0
        %v652 = vpop.f32.mrb[0].mxu0
        %v653 = vadd.f32 %v264, %v652
        %v654 = vpop.f32.mrb[0].mxu0
        %655 = vmatprep.mubr.bf16.mxu0 0
        %656 = vmatmul.mubr.bf16.gmra.mrb[0].mxu0 %v466
        %v657 = vpop.f32.mrb[0].mxu0
        %v658 = vadd.f32 %v264, %v657
        %v659 = vpop.f32.mrb[0].mxu0
        %v660 = vpop.f32.mrb[0].mxu0
        %v661 = vadd.f32 %v264, %v660
        %v662 = vpop.f32.mrb[0].mxu0
        %663 = vmatprep.mubr.bf16.mxu0 0
        %664 = vmatmul.mubr.bf16.gmra.mrb[0].mxu0 %v469
        %v665 = vpop.f32.mrb[0].mxu0
        %v666 = vadd.f32 %v264, %v665
        %v667 = vpop.f32.mrb[0].mxu0
        %v668 = vpop.f32.mrb[0].mxu0
        %v669 = vadd.f32 %v264, %v668
        %v670 = vpop.f32.mrb[0].mxu0
        %671 = vmatprep.mubr.bf16.mxu0 0
        %672 = vmatmul.mubr.bf16.gmra.mrb[0].mxu0 %v472
        %v673 = vpop.f32.mrb[0].mxu0
        %v674 = vadd.f32 %v264, %v673
        %v675 = vpop.f32.mrb[0].mxu0
        %v676 = vpop.f32.mrb[0].mxu0
        %v677 = vadd.f32 %v264, %v676
        %v678 = vpop.f32.mrb[0].mxu0
        %679 = vmatprep.mubr.bf16.mxu0 0
        %680 = vmatmul.mubr.bf16.gmra.mrb[0].mxu0 %v475
        %v681 = vpop.f32.mrb[0].mxu0
        %v682 = vadd.f32 %v264, %v681
        %v683 = vpop.f32.mrb[0].mxu0
        %v684 = vpop.f32.mrb[0].mxu0
        %v685 = vadd.f32 %v264, %v684
        %v686 = vpop.f32.mrb[0].mxu0
        %687 = vmatprep.mubr.bf16.mxu0 0
        %688 = vmatmul.mubr.bf16.gmra.mrb[0].mxu0 %v478
        %v689 = vpop.f32.mrb[0].mxu0
        %v690 = vadd.f32 %v264, %v689
        %v691 = vpop.f32.mrb[0].mxu0
        %v692 = vpop.f32.mrb[0].mxu0
        %v693 = vadd.f32 %v264, %v692
        %v694 = vpop.f32.mrb[0].mxu0
        %695 = vmatprep.mubr.bf16.mxu0 0
        %696 = vmatmul.mubr.bf16.gmra.mrb[0].mxu0 %v481
        %v697 = vpop.f32.mrb[0].mxu0
        %v698 = vadd.f32 %v264, %v697
        %v699 = vpop.f32.mrb[0].mxu0
        %v700 = vpop.f32.mrb[0].mxu0
        %v701 = vadd.f32 %v264, %v700
        %v702 = vpop.f32.mrb[0].mxu0
        %703 = vmatprep.mubr.bf16.mxu0 0
        %704 = vmatmul.mubr.bf16.gmra.mrb[0].mxu0 %v484
        %v705 = vpop.f32.mrb[0].mxu0
        %v706 = vadd.f32 %v264, %v705
        %v707 = vpop.f32.mrb[0].mxu0
        %v708 = vpop.f32.mrb[0].mxu0
        %v709 = vadd.f32 %v264, %v708
        %v710 = vpop.f32.mrb[0].mxu0
        %711 = vmatprep.mubr.bf16.mxu0 0
        %712 = vmatmul.mubr.bf16.gmra.mrb[0].mxu0 %v487
        %v713 = vpop.f32.mrb[0].mxu0
        %v714 = vadd.f32 %v264, %v713
        %v715 = vpop.f32.mrb[0].mxu0
        %v716 = vpop.f32.mrb[0].mxu0
        %v717 = vadd.f32 %v264, %v716
        %v718 = vpop.f32.mrb[0].mxu0
        %719 = vmatprep.mubr.bf16.mxu0 0
        %720 = vmatmul.mubr.bf16.gmra.mrb[0].mxu0 %v490
        %v721 = vpop.f32.mrb[0].mxu0
        %v722 = vadd.f32 %v264, %v721
        %v723 = vpop.f32.mrb[0].mxu0
        %v724 = vpop.f32.mrb[0].mxu0
        %v725 = vadd.f32 %v264, %v724
        %v726 = vpop.f32.mrb[0].mxu0
        %727 = vmatprep.mubr.bf16.mxu0 0
        %728 = vmatmul.mubr.bf16.gmra.mrb[0].mxu0 %v493
        %v729 = vpop.f32.mrb[0].mxu0
        %v730 = vadd.f32 %v264, %v729
        %v731 = vpop.f32.mrb[0].mxu0
        %v732 = vpop.f32.mrb[0].mxu0
        %v733 = vadd.f32 %v264, %v732
        %v734 = vpop.f32.mrb[0].mxu0
        %735 = vmatprep.mubr.bf16.mxu0 0
        %736 = vmatmul.mubr.bf16.gmra.mrb[0].mxu0 %v496
        %v737 = vpop.f32.mrb[0].mxu0
        %v738 = vadd.f32 %v264, %v737
        %v739 = vpop.f32.mrb[0].mxu0
        %v740 = vpop.f32.mrb[0].mxu0
        %v741 = vadd.f32 %v264, %v740
        %v742 = vpop.f32.mrb[0].mxu0
        %743 = vmatprep.mubr.bf16.mxu0 0
        %744 = vmatmul.mubr.bf16.gmra.mrb[0].mxu0 %v499
        %v745 = vpop.f32.mrb[0].mxu0
        %v746 = vadd.f32 %v264, %v745
        %v747 = vpop.f32.mrb[0].mxu0
        %v748 = vpop.f32.mrb[0].mxu0
        %v749 = vadd.f32 %v264, %v748
        %v750 = vpop.f32.mrb[0].mxu0
        %751 = vmatprep.mubr.bf16.mxu0 0
        %752 = vmatmul.mubr.bf16.gmra.mrb[0].mxu0 %v502
        %v753 = vpop.f32.mrb[0].mxu0
        %v754 = vadd.f32 %v264, %v753
        %v755 = vpop.f32.mrb[0].mxu0
        %v756 = vpop.f32.mrb[0].mxu0
        %v757 = vadd.f32 %v264, %v756
        %v758 = vpop.f32.mrb[0].mxu0
        %759 = vmatprep.mubr.bf16.mxu0 0
        %760 = vmatmul.mubr.bf16.gmra.mrb[0].mxu0 %v505
        %v761 = vpop.f32.mrb[0].mxu0
        %v762 = vadd.f32 %v264, %v761
        %v763 = vpop.f32.mrb[0].mxu0
        %v764 = vpop.f32.mrb[0].mxu0
        %v765 = vadd.f32 %v264, %v764
        %v766 = vpop.f32.mrb[0].mxu0
        %767 = vmatprep.mubr.bf16.mxu0 0
        %768 = vmatmul.mubr.bf16.gmra.mrb[0].mxu0 %v508
        %v769 = vpop.f32.mrb[0].mxu0
        %v770 = vadd.f32 %v264, %v769
        %v771 = vpop.f32.mrb[0].mxu0
        %v772 = vpop.f32.mrb[0].mxu0
        %v773 = vadd.f32 %v264, %v772
        %v774 = vpop.f32.mrb[0].mxu0
        %775 = vmatprep.mubr.bf16.mxu0 0
        %776 = vmatmul.mubr.bf16.gmra.mrb[0].mxu0 %v511
        %v777 = vpop.f32.mrb[0].mxu0
        %v778 = vadd.f32 %v264, %v777
        %v779 = vpop.f32.mrb[0].mxu0
        %v780 = vpop.f32.mrb[0].mxu0
        %v781 = vadd.f32 %v264, %v780
        %v782 = vpop.f32.mrb[0].mxu0
        %783 = vmatprep.mubr.bf16.mxu0 0
        %784 = vmatmul.mubr.bf16.gmra.mrb[0].mxu0 %v514
        %v785 = vpop.f32.mrb[0].mxu0
        %v786 = vadd.f32 %v264, %v785
        %v787 = vpop.f32.mrb[0].mxu0
        %v788 = vpop.f32.mrb[0].mxu0
        %v789 = vadd.f32 %v264, %v788
        %v790 = vpop.f32.mrb[0].mxu0
        %791 = vmatprep.mubr.bf16.mxu0 0
        %792 = vmatmul.mubr.bf16.gmra.mrb[0].mxu0 %v517
        %v793 = vpop.f32.mrb[0].mxu0
        %v794 = vadd.f32 %v264, %v793
        %v795 = vpop.f32.mrb[0].mxu0
        %v796 = vpop.f32.mrb[0].mxu0
        %v797 = vadd.f32 %v264, %v796
        %v798 = vpop.f32.mrb[0].mxu0
        %799 = vmatprep.mubr.bf16.mxu0 0
        %800 = vmatmul.mubr.bf16.gmra.mrb[0].mxu0 %v520
        %v801 = vpop.f32.mrb[0].mxu0
        %v802 = vadd.f32 %v264, %v801
        %v803 = vpop.f32.mrb[0].mxu0
        %v804 = vpop.f32.mrb[0].mxu0
        %v805 = vadd.f32 %v264, %v804
        %v806 = vpop.f32.mrb[0].mxu0
        %807 = vmatprep.mubr.bf16.mxu0 0
        %808 = vmatmul.mubr.bf16.gmra.mrb[0].mxu0 %v523
        %v809 = vpop.f32.mrb[0].mxu0
        %v810 = vadd.f32 %v264, %v809
        %v811 = vpop.f32.mrb[0].mxu0
        %v812 = vpop.f32.mrb[0].mxu0
        %v813 = vadd.f32 %v264, %v812
        %v814 = vpop.f32.mrb[0].mxu0
        %815 = vmatprep.mubr.bf16.mxu0 0
        %816 = vmatmul.mubr.bf16.gmra.mrb[0].mxu0 %v526
        %v817 = vpop.f32.mrb[0].mxu0
        %v818 = vadd.f32 %v264, %v817
        %v819 = vpop.f32.mrb[0].mxu0
        %v820 = vpop.f32.mrb[0].mxu0
        %v821 = vadd.f32 %v264, %v820
        %v822 = vpop.f32.mrb[0].mxu0
        %823 = vdwg.mxu0
        %v824 = vmax.f32 %v570, 0.0
        %v825 = vmax.f32 %v573, 0.0
        %v826 = vmax.f32 %v578, 0.0
        %v827 = vmax.f32 %v581, 0.0
        %v828 = vmax.f32 %v586, 0.0
        %v829 = vmax.f32 %v589, 0.0
        %v830 = vmax.f32 %v594, 0.0
        %v831 = vmax.f32 %v597, 0.0
        %v832 = vmax.f32 %v602, 0.0
        %v833 = vmax.f32 %v605, 0.0
        %v834 = vmax.f32 %v610, 0.0
        %v835 = vmax.f32 %v613, 0.0
        %v836 = vmax.f32 %v618, 0.0
        %v837 = vmax.f32 %v621, 0.0
        %v838 = vmax.f32 %v626, 0.0
        %v839 = vmax.f32 %v629, 0.0
        %v840 = vmax.f32 %v634, 0.0
        %v841 = vmax.f32 %v637, 0.0
        %v842 = vmax.f32 %v642, 0.0
        %v843 = vmax.f32 %v645, 0.0
        %v844 = vmax.f32 %v650, 0.0
        %v845 = vmax.f32 %v653, 0.0
        %v846 = vmax.f32 %v658, 0.0
        %v847 = vmax.f32 %v661, 0.0
        %v848 = vmax.f32 %v666, 0.0
        %v849 = vmax.f32 %v669, 0.0
        %v850 = vmax.f32 %v674, 0.0
        %v851 = vmax.f32 %v677, 0.0
        %v852 = vmax.f32 %v682, 0.0
        %v853 = vmax.f32 %v685, 0.0
        %v854 = vmax.f32 %v690, 0.0
        %v855 = vmax.f32 %v693, 0.0
        %v856 = vmax.f32 %v698, 0.0
        %v857 = vmax.f32 %v701, 0.0
        %v858 = vmax.f32 %v706, 0.0
        %v859 = vmax.f32 %v709, 0.0
        %v860 = vmax.f32 %v714, 0.0
        %v861 = vmax.f32 %v717, 0.0
        %v862 = vmax.f32 %v722, 0.0
        %v863 = vmax.f32 %v725, 0.0
        %v864 = vmax.f32 %v730, 0.0
        %v865 = vmax.f32 %v733, 0.0
        %v866 = vmax.f32 %v738, 0.0
        %v867 = vmax.f32 %v741, 0.0
        %v868 = vmax.f32 %v746, 0.0
        %v869 = vmax.f32 %v749, 0.0
        %v870 = vmax.f32 %v754, 0.0
        %v871 = vmax.f32 %v757, 0.0
        %v872 = vmax.f32 %v762, 0.0
        %v873 = vmax.f32 %v765, 0.0
        %v874 = vmax.f32 %v770, 0.0
        %v875 = vmax.f32 %v773, 0.0
        %v876 = vmax.f32 %v778, 0.0
        %v877 = vmax.f32 %v781, 0.0
        %v878 = vmax.f32 %v786, 0.0
        %v879 = vmax.f32 %v789, 0.0
        %v880 = vmax.f32 %v794, 0.0
        %v881 = vmax.f32 %v797, 0.0
        %v882 = vmax.f32 %v802, 0.0
        %v883 = vmax.f32 %v805, 0.0
        %v884 = vmax.f32 %v810, 0.0
        %v885 = vmax.f32 %v813, 0.0
        %v886 = vmax.f32 %v818, 0.0
        %v887 = vmax.f32 %v821, 0.0
        %v888 = vpack.c.bf16 %v825, %v824
        %v889 = vpack.c.bf16 %v827, %v826
        %v890 = vpack.c.bf16 %v829, %v828
        %v891 = vpack.c.bf16 %v831, %v830
        %v892 = vpack.c.bf16 %v833, %v832
        %v893 = vpack.c.bf16 %v835, %v834
        %v894 = vpack.c.bf16 %v837, %v836
        %v895 = vpack.c.bf16 %v839, %v838
        %v896 = vpack.c.bf16 %v841, %v840
        %v897 = vpack.c.bf16 %v843, %v842
        %v898 = vpack.c.bf16 %v845, %v844
        %v899 = vpack.c.bf16 %v847, %v846
        %v900 = vpack.c.bf16 %v849, %v848
        %v901 = vpack.c.bf16 %v851, %v850
        %v902 = vpack.c.bf16 %v853, %v852
        %v903 = vpack.c.bf16 %v855, %v854
        %v904 = vpack.c.bf16 %v857, %v856
        %v905 = vpack.c.bf16 %v859, %v858
        %v906 = vpack.c.bf16 %v861, %v860
        %v907 = vpack.c.bf16 %v863, %v862
        %v908 = vpack.c.bf16 %v865, %v864
        %v909 = vpack.c.bf16 %v867, %v866
        %v910 = vpack.c.bf16 %v869, %v868
        %v911 = vpack.c.bf16 %v871, %v870
        %v912 = vpack.c.bf16 %v873, %v872
        %v913 = vpack.c.bf16 %v875, %v874
        %v914 = vpack.c.bf16 %v877, %v876
        %v915 = vpack.c.bf16 %v879, %v878
        %v916 = vpack.c.bf16 %v881, %v880
        %v917 = vpack.c.bf16 %v883, %v882
        %v918 = vpack.c.bf16 %v885, %v884
        %v919 = vpack.c.bf16 %v887, %v886
        %v952 = vunpack.c.l.b16 %v888
        %v953 = vunpack.c.h.b16 %v888
        %v954 = vunpack.c.l.b16 %v889
        %v955 = vunpack.c.h.b16 %v889
        %v956 = vunpack.c.l.b16 %v890
        %v957 = vunpack.c.h.b16 %v890
        %v958 = vunpack.c.l.b16 %v891
        %v959 = vunpack.c.h.b16 %v891
        %v960 = vunpack.c.l.b16 %v892
        %v961 = vunpack.c.h.b16 %v892
        %v962 = vunpack.c.l.b16 %v893
        %v963 = vunpack.c.h.b16 %v893
        %v964 = vunpack.c.l.b16 %v894
        %v965 = vunpack.c.h.b16 %v894
        %v966 = vunpack.c.l.b16 %v895
        %v967 = vunpack.c.h.b16 %v895
        %v968 = vunpack.c.l.b16 %v896
        %v969 = vunpack.c.h.b16 %v896
        %v970 = vunpack.c.l.b16 %v897
        %v971 = vunpack.c.h.b16 %v897
        %v972 = vunpack.c.l.b16 %v898
        %v973 = vunpack.c.h.b16 %v898
        %v974 = vunpack.c.l.b16 %v899
        %v975 = vunpack.c.h.b16 %v899
        %v976 = vunpack.c.l.b16 %v900
        %v977 = vunpack.c.h.b16 %v900
        %v978 = vunpack.c.l.b16 %v901
        %v979 = vunpack.c.h.b16 %v901
        %v980 = vunpack.c.l.b16 %v902
        %v981 = vunpack.c.h.b16 %v902
        %v982 = vunpack.c.l.b16 %v903
        %v983 = vunpack.c.h.b16 %v903
        %v984 = vunpack.c.l.b16 %v904
        %v985 = vunpack.c.h.b16 %v904
        %v986 = vunpack.c.l.b16 %v905
        %v987 = vunpack.c.h.b16 %v905
        %v988 = vunpack.c.l.b16 %v906
        %v989 = vunpack.c.h.b16 %v906
        %v990 = vunpack.c.l.b16 %v907
        %v991 = vunpack.c.h.b16 %v907
        %v992 = vunpack.c.l.b16 %v908
        %v993 = vunpack.c.h.b16 %v908
        %v994 = vunpack.c.l.b16 %v909
        %v995 = vunpack.c.h.b16 %v909
        %v996 = vunpack.c.l.b16 %v910
        %v997 = vunpack.c.h.b16 %v910
        %v998 = vunpack.c.l.b16 %v911
        %v999 = vunpack.c.h.b16 %v911
        %v1000 = vunpack.c.l.b16 %v912
        %v1001 = vunpack.c.h.b16 %v912
        %v1002 = vunpack.c.l.b16 %v913
        %v1003 = vunpack.c.h.b16 %v913
        %v1004 = vunpack.c.l.b16 %v914
        %v1005 = vunpack.c.h.b16 %v914
        %v1006 = vunpack.c.l.b16 %v915
        %v1007 = vunpack.c.h.b16 %v915
        %v1008 = vunpack.c.l.b16 %v916
        %v1009 = vunpack.c.h.b16 %v916
        %v1010 = vunpack.c.l.b16 %v917
        %v1011 = vunpack.c.h.b16 %v917
        %v1012 = vunpack.c.l.b16 %v918
        %v1013 = vunpack.c.h.b16 %v918
        %v1014 = vunpack.c.l.b16 %v919
        %v1015 = vunpack.c.h.b16 %v919
        %v1016 = vpack.c.b16 %v952, %v952
        %v1017 = vpack.c.b16 %v953, %v953
        %v1018 = vpack.c.b16 %v954, %v954
        %v1019 = vpack.c.b16 %v955, %v955
        %v1020 = vpack.c.b16 %v956, %v956
        %v1021 = vpack.c.b16 %v957, %v957
        %v1022 = vpack.c.b16 %v958, %v958
        %v1023 = vpack.c.b16 %v959, %v959
        %v1024 = vpack.c.b16 %v960, %v960
        %v1025 = vpack.c.b16 %v961, %v961
        %v1026 = vpack.c.b16 %v962, %v962
        %v1027 = vpack.c.b16 %v963, %v963
        %v1028 = vpack.c.b16 %v964, %v964
        %v1029 = vpack.c.b16 %v965, %v965
        %v1030 = vpack.c.b16 %v966, %v966
        %v1031 = vpack.c.b16 %v967, %v967
        %v1032 = vpack.c.b16 %v968, %v968
        %v1033 = vpack.c.b16 %v969, %v969
        %v1034 = vpack.c.b16 %v970, %v970
        %v1035 = vpack.c.b16 %v971, %v971
        %v1036 = vpack.c.b16 %v972, %v972
        %v1037 = vpack.c.b16 %v973, %v973
        %v1038 = vpack.c.b16 %v974, %v974
        %v1039 = vpack.c.b16 %v975, %v975
        %v1040 = vpack.c.b16 %v976, %v976
        %v1041 = vpack.c.b16 %v977, %v977
        %v1042 = vpack.c.b16 %v978, %v978
        %v1043 = vpack.c.b16 %v979, %v979
        %v1044 = vpack.c.b16 %v980, %v980
        %v1045 = vpack.c.b16 %v981, %v981
        %v1046 = vpack.c.b16 %v982, %v982
        %v1047 = vpack.c.b16 %v983, %v983
        %v1048 = vpack.c.b16 %v984, %v984
        %v1049 = vpack.c.b16 %v985, %v985
        %v1050 = vpack.c.b16 %v986, %v986
        %v1051 = vpack.c.b16 %v987, %v987
        %v1052 = vpack.c.b16 %v988, %v988
        %v1053 = vpack.c.b16 %v989, %v989
        %v1054 = vpack.c.b16 %v990, %v990
        %v1055 = vpack.c.b16 %v991, %v991
        %v1056 = vpack.c.b16 %v992, %v992
        %v1057 = vpack.c.b16 %v993, %v993
        %v1058 = vpack.c.b16 %v994, %v994
        %v1059 = vpack.c.b16 %v995, %v995
        %v1060 = vpack.c.b16 %v996, %v996
        %v1061 = vpack.c.b16 %v997, %v997
        %v1062 = vpack.c.b16 %v998, %v998
        %v1063 = vpack.c.b16 %v999, %v999
        %v1064 = vpack.c.b16 %v1000, %v1000
        %v1065 = vpack.c.b16 %v1001, %v1001
        %v1066 = vpack.c.b16 %v1002, %v1002
        %v1067 = vpack.c.b16 %v1003, %v1003
        %v1068 = vpack.c.b16 %v1004, %v1004
        %v1069 = vpack.c.b16 %v1005, %v1005
        %v1070 = vpack.c.b16 %v1006, %v1006
        %v1071 = vpack.c.b16 %v1007, %v1007
        %v1072 = vpack.c.b16 %v1008, %v1008
        %v1073 = vpack.c.b16 %v1009, %v1009
        %v1074 = vpack.c.b16 %v1010, %v1010
        %v1075 = vpack.c.b16 %v1011, %v1011
        %v1076 = vpack.c.b16 %v1012, %v1012
        %v1077 = vpack.c.b16 %v1013, %v1013
        %v1078 = vpack.c.b16 %v1014, %v1014
        %v1079 = vpack.c.b16 %v1015, %v1015
        %1144 = vst [vmem:[%s172] sm:$0xf] %v1016
        %1145 = vst [vmem:[%s172 + $0x4] sm:$0xf] %v1017
        %1146 = vst [vmem:[%s172 + $0x8] sm:$0xf] %v1018
        %1147 = vst [vmem:[%s172 + $0xc] sm:$0xf] %v1019
        %1148 = vst [vmem:[%s172 + $0x10] sm:$0xf] %v1020
        %1149 = vst [vmem:[%s172 + $0x14] sm:$0xf] %v1021
        %1150 = vst [vmem:[%s172 + $0x18] sm:$0xf] %v1022
        %1151 = vst [vmem:[%s172 + $0x1c] sm:$0xf] %v1023
        %1152 = vst [vmem:[%s172 + $0x20] sm:$0xf] %v1024
        %1153 = vst [vmem:[%s172 + $0x24] sm:$0xf] %v1025
        %1154 = vst [vmem:[%s172 + $0x28] sm:$0xf] %v1026
        %1155 = vst [vmem:[%s172 + $0x2c] sm:$0xf] %v1027
        %1156 = vst [vmem:[%s172 + $0x30] sm:$0xf] %v1028
        %1157 = vst [vmem:[%s172 + $0x34] sm:$0xf] %v1029
        %1158 = vst [vmem:[%s172 + $0x38] sm:$0xf] %v1030
        %1159 = vst [vmem:[%s172 + $0x3c] sm:$0xf] %v1031
        %1160 = vst [vmem:[%s172 + $0x40] sm:$0xf] %v1032
        %1161 = vst [vmem:[%s172 + $0x44] sm:$0xf] %v1033
        %1162 = vst [vmem:[%s172 + $0x48] sm:$0xf] %v1034
        %1163 = vst [vmem:[%s172 + $0x4c] sm:$0xf] %v1035
        %1164 = vst [vmem:[%s172 + $0x50] sm:$0xf] %v1036
        %1165 = vst [vmem:[%s172 + $0x54] sm:$0xf] %v1037
        %1166 = vst [vmem:[%s172 + $0x58] sm:$0xf] %v1038
        %1167 = vst [vmem:[%s172 + $0x5c] sm:$0xf] %v1039
        %1168 = vst [vmem:[%s172 + $0x60] sm:$0xf] %v1040
        %1169 = vst [vmem:[%s172 + $0x64] sm:$0xf] %v1041
        %1170 = vst [vmem:[%s172 + $0x68] sm:$0xf] %v1042
        %1171 = vst [vmem:[%s172 + $0x6c] sm:$0xf] %v1043
        %1172 = vst [vmem:[%s172 + $0x70] sm:$0xf] %v1044
        %1173 = vst [vmem:[%s172 + $0x74] sm:$0xf] %v1045
        %1174 = vst [vmem:[%s172 + $0x78] sm:$0xf] %v1046
        %1175 = vst [vmem:[%s172 + $0x7c] sm:$0xf] %v1047
        %1176 = vst [vmem:[%s172 + $0x80] sm:$0xf] %v1048
        %1177 = vst [vmem:[%s172 + $0x84] sm:$0xf] %v1049
        %1178 = vst [vmem:[%s172 + $0x88] sm:$0xf] %v1050
        %1179 = vst [vmem:[%s172 + $0x8c] sm:$0xf] %v1051
        %1180 = vst [vmem:[%s172 + $0x90] sm:$0xf] %v1052
        %1181 = vst [vmem:[%s172 + $0x94] sm:$0xf] %v1053
        %1182 = vst [vmem:[%s172 + $0x98] sm:$0xf] %v1054
        %1183 = vst [vmem:[%s172 + $0x9c] sm:$0xf] %v1055
        %1184 = vst [vmem:[%s172 + $0xa0] sm:$0xf] %v1056
        %1185 = vst [vmem:[%s172 + $0xa4] sm:$0xf] %v1057
        %1186 = vst [vmem:[%s172 + $0xa8] sm:$0xf] %v1058
        %1187 = vst [vmem:[%s172 + $0xac] sm:$0xf] %v1059
        %1188 = vst [vmem:[%s172 + $0xb0] sm:$0xf] %v1060
        %1189 = vst [vmem:[%s172 + $0xb4] sm:$0xf] %v1061
        %1190 = vst [vmem:[%s172 + $0xb8] sm:$0xf] %v1062
        %1191 = vst [vmem:[%s172 + $0xbc] sm:$0xf] %v1063
        %1192 = vst [vmem:[%s172 + $0xc0] sm:$0xf] %v1064
        %1193 = vst [vmem:[%s172 + $0xc4] sm:$0xf] %v1065
        %1194 = vst [vmem:[%s172 + $0xc8] sm:$0xf] %v1066
        %1195 = vst [vmem:[%s172 + $0xcc] sm:$0xf] %v1067
        %1196 = vst [vmem:[%s172 + $0xd0] sm:$0xf] %v1068
        %1197 = vst [vmem:[%s172 + $0xd4] sm:$0xf] %v1069
        %1198 = vst [vmem:[%s172 + $0xd8] sm:$0xf] %v1070
        %1199 = vst [vmem:[%s172 + $0xdc] sm:$0xf] %v1071
        %1200 = vst [vmem:[%s172 + $0xe0] sm:$0xf] %v1072
        %1201 = vst [vmem:[%s172 + $0xe4] sm:$0xf] %v1073
        %1202 = vst [vmem:[%s172 + $0xe8] sm:$0xf] %v1074
        %1203 = vst [vmem:[%s172 + $0xec] sm:$0xf] %v1075
        %1204 = vst [vmem:[%s172 + $0xf0] sm:$0xf] %v1076
        %1205 = vst [vmem:[%s172 + $0xf4] sm:$0xf] %v1077
        %1206 = vst [vmem:[%s172 + $0xf8] sm:$0xf] %v1078
        %1207 = vst [vmem:[%s172 + $0xfc] sm:$0xf] %v1079
        %s1208 = sand.u32 %s90, 1
        %s1209 = sand.u32 %s90, 1
        %s1210 = smul.addr %s1209, 256
        %s1211 = scalar_lea.vmem [#allocation2], %s1210
        // Predicated region
        $region33: #{teacher_forward.7} parent=31 // pred_check
          %p1212 = pneg %p100
        $region34: #{teacher_forward.7} parent=31 // pred_check_branch
          %1214 = sbr.rel (%p1212) target = $region36
        $region35: #{teacher_forward.7} parent=31 // pred_region
          %s1215 = smul.u32 64, %s14
          %s1216 = ssub.s32 169, %s1215
          %p1217 = scmp.lt.s32.totalorder %s1216, 64
          %s1218 = scalar_select %p1217, %s1216, 64
          %s1219 = smul.u32 64, %s1218
          %p1220 = scmp.ne.s32.totalorder 0, %s1219
          %s1221 = smul.addr %s1215, 4
          %s1222 = scalar_lea.vmem %s3, %s1221
          // Predicated region
          $region37: #{teacher_forward.7} parent=35 // pred_check
            %p1223 = pneg %p1220
          $region38: #{teacher_forward.7} parent=35 // pred_check_branch
            %1225 = sbr.rel (%p1223) target = $region40
          $region39: #{teacher_forward.7} parent=35 // pred_region
            // Predicated region
            $region41: #{teacher_forward.7} parent=39 // pred_check
              _
            $region42: #{teacher_forward.7} parent=39 // pred_check_branch
              %1227 = sbr.rel target = $region44
            $region43: #{teacher_forward.7} parent=39 // pred_region
              // Predicated region
              $region63: #{teacher_forward.7} parent=43 // pred_check
                _
              $region64: #{teacher_forward.7} parent=43 // pred_check_branch
                %1402 = sbr.rel (0) target = $region66
              $region65: #{teacher_forward.7} parent=43 // pred_region
                %s1404 = sshrl.u32 %s1218, 6
                // While loop
                $region67: #{teacher_forward.7} parent=65 // loop_pre_header
                  _
                $region68: #{teacher_forward.7} parent=65 // loop_header
                  %s1406 = sphi 0, %s1408
                  %p1407 = scmp.ge.s32.totalorder %s1406, %s1404
                  %s1411 = sphi 0, %s1544
                  %s1412 = sphi %s1211, %s1547
                  %s1413 = sphi %s1222, %s1548
                $region69: #{teacher_forward.7} parent=65 // loop_header_branch
                  %1410 = sbr.rel (%p1407) target = $region73
                $region70: #{teacher_forward.7} parent=65 // loop_body
                  %v1414 = vld [vmem:[%s1412] sm:$0xf]
                  %1415 = vst [vmem:[%s1413] sm:$0xf] %v1414
                  %v1416 = vld [vmem:[%s1412 + $0x4] sm:$0xf]
                  %1417 = vst [vmem:[%s1413 + $0x4] sm:$0xf] %v1416
                  %v1418 = vld [vmem:[%s1412 + $0x8] sm:$0xf]
                  %1419 = vst [vmem:[%s1413 + $0x8] sm:$0xf] %v1418
                  %v1420 = vld [vmem:[%s1412 + $0xc] sm:$0xf]
                  %1421 = vst [vmem:[%s1413 + $0xc] sm:$0xf] %v1420
                  %v1422 = vld [vmem:[%s1412 + $0x10] sm:$0xf]
                  %1423 = vst [vmem:[%s1413 + $0x10] sm:$0xf] %v1422
                  %v1424 = vld [vmem:[%s1412 + $0x14] sm:$0xf]
                  %1425 = vst [vmem:[%s1413 + $0x14] sm:$0xf] %v1424
                  %v1426 = vld [vmem:[%s1412 + $0x18] sm:$0xf]
                  %1427 = vst [vmem:[%s1413 + $0x18] sm:$0xf] %v1426
                  %v1428 = vld [vmem:[%s1412 + $0x1c] sm:$0xf]
                  %1429 = vst [vmem:[%s1413 + $0x1c] sm:$0xf] %v1428
                  %v1430 = vld [vmem:[%s1412 + $0x20] sm:$0xf]
                  %1431 = vst [vmem:[%s1413 + $0x20] sm:$0xf] %v1430
                  %v1432 = vld [vmem:[%s1412 + $0x24] sm:$0xf]
                  %1433 = vst [vmem:[%s1413 + $0x24] sm:$0xf] %v1432
                  %v1434 = vld [vmem:[%s1412 + $0x28] sm:$0xf]
                  %1435 = vst [vmem:[%s1413 + $0x28] sm:$0xf] %v1434
                  %v1436 = vld [vmem:[%s1412 + $0x2c] sm:$0xf]
                  %1437 = vst [vmem:[%s1413 + $0x2c] sm:$0xf] %v1436
                  %v1438 = vld [vmem:[%s1412 + $0x30] sm:$0xf]
                  %1439 = vst [vmem:[%s1413 + $0x30] sm:$0xf] %v1438
                  %v1440 = vld [vmem:[%s1412 + $0x34] sm:$0xf]
                  %1441 = vst [vmem:[%s1413 + $0x34] sm:$0xf] %v1440
                  %v1442 = vld [vmem:[%s1412 + $0x38] sm:$0xf]
                  %1443 = vst [vmem:[%s1413 + $0x38] sm:$0xf] %v1442
                  %v1444 = vld [vmem:[%s1412 + $0x3c] sm:$0xf]
                  %1445 = vst [vmem:[%s1413 + $0x3c] sm:$0xf] %v1444
                  %v1446 = vld [vmem:[%s1412 + $0x40] sm:$0xf]
                  %1447 = vst [vmem:[%s1413 + $0x40] sm:$0xf] %v1446
                  %v1448 = vld [vmem:[%s1412 + $0x44] sm:$0xf]
                  %1449 = vst [vmem:[%s1413 + $0x44] sm:$0xf] %v1448
                  %v1450 = vld [vmem:[%s1412 + $0x48] sm:$0xf]
                  %1451 = vst [vmem:[%s1413 + $0x48] sm:$0xf] %v1450
                  %v1452 = vld [vmem:[%s1412 + $0x4c] sm:$0xf]
                  %1453 = vst [vmem:[%s1413 + $0x4c] sm:$0xf] %v1452
                  %v1454 = vld [vmem:[%s1412 + $0x50] sm:$0xf]
                  %1455 = vst [vmem:[%s1413 + $0x50] sm:$0xf] %v1454
                  %v1456 = vld [vmem:[%s1412 + $0x54] sm:$0xf]
                  %1457 = vst [vmem:[%s1413 + $0x54] sm:$0xf] %v1456
                  %v1458 = vld [vmem:[%s1412 + $0x58] sm:$0xf]
                  %1459 = vst [vmem:[%s1413 + $0x58] sm:$0xf] %v1458
                  %v1460 = vld [vmem:[%s1412 + $0x5c] sm:$0xf]
                  %1461 = vst [vmem:[%s1413 + $0x5c] sm:$0xf] %v1460
                  %v1462 = vld [vmem:[%s1412 + $0x60] sm:$0xf]
                  %1463 = vst [vmem:[%s1413 + $0x60] sm:$0xf] %v1462
                  %v1464 = vld [vmem:[%s1412 + $0x64] sm:$0xf]
                  %1465 = vst [vmem:[%s1413 + $0x64] sm:$0xf] %v1464
                  %v1466 = vld [vmem:[%s1412 + $0x68] sm:$0xf]
                  %1467 = vst [vmem:[%s1413 + $0x68] sm:$0xf] %v1466
                  %v1468 = vld [vmem:[%s1412 + $0x6c] sm:$0xf]
                  %1469 = vst [vmem:[%s1413 + $0x6c] sm:$0xf] %v1468
                  %v1470 = vld [vmem:[%s1412 + $0x70] sm:$0xf]
                  %1471 = vst [vmem:[%s1413 + $0x70] sm:$0xf] %v1470
                  %v1472 = vld [vmem:[%s1412 + $0x74] sm:$0xf]
                  %1473 = vst [vmem:[%s1413 + $0x74] sm:$0xf] %v1472
                  %v1474 = vld [vmem:[%s1412 + $0x78] sm:$0xf]
                  %1475 = vst [vmem:[%s1413 + $0x78] sm:$0xf] %v1474
                  %v1476 = vld [vmem:[%s1412 + $0x7c] sm:$0xf]
                  %1477 = vst [vmem:[%s1413 + $0x7c] sm:$0xf] %v1476
                  %v1478 = vld [vmem:[%s1412 + $0x80] sm:$0xf]
                  %1479 = vst [vmem:[%s1413 + $0x80] sm:$0xf] %v1478
                  %v1480 = vld [vmem:[%s1412 + $0x84] sm:$0xf]
                  %1481 = vst [vmem:[%s1413 + $0x84] sm:$0xf] %v1480
                  %v1482 = vld [vmem:[%s1412 + $0x88] sm:$0xf]
                  %1483 = vst [vmem:[%s1413 + $0x88] sm:$0xf] %v1482
                  %v1484 = vld [vmem:[%s1412 + $0x8c] sm:$0xf]
                  %1485 = vst [vmem:[%s1413 + $0x8c] sm:$0xf] %v1484
                  %v1486 = vld [vmem:[%s1412 + $0x90] sm:$0xf]
                  %1487 = vst [vmem:[%s1413 + $0x90] sm:$0xf] %v1486
                  %v1488 = vld [vmem:[%s1412 + $0x94] sm:$0xf]
                  %1489 = vst [vmem:[%s1413 + $0x94] sm:$0xf] %v1488
                  %v1490 = vld [vmem:[%s1412 + $0x98] sm:$0xf]
                  %1491 = vst [vmem:[%s1413 + $0x98] sm:$0xf] %v1490
                  %v1492 = vld [vmem:[%s1412 + $0x9c] sm:$0xf]
                  %1493 = vst [vmem:[%s1413 + $0x9c] sm:$0xf] %v1492
                  %v1494 = vld [vmem:[%s1412 + $0xa0] sm:$0xf]
                  %1495 = vst [vmem:[%s1413 + $0xa0] sm:$0xf] %v1494
                  %v1496 = vld [vmem:[%s1412 + $0xa4] sm:$0xf]
                  %1497 = vst [vmem:[%s1413 + $0xa4] sm:$0xf] %v1496
                  %v1498 = vld [vmem:[%s1412 + $0xa8] sm:$0xf]
                  %1499 = vst [vmem:[%s1413 + $0xa8] sm:$0xf] %v1498
                  %v1500 = vld [vmem:[%s1412 + $0xac] sm:$0xf]
                  %1501 = vst [vmem:[%s1413 + $0xac] sm:$0xf] %v1500
                  %v1502 = vld [vmem:[%s1412 + $0xb0] sm:$0xf]
                  %1503 = vst [vmem:[%s1413 + $0xb0] sm:$0xf] %v1502
                  %v1504 = vld [vmem:[%s1412 + $0xb4] sm:$0xf]
                  %1505 = vst [vmem:[%s1413 + $0xb4] sm:$0xf] %v1504
                  %v1506 = vld [vmem:[%s1412 + $0xb8] sm:$0xf]
                  %1507 = vst [vmem:[%s1413 + $0xb8] sm:$0xf] %v1506
                  %v1508 = vld [vmem:[%s1412 + $0xbc] sm:$0xf]
                  %1509 = vst [vmem:[%s1413 + $0xbc] sm:$0xf] %v1508
                  %v1510 = vld [vmem:[%s1412 + $0xc0] sm:$0xf]
                  %1511 = vst [vmem:[%s1413 + $0xc0] sm:$0xf] %v1510
                  %v1512 = vld [vmem:[%s1412 + $0xc4] sm:$0xf]
                  %1513 = vst [vmem:[%s1413 + $0xc4] sm:$0xf] %v1512
                  %v1514 = vld [vmem:[%s1412 + $0xc8] sm:$0xf]
                  %1515 = vst [vmem:[%s1413 + $0xc8] sm:$0xf] %v1514
                  %v1516 = vld [vmem:[%s1412 + $0xcc] sm:$0xf]
                  %1517 = vst [vmem:[%s1413 + $0xcc] sm:$0xf] %v1516
                  %v1518 = vld [vmem:[%s1412 + $0xd0] sm:$0xf]
                  %1519 = vst [vmem:[%s1413 + $0xd0] sm:$0xf] %v1518
                  %v1520 = vld [vmem:[%s1412 + $0xd4] sm:$0xf]
                  %1521 = vst [vmem:[%s1413 + $0xd4] sm:$0xf] %v1520
                  %v1522 = vld [vmem:[%s1412 + $0xd8] sm:$0xf]
                  %1523 = vst [vmem:[%s1413 + $0xd8] sm:$0xf] %v1522
                  %v1524 = vld [vmem:[%s1412 + $0xdc] sm:$0xf]
                  %1525 = vst [vmem:[%s1413 + $0xdc] sm:$0xf] %v1524
                  %v1526 = vld [vmem:[%s1412 + $0xe0] sm:$0xf]
                  %1527 = vst [vmem:[%s1413 + $0xe0] sm:$0xf] %v1526
                  %v1528 = vld [vmem:[%s1412 + $0xe4] sm:$0xf]
                  %1529 = vst [vmem:[%s1413 + $0xe4] sm:$0xf] %v1528
                  %v1530 = vld [vmem:[%s1412 + $0xe8] sm:$0xf]
                  %1531 = vst [vmem:[%s1413 + $0xe8] sm:$0xf] %v1530
                  %v1532 = vld [vmem:[%s1412 + $0xec] sm:$0xf]
                  %1533 = vst [vmem:[%s1413 + $0xec] sm:$0xf] %v1532
                  %v1534 = vld [vmem:[%s1412 + $0xf0] sm:$0xf]
                  %1535 = vst [vmem:[%s1413 + $0xf0] sm:$0xf] %v1534
                  %v1536 = vld [vmem:[%s1412 + $0xf4] sm:$0xf]
                  %1537 = vst [vmem:[%s1413 + $0xf4] sm:$0xf] %v1536
                  %v1538 = vld [vmem:[%s1412 + $0xf8] sm:$0xf]
                  %1539 = vst [vmem:[%s1413 + $0xf8] sm:$0xf] %v1538
                  %v1540 = vld [vmem:[%s1412 + $0xfc] sm:$0xf]
                  %1541 = vst [vmem:[%s1413 + $0xfc] sm:$0xf] %v1540
                  %s1542 = sadd.s32 1, %s1411
                  %p1543 = scmp.ge.s32.totalorder %s1542, %s1404
                  %s1544 = scalar_select %p1543, 0, %s1542
                  %s1545 = smul.u32 %s1544, 256
                  %s1546 = smul.u32 %s1544, 256
                  %s1547 = scalar_lea.vmem %s1211, %s1545 [#allocation2]
                  %s1548 = scalar_lea.vmem %s1222, %s1546
                $region71: #{teacher_forward.7} parent=65 // loop_footer
                  %s1408 = sadd.s32 %s1406, 1
                $region72: #{teacher_forward.7} parent=65 // loop_footer_branch
                  %1405 = sbr.rel target = $region68
                $region73: #{teacher_forward.7} parent=65 // loop_exit
                  _
                %s1549 = sshrl.u32 %s1218, 6
                %s1550 = sand.u32 %s1218, 63
                %s1551 = smul.u32 %s1549, 64
                %s1552 = smul.u32 4, %s1551
                %s1553 = scalar_lea.vmem %s1211, %s1552 [#allocation2]
                %s1554 = smul.u32 4, %s1551
                %s1555 = scalar_lea.vmem %s1222, %s1554
                // While loop
                $region74: #{teacher_forward.7} parent=65 // loop_pre_header
                  _
                $region75: #{teacher_forward.7} parent=65 // loop_header
                  %s1557 = sphi 0, %s1559
                  %p1558 = scmp.ge.s32.totalorder %s1557, %s1550
                  %s1562 = sphi 0, %s1569
                  %s1563 = sphi %s1553, %s1572
                  %s1564 = sphi %s1555, %s1573
                $region76: #{teacher_forward.7} parent=65 // loop_header_branch
                  %1561 = sbr.rel (%p1558) target = $region80
                $region77: #{teacher_forward.7} parent=65 // loop_body
                  %v1565 = vld [vmem:[%s1563] sm:$0xf]
                  %1566 = vst [vmem:[%s1564] sm:$0xf] %v1565
                  %s1567 = sadd.s32 1, %s1562
                  %p1568 = scmp.ge.s32.totalorder %s1567, %s1550
                  %s1569 = scalar_select %p1568, 0, %s1567
                  %s1570 = smul.u32 %s1569, 4
                  %s1571 = smul.u32 %s1569, 4
                  %s1572 = scalar_lea.vmem %s1553, %s1570 [#allocation2]
                  %s1573 = scalar_lea.vmem %s1555, %s1571
                $region78: #{teacher_forward.7} parent=65 // loop_footer
                  %s1559 = sadd.s32 %s1557, 1
                $region79: #{teacher_forward.7} parent=65 // loop_footer_branch
                  %1556 = sbr.rel target = $region75
                $region80: #{teacher_forward.7} parent=65 // loop_exit
                  _
              $region66: #{teacher_forward.7} parent=43 // pred_fallthru
                _
            $region44: #{teacher_forward.7} parent=39 // pred_fallthru
              _
            // Predicated region
            $region45: #{teacher_forward.7} parent=39 // pred_check
              _
            $region46: #{teacher_forward.7} parent=39 // pred_check_branch
              %1229 = sbr.rel (0) target = $region48
            $region47: #{teacher_forward.7} parent=39 // pred_region
              %s1231 = sshrl.u32 %s1218, 6
              // While loop
              $region49: #{teacher_forward.7} parent=47 // loop_pre_header
                _
              $region50: #{teacher_forward.7} parent=47 // loop_header
                %s1233 = sphi 0, %s1235
                %p1234 = scmp.ge.s32.totalorder %s1233, %s1231
                %s1238 = sphi 0, %s1371
                %s1239 = sphi %s1211, %s1374
                %s1240 = sphi %s1222, %s1375
              $region51: #{teacher_forward.7} parent=47 // loop_header_branch
                %1237 = sbr.rel (%p1234) target = $region55
              $region52: #{teacher_forward.7} parent=47 // loop_body
                %v1241 = vld [vmem:[%s1239] sm:$0xf]
                %1242 = vst [vmem:[%s1240] sm:$0xf] %v1241
                %v1243 = vld [vmem:[%s1239 + $0x4] sm:$0xf]
                %1244 = vst [vmem:[%s1240 + $0x4] sm:$0xf] %v1243
                %v1245 = vld [vmem:[%s1239 + $0x8] sm:$0xf]
                %1246 = vst [vmem:[%s1240 + $0x8] sm:$0xf] %v1245
                %v1247 = vld [vmem:[%s1239 + $0xc] sm:$0xf]
                %1248 = vst [vmem:[%s1240 + $0xc] sm:$0xf] %v1247
                %v1249 = vld [vmem:[%s1239 + $0x10] sm:$0xf]
                %1250 = vst [vmem:[%s1240 + $0x10] sm:$0xf] %v1249
                %v1251 = vld [vmem:[%s1239 + $0x14] sm:$0xf]
                %1252 = vst [vmem:[%s1240 + $0x14] sm:$0xf] %v1251
                %v1253 = vld [vmem:[%s1239 + $0x18] sm:$0xf]
                %1254 = vst [vmem:[%s1240 + $0x18] sm:$0xf] %v1253
                %v1255 = vld [vmem:[%s1239 + $0x1c] sm:$0xf]
                %1256 = vst [vmem:[%s1240 + $0x1c] sm:$0xf] %v1255
                %v1257 = vld [vmem:[%s1239 + $0x20] sm:$0xf]
                %1258 = vst [vmem:[%s1240 + $0x20] sm:$0xf] %v1257
                %v1259 = vld [vmem:[%s1239 + $0x24] sm:$0xf]
                %1260 = vst [vmem:[%s1240 + $0x24] sm:$0xf] %v1259
                %v1261 = vld [vmem:[%s1239 + $0x28] sm:$0xf]
                %1262 = vst [vmem:[%s1240 + $0x28] sm:$0xf] %v1261
                %v1263 = vld [vmem:[%s1239 + $0x2c] sm:$0xf]
                %1264 = vst [vmem:[%s1240 + $0x2c] sm:$0xf] %v1263
                %v1265 = vld [vmem:[%s1239 + $0x30] sm:$0xf]
                %1266 = vst [vmem:[%s1240 + $0x30] sm:$0xf] %v1265
                %v1267 = vld [vmem:[%s1239 + $0x34] sm:$0xf]
                %1268 = vst [vmem:[%s1240 + $0x34] sm:$0xf] %v1267
                %v1269 = vld [vmem:[%s1239 + $0x38] sm:$0xf]
                %1270 = vst [vmem:[%s1240 + $0x38] sm:$0xf] %v1269
                %v1271 = vld [vmem:[%s1239 + $0x3c] sm:$0xf]
                %1272 = vst [vmem:[%s1240 + $0x3c] sm:$0xf] %v1271
                %v1273 = vld [vmem:[%s1239 + $0x40] sm:$0xf]
                %1274 = vst [vmem:[%s1240 + $0x40] sm:$0xf] %v1273
                %v1275 = vld [vmem:[%s1239 + $0x44] sm:$0xf]
                %1276 = vst [vmem:[%s1240 + $0x44] sm:$0xf] %v1275
                %v1277 = vld [vmem:[%s1239 + $0x48] sm:$0xf]
                %1278 = vst [vmem:[%s1240 + $0x48] sm:$0xf] %v1277
                %v1279 = vld [vmem:[%s1239 + $0x4c] sm:$0xf]
                %1280 = vst [vmem:[%s1240 + $0x4c] sm:$0xf] %v1279
                %v1281 = vld [vmem:[%s1239 + $0x50] sm:$0xf]
                %1282 = vst [vmem:[%s1240 + $0x50] sm:$0xf] %v1281
                %v1283 = vld [vmem:[%s1239 + $0x54] sm:$0xf]
                %1284 = vst [vmem:[%s1240 + $0x54] sm:$0xf] %v1283
                %v1285 = vld [vmem:[%s1239 + $0x58] sm:$0xf]
                %1286 = vst [vmem:[%s1240 + $0x58] sm:$0xf] %v1285
                %v1287 = vld [vmem:[%s1239 + $0x5c] sm:$0xf]
                %1288 = vst [vmem:[%s1240 + $0x5c] sm:$0xf] %v1287
                %v1289 = vld [vmem:[%s1239 + $0x60] sm:$0xf]
                %1290 = vst [vmem:[%s1240 + $0x60] sm:$0xf] %v1289
                %v1291 = vld [vmem:[%s1239 + $0x64] sm:$0xf]
                %1292 = vst [vmem:[%s1240 + $0x64] sm:$0xf] %v1291
                %v1293 = vld [vmem:[%s1239 + $0x68] sm:$0xf]
                %1294 = vst [vmem:[%s1240 + $0x68] sm:$0xf] %v1293
                %v1295 = vld [vmem:[%s1239 + $0x6c] sm:$0xf]
                %1296 = vst [vmem:[%s1240 + $0x6c] sm:$0xf] %v1295
                %v1297 = vld [vmem:[%s1239 + $0x70] sm:$0xf]
                %1298 = vst [vmem:[%s1240 + $0x70] sm:$0xf] %v1297
                %v1299 = vld [vmem:[%s1239 + $0x74] sm:$0xf]
                %1300 = vst [vmem:[%s1240 + $0x74] sm:$0xf] %v1299
                %v1301 = vld [vmem:[%s1239 + $0x78] sm:$0xf]
                %1302 = vst [vmem:[%s1240 + $0x78] sm:$0xf] %v1301
                %v1303 = vld [vmem:[%s1239 + $0x7c] sm:$0xf]
                %1304 = vst [vmem:[%s1240 + $0x7c] sm:$0xf] %v1303
                %v1305 = vld [vmem:[%s1239 + $0x80] sm:$0xf]
                %1306 = vst [vmem:[%s1240 + $0x80] sm:$0xf] %v1305
                %v1307 = vld [vmem:[%s1239 + $0x84] sm:$0xf]
                %1308 = vst [vmem:[%s1240 + $0x84] sm:$0xf] %v1307
                %v1309 = vld [vmem:[%s1239 + $0x88] sm:$0xf]
                %1310 = vst [vmem:[%s1240 + $0x88] sm:$0xf] %v1309
                %v1311 = vld [vmem:[%s1239 + $0x8c] sm:$0xf]
                %1312 = vst [vmem:[%s1240 + $0x8c] sm:$0xf] %v1311
                %v1313 = vld [vmem:[%s1239 + $0x90] sm:$0xf]
                %1314 = vst [vmem:[%s1240 + $0x90] sm:$0xf] %v1313
                %v1315 = vld [vmem:[%s1239 + $0x94] sm:$0xf]
                %1316 = vst [vmem:[%s1240 + $0x94] sm:$0xf] %v1315
                %v1317 = vld [vmem:[%s1239 + $0x98] sm:$0xf]
                %1318 = vst [vmem:[%s1240 + $0x98] sm:$0xf] %v1317
                %v1319 = vld [vmem:[%s1239 + $0x9c] sm:$0xf]
                %1320 = vst [vmem:[%s1240 + $0x9c] sm:$0xf] %v1319
                %v1321 = vld [vmem:[%s1239 + $0xa0] sm:$0xf]
                %1322 = vst [vmem:[%s1240 + $0xa0] sm:$0xf] %v1321
                %v1323 = vld [vmem:[%s1239 + $0xa4] sm:$0xf]
                %1324 = vst [vmem:[%s1240 + $0xa4] sm:$0xf] %v1323
                %v1325 = vld [vmem:[%s1239 + $0xa8] sm:$0xf]
                %1326 = vst [vmem:[%s1240 + $0xa8] sm:$0xf] %v1325
                %v1327 = vld [vmem:[%s1239 + $0xac] sm:$0xf]
                %1328 = vst [vmem:[%s1240 + $0xac] sm:$0xf] %v1327
                %v1329 = vld [vmem:[%s1239 + $0xb0] sm:$0xf]
                %1330 = vst [vmem:[%s1240 + $0xb0] sm:$0xf] %v1329
                %v1331 = vld [vmem:[%s1239 + $0xb4] sm:$0xf]
                %1332 = vst [vmem:[%s1240 + $0xb4] sm:$0xf] %v1331
                %v1333 = vld [vmem:[%s1239 + $0xb8] sm:$0xf]
                %1334 = vst [vmem:[%s1240 + $0xb8] sm:$0xf] %v1333
                %v1335 = vld [vmem:[%s1239 + $0xbc] sm:$0xf]
                %1336 = vst [vmem:[%s1240 + $0xbc] sm:$0xf] %v1335
                %v1337 = vld [vmem:[%s1239 + $0xc0] sm:$0xf]
                %1338 = vst [vmem:[%s1240 + $0xc0] sm:$0xf] %v1337
                %v1339 = vld [vmem:[%s1239 + $0xc4] sm:$0xf]
                %1340 = vst [vmem:[%s1240 + $0xc4] sm:$0xf] %v1339
                %v1341 = vld [vmem:[%s1239 + $0xc8] sm:$0xf]
                %1342 = vst [vmem:[%s1240 + $0xc8] sm:$0xf] %v1341
                %v1343 = vld [vmem:[%s1239 + $0xcc] sm:$0xf]
                %1344 = vst [vmem:[%s1240 + $0xcc] sm:$0xf] %v1343
                %v1345 = vld [vmem:[%s1239 + $0xd0] sm:$0xf]
                %1346 = vst [vmem:[%s1240 + $0xd0] sm:$0xf] %v1345
                %v1347 = vld [vmem:[%s1239 + $0xd4] sm:$0xf]
                %1348 = vst [vmem:[%s1240 + $0xd4] sm:$0xf] %v1347
                %v1349 = vld [vmem:[%s1239 + $0xd8] sm:$0xf]
                %1350 = vst [vmem:[%s1240 + $0xd8] sm:$0xf] %v1349
                %v1351 = vld [vmem:[%s1239 + $0xdc] sm:$0xf]
                %1352 = vst [vmem:[%s1240 + $0xdc] sm:$0xf] %v1351
                %v1353 = vld [vmem:[%s1239 + $0xe0] sm:$0xf]
                %1354 = vst [vmem:[%s1240 + $0xe0] sm:$0xf] %v1353
                %v1355 = vld [vmem:[%s1239 + $0xe4] sm:$0xf]
                %1356 = vst [vmem:[%s1240 + $0xe4] sm:$0xf] %v1355
                %v1357 = vld [vmem:[%s1239 + $0xe8] sm:$0xf]
                %1358 = vst [vmem:[%s1240 + $0xe8] sm:$0xf] %v1357
                %v1359 = vld [vmem:[%s1239 + $0xec] sm:$0xf]
                %1360 = vst [vmem:[%s1240 + $0xec] sm:$0xf] %v1359
                %v1361 = vld [vmem:[%s1239 + $0xf0] sm:$0xf]
                %1362 = vst [vmem:[%s1240 + $0xf0] sm:$0xf] %v1361
                %v1363 = vld [vmem:[%s1239 + $0xf4] sm:$0xf]
                %1364 = vst [vmem:[%s1240 + $0xf4] sm:$0xf] %v1363
                %v1365 = vld [vmem:[%s1239 + $0xf8] sm:$0xf]
                %1366 = vst [vmem:[%s1240 + $0xf8] sm:$0xf] %v1365
                %v1367 = vld [vmem:[%s1239 + $0xfc] sm:$0xf]
                %1368 = vst [vmem:[%s1240 + $0xfc] sm:$0xf] %v1367
                %s1369 = sadd.s32 1, %s1238
                %p1370 = scmp.ge.s32.totalorder %s1369, %s1231
                %s1371 = scalar_select %p1370, 0, %s1369
                %s1372 = smul.u32 %s1371, 256
                %s1373 = smul.u32 %s1371, 256
                %s1374 = scalar_lea.vmem %s1211, %s1372 [#allocation2]
                %s1375 = scalar_lea.vmem %s1222, %s1373
              $region53: #{teacher_forward.7} parent=47 // loop_footer
                %s1235 = sadd.s32 %s1233, 1
              $region54: #{teacher_forward.7} parent=47 // loop_footer_branch
                %1232 = sbr.rel target = $region50
              $region55: #{teacher_forward.7} parent=47 // loop_exit
                _
              %s1376 = sshrl.u32 %s1218, 6
              %s1377 = sand.u32 %s1218, 63
              %s1378 = smul.u32 %s1376, 64
              %s1379 = smul.u32 4, %s1378
              %s1380 = scalar_lea.vmem %s1211, %s1379 [#allocation2]
              %s1381 = smul.u32 4, %s1378
              %s1382 = scalar_lea.vmem %s1222, %s1381
              // While loop
              $region56: #{teacher_forward.7} parent=47 // loop_pre_header
                _
              $region57: #{teacher_forward.7} parent=47 // loop_header
                %s1384 = sphi 0, %s1386
                %p1385 = scmp.ge.s32.totalorder %s1384, %s1377
                %s1389 = sphi 0, %s1396
                %s1390 = sphi %s1380, %s1399
                %s1391 = sphi %s1382, %s1400
              $region58: #{teacher_forward.7} parent=47 // loop_header_branch
                %1388 = sbr.rel (%p1385) target = $region62
              $region59: #{teacher_forward.7} parent=47 // loop_body
                %v1392 = vld [vmem:[%s1390] sm:$0xf]
                %1393 = vst [vmem:[%s1391] sm:$0xf] %v1392
                %s1394 = sadd.s32 1, %s1389
                %p1395 = scmp.ge.s32.totalorder %s1394, %s1377
                %s1396 = scalar_select %p1395, 0, %s1394
                %s1397 = smul.u32 %s1396, 4
                %s1398 = smul.u32 %s1396, 4
                %s1399 = scalar_lea.vmem %s1380, %s1397 [#allocation2]
                %s1400 = scalar_lea.vmem %s1382, %s1398
              $region60: #{teacher_forward.7} parent=47 // loop_footer
                %s1386 = sadd.s32 %s1384, 1
              $region61: #{teacher_forward.7} parent=47 // loop_footer_branch
                %1383 = sbr.rel target = $region57
              $region62: #{teacher_forward.7} parent=47 // loop_exit
                _
            $region48: #{teacher_forward.7} parent=39 // pred_fallthru
              _
          $region40: #{teacher_forward.7} parent=35 // pred_fallthru
            _
          %1574 = vnop
        $region36: #{teacher_forward.7} parent=31 // pred_fallthru
          _
      $region32: #{teacher_forward.7} parent=5 // pred_fallthru
        _
      %p1575 = scmp.le.s32.totalorder 2, %s9
      // Predicated region
      $region81: #{teacher_forward.7} parent=5 // pred_check
        %p1576 = pneg %p1575
      $region82: #{teacher_forward.7} parent=5 // pred_check_branch
        %1578 = sbr.rel (%p1576) target = $region84
      $region83: #{teacher_forward.7} parent=5 // pred_region
        %s1579 = ssub.s32 %s9, 2
        // Predicated region
        $region85: #{teacher_forward.7} parent=83 // pred_check
          %p1580 = pneg %p106
        $region86: #{teacher_forward.7} parent=83 // pred_check_branch
          %1582 = sbr.rel (%p1580) target = $region88
        $region87: #{teacher_forward.7} parent=83 // pred_region
          %s1583 = sand.u32 %s91, 1
          %s1584 = sand.u32 %s91, 1
          %s1585 = smul.addr %s1584, 256
          %s1586 = scalar_lea.vmem [#allocation2], %s1585
        $region88: #{teacher_forward.7} parent=83 // pred_fallthru
          _
      $region84: #{teacher_forward.7} parent=5 // pred_fallthru
        _
    $region6: #{teacher_forward.7} parent=1 // loop_footer
      %s13 = sadd.s32 1, %s9
    $region7: #{teacher_forward.7} parent=1 // loop_footer_branch
      %8 = sbr.rel target = $region3
    $region8: #{teacher_forward.7} parent=1 // loop_exit
      _

// kernel: teacher_forward.8
$region0: #{teacher_forward.8}
  #allocation0 [shape = 'u32[]', space=smem, size = 0x4, offset = 0x4, fixed_abs, tag = 'smem constant byte address 0x4 - core index']
  #allocation1 [shape = 'u32[144,128]{1,0:T(1,128)}', space=vmem, size = 0x12000, scoped, tag = 'internal scratch']
  %s0 = inlined_call_operand.vmem [shape: bf16[2,13,416], index: 0, kind: input, shape index: {}]
  %s1 = inlined_call_operand.vmem [shape: bf16[2,13,416], index: 1, kind: input, shape index: {}]
  %s2 = inlined_call_operand.vmem [shape: bf16[2,13,416], index: 2, kind: input, shape index: {}]
  %s3 = inlined_call_operand.vmem [shape: bf16[2,13,416], index: 3, kind: input, shape index: {}]
  %s4 = inlined_call_operand.vmem [shape: bf16[2,13,416], index: 4, kind: output, shape index: {}]
  %s5 = sld [smem:[#allocation0]]
  $region49: #{teacher_forward.8} parent=0
    _
  %s7 = ssub.s32 1, %s5
  %s8 = scalar_select 0, %s7, %s5
  loop: start=0, step=1, limit=4
  $region2: #{teacher_forward.8} parent=0 // loop_pre_header
    _
  $region3: #{teacher_forward.8} parent=0 // loop_header
    %s10 = sphi 0, %s14
    %p11 = scmp.ge.s32.totalorder %s10, 4
    %s20 = sphi 0, %s22
    %s23 = sphi 0, %s20
    %s24 = sphi 0, %s23
    %s40 = sphi 0, %s24
    %s46 = sphi 0, %s48
    %s49 = sphi 0, %s46
    %s50 = sphi 0, %s49
    %s66 = sphi 0, %s50
    %s72 = sphi 0, %s74
    %s75 = sphi 0, %s72
    %s76 = sphi 0, %s75
    %s92 = sphi 0, %s76
    %s98 = sphi 0, %s100
    %s101 = sphi 0, %s98
    %s102 = sphi 0, %s101
    %s118 = sphi 0, %s102
    %s124 = sphi 0, %s126
    %s127 = sphi 0, %s124
    %s128 = sphi 0, %s127
    %s144 = sphi 0, %s128
  $region4: #{teacher_forward.8} parent=0 // loop_header_branch
    %13 = sbr.rel (%p11) target = $region8
  $region5: #{teacher_forward.8} parent=0 // loop_body
    %s15 = ssub.s32 %s10, 1
    %s16 = ssub.s32 %s10, 2
    %s17 = sadd.s32 %s10, 1
    %s18 = ssub.s32 %s10, %s17
    %p19 = scmp.eq.s32.totalorder %s18, 0
    %s21 = sadd.s32 %s20, 1
    %s22 = scalar_select %p19, %s20, %s21
    %p25 = pneg %p19
    %p26 = scmp.eq.s32.totalorder %s10, 1
    %p27 = por %p25, %p26
    %p28 = scmp.ne.s32.totalorder %s20, %s23
    %p29 = scmp.eq.s32.totalorder %s10, 0
    %p30 = por %p28, %p29
    %p31 = scmp.ne.s32.totalorder %s20, %s23
    %p32 = scmp.eq.s32.totalorder %s15, 1
    %p33 = por %p31, %p32
    %p34 = scmp.ne.s32.totalorder %s23, %s24
    %p35 = scmp.eq.s32.totalorder %s15, 0
    %p36 = por %p34, %p35
    %p37 = scmp.ne.s32.totalorder %s23, %s24
    %p38 = scmp.eq.s32.totalorder %s16, 1
    %p39 = por %p37, %p38
    %p41 = scmp.ne.s32.totalorder %s24, %s40
    %p42 = scmp.eq.s32.totalorder %s16, 0
    %p43 = por %p41, %p42
    %s44 = ssub.s32 %s10, %s17
    %p45 = scmp.eq.s32.totalorder %s44, 0
    %s47 = sadd.s32 %s46, 1
    %s48 = scalar_select %p45, %s46, %s47
    %p51 = pneg %p45
    %p52 = scmp.eq.s32.totalorder %s10, 1
    %p53 = por %p51, %p52
    %p54 = scmp.ne.s32.totalorder %s46, %s49
    %p55 = scmp.eq.s32.totalorder %s10, 0
    %p56 = por %p54, %p55
    %p57 = scmp.ne.s32.totalorder %s46, %s49
    %p58 = scmp.eq.s32.totalorder %s15, 1
    %p59 = por %p57, %p58
    %p60 = scmp.ne.s32.totalorder %s49, %s50
    %p61 = scmp.eq.s32.totalorder %s15, 0
    %p62 = por %p60, %p61
    %p63 = scmp.ne.s32.totalorder %s49, %s50
    %p64 = scmp.eq.s32.totalorder %s16, 1
    %p65 = por %p63, %p64
    %p67 = scmp.ne.s32.totalorder %s50, %s66
    %p68 = scmp.eq.s32.totalorder %s16, 0
    %p69 = por %p67, %p68
    %s70 = ssub.s32 %s10, %s17
    %p71 = scmp.eq.s32.totalorder %s70, 0
    %s73 = sadd.s32 %s72, 1
    %s74 = scalar_select %p71, %s72, %s73
    %p77 = pneg %p71
    %p78 = scmp.eq.s32.totalorder %s10, 1
    %p79 = por %p77, %p78
    %p80 = scmp.ne.s32.totalorder %s72, %s75
    %p81 = scmp.eq.s32.totalorder %s10, 0
    %p82 = por %p80, %p81
    %p83 = scmp.ne.s32.totalorder %s72, %s75
    %p84 = scmp.eq.s32.totalorder %s15, 1
    %p85 = por %p83, %p84
    %p86 = scmp.ne.s32.totalorder %s75, %s76
    %p87 = scmp.eq.s32.totalorder %s15, 0
    %p88 = por %p86, %p87
    %p89 = scmp.ne.s32.totalorder %s75, %s76
    %p90 = scmp.eq.s32.totalorder %s16, 1
    %p91 = por %p89, %p90
    %p93 = scmp.ne.s32.totalorder %s76, %s92
    %p94 = scmp.eq.s32.totalorder %s16, 0
    %p95 = por %p93, %p94
    %s96 = ssub.s32 %s10, %s17
    %p97 = scmp.eq.s32.totalorder %s96, 0
    %s99 = sadd.s32 %s98, 1
    %s100 = scalar_select %p97, %s98, %s99
    %p103 = pneg %p97
    %p104 = scmp.eq.s32.totalorder %s10, 1
    %p105 = por %p103, %p104
    %p106 = scmp.ne.s32.totalorder %s98, %s101
    %p107 = scmp.eq.s32.totalorder %s10, 0
    %p108 = por %p106, %p107
    %p109 = scmp.ne.s32.totalorder %s98, %s101
    %p110 = scmp.eq.s32.totalorder %s15, 1
    %p111 = por %p109, %p110
    %p112 = scmp.ne.s32.totalorder %s101, %s102
    %p113 = scmp.eq.s32.totalorder %s15, 0
    %p114 = por %p112, %p113
    %p115 = scmp.ne.s32.totalorder %s101, %s102
    %p116 = scmp.eq.s32.totalorder %s16, 1
    %p117 = por %p115, %p116
    %p119 = scmp.ne.s32.totalorder %s102, %s118
    %p120 = scmp.eq.s32.totalorder %s16, 0
    %p121 = por %p119, %p120
    %s122 = ssub.s32 %s10, %s17
    %p123 = scmp.eq.s32.totalorder %s122, 0
    %s125 = sadd.s32 %s124, 1
    %s126 = scalar_select %p123, %s124, %s125
    %p129 = pneg %p123
    %p130 = scmp.eq.s32.totalorder %s10, 1
    %p131 = por %p129, %p130
    %p132 = scmp.ne.s32.totalorder %s124, %s127
    %p133 = scmp.eq.s32.totalorder %s10, 0
    %p134 = por %p132, %p133
    %p135 = scmp.ne.s32.totalorder %s124, %s127
    %p136 = scmp.eq.s32.totalorder %s15, 1
    %p137 = por %p135, %p136
    %p138 = scmp.ne.s32.totalorder %s127, %s128
    %p139 = scmp.eq.s32.totalorder %s15, 0
    %p140 = por %p138, %p139
    %p141 = scmp.ne.s32.totalorder %s127, %s128
    %p142 = scmp.eq.s32.totalorder %s16, 1
    %p143 = por %p141, %p142
    %p145 = scmp.ne.s32.totalorder %s128, %s144
    %p146 = scmp.eq.s32.totalorder %s16, 0
    %p147 = por %p145, %p146
    %p148 = scmp.le.s32.totalorder 1, %s10
    %p149 = scmp.lt.s32.totalorder %s10, 3
    %p150 = pnand %p148, %p149
    %p151 = pneg %p150
    // Predicated region
    $region9: #{teacher_forward.8} parent=5 // pred_check
      _
    $region10: #{teacher_forward.8} parent=5 // pred_check_branch
      %153 = sbr.rel (%p150) target = $region12
    $region11: #{teacher_forward.8} parent=5 // pred_region
      %s154 = ssub.s32 %s10, 1
    $region12: #{teacher_forward.8} parent=5 // pred_fallthru
      _
    %p155 = scmp.lt.s32.totalorder %s10, 2
    // Predicated region
    $region13: #{teacher_forward.8} parent=5 // pred_check
      %p156 = pneg %p155
    $region14: #{teacher_forward.8} parent=5 // pred_check_branch
      %158 = sbr.rel (%p156) target = $region16
    $region15: #{teacher_forward.8} parent=5 // pred_region
      // Predicated region
      $region17: #{teacher_forward.8} parent=15 // pred_check
        %p159 = pneg %p30
      $region18: #{teacher_forward.8} parent=15 // pred_check_branch
        %161 = sbr.rel (%p159) target = $region20
      $region19: #{teacher_forward.8} parent=15 // pred_region
        %p162 = scmp.lt.s32.totalorder %s10, 1
        %s163 = scalar_select %p162, %s10, 1
        %s164 = smul.addr %s163, 8
        %s165 = smul.addr %s164, 4
        %s166 = scalar_lea.vmem %s0, %s165
      $region20: #{teacher_forward.8} parent=15 // pred_fallthru
        _
      // Predicated region
      $region21: #{teacher_forward.8} parent=15 // pred_check
        %p167 = pneg %p56
      $region22: #{teacher_forward.8} parent=15 // pred_check_branch
        %169 = sbr.rel (%p167) target = $region24
      $region23: #{teacher_forward.8} parent=15 // pred_region
        %p170 = scmp.lt.s32.totalorder %s10, 1
        %s171 = scalar_select %p170, %s10, 1
        %s172 = smul.addr %s171, 8
        %s173 = smul.addr %s172, 4
        %s174 = scalar_lea.vmem %s1, %s173
      $region24: #{teacher_forward.8} parent=15 // pred_fallthru
        _
      // Predicated region
      $region25: #{teacher_forward.8} parent=15 // pred_check
        %p175 = pneg %p82
      $region26: #{teacher_forward.8} parent=15 // pred_check_branch
        %177 = sbr.rel (%p175) target = $region28
      $region27: #{teacher_forward.8} parent=15 // pred_region
        %p178 = scmp.lt.s32.totalorder %s10, 1
        %s179 = scalar_select %p178, %s10, 1
        %s180 = smul.addr %s179, 8
        %s181 = smul.addr %s180, 4
        %s182 = scalar_lea.vmem %s2, %s181
      $region28: #{teacher_forward.8} parent=15 // pred_fallthru
        _
      // Predicated region
      $region29: #{teacher_forward.8} parent=15 // pred_check
        %p183 = pneg %p108
      $region30: #{teacher_forward.8} parent=15 // pred_check_branch
        %185 = sbr.rel (%p183) target = $region32
      $region31: #{teacher_forward.8} parent=15 // pred_region
        %p186 = scmp.lt.s32.totalorder %s10, 1
        %s187 = scalar_select %p186, %s10, 1
        %s188 = smul.addr %s187, 8
        %s189 = smul.addr %s188, 4
        %s190 = scalar_lea.vmem %s3, %s189
      $region32: #{teacher_forward.8} parent=15 // pred_fallthru
        _
    $region16: #{teacher_forward.8} parent=5 // pred_fallthru
      _
    %p191 = scmp.le.s32.totalorder 1, %s10
    %p192 = scmp.lt.s32.totalorder %s10, 3
    %p193 = pnand %p191, %p192
    %p194 = pneg %p193
    // Predicated region
    $region33: #{teacher_forward.8} parent=5 // pred_check
      _
    $region34: #{teacher_forward.8} parent=5 // pred_check_branch
      %196 = sbr.rel (%p193) target = $region36
    $region35: #{teacher_forward.8} parent=5 // pred_region
      %s197 = ssub.s32 %s10, 1
      %p198 = scmp.lt.s32.totalorder %s15, 1
      %s199 = scalar_select %p198, %s15, 1
      %s200 = smul.addr %s199, 8
      %s201 = smul.addr %s200, 4
      %s202 = scalar_lea.vmem %s0, %s201
      %p203 = pneg %p36
      %p204 = pneg %p33
      %p205 = scmp.lt.s32.totalorder %s15, 1
      %s206 = scalar_select %p205, %s15, 1
      %s207 = smul.addr %s206, 8
      %s208 = smul.addr %s207, 4
      %s209 = scalar_lea.vmem %s1, %s208
      %p210 = pneg %p62
      %p211 = pneg %p59
      %p212 = scmp.lt.s32.totalorder %s15, 1
      %s213 = scalar_select %p212, %s15, 1
      %s214 = smul.addr %s213, 8
      %s215 = smul.addr %s214, 4
      %s216 = scalar_lea.vmem %s2, %s215
      %p217 = pneg %p88
      %p218 = pneg %p85
      %p219 = scmp.lt.s32.totalorder %s15, 1
      %s220 = scalar_select %p219, %s15, 1
      %s221 = smul.addr %s220, 8
      %s222 = smul.addr %s221, 4
      %s223 = scalar_lea.vmem %s3, %s222
      %p224 = pneg %p114
      %p225 = pneg %p111
      %p226 = pneg %p140
      %p227 = pneg %p137
      %p228 = scmp.lt.s32.totalorder %s15, 1
      %s229 = scalar_select %p228, %s15, 1
      %s230 = smul.addr %s229, 8
      %s231 = smul.addr %s230, 4
      %s232 = scalar_lea.vmem %s4, %s231
      %p233 = scmp.lt.s32.totalorder %s15, 1
      %s234 = scalar_select %p233, %s15, 1
      %s235 = smul.addr %s234, 8
      %s236 = smul.addr %s235, 4
      %s237 = scalar_lea.vmem %s0, %s236
      %p238 = scmp.lt.s32.totalorder %s15, 1
      %s239 = scalar_select %p238, %s15, 1
      %s240 = smul.addr %s239, 8
      %s241 = smul.addr %s240, 4
      %s242 = scalar_lea.vmem %s1, %s241
      %p243 = scmp.lt.s32.totalorder %s15, 1
      %s244 = scalar_select %p243, %s15, 1
      %s245 = smul.addr %s244, 8
      %s246 = smul.addr %s245, 4
      %s247 = scalar_lea.vmem %s2, %s246
      %p248 = scmp.lt.s32.totalorder %s15, 1
      %s249 = scalar_select %p248, %s15, 1
      %s250 = smul.addr %s249, 8
      %s251 = smul.addr %s250, 4
      %s252 = scalar_lea.vmem %s3, %s251
      %p253 = scmp.lt.s32.totalorder %s15, 1
      %s254 = scalar_select %p253, %s15, 1
      %s255 = smul.addr %s254, 8
      %s256 = smul.addr %s255, 4
      %s257 = scalar_lea.vmem %s4, %s256
      %v258 = vld [vmem:[%s237] sm:$0xff]
      %v259 = vld [vmem:[%s237 + $0x8] sm:$0xff]
      %v260 = vld [vmem:[%s237 + $0x10] sm:$0x77]
      %v261 = vld [vmem:[%s237 + $0x18] sm:$0x77]
      %v262 = vld [vmem:[%s242] sm:$0xff]
      %v263 = vld [vmem:[%s242 + $0x8] sm:$0xff]
      %v264 = vld [vmem:[%s242 + $0x10] sm:$0x77]
      %v265 = vld [vmem:[%s242 + $0x18] sm:$0x77]
      %v266 = vmax.bf16 %v258, %v262
      %v267 = vmax.bf16 %v259, %v263
      %v268 = vmax.bf16 %v260, %v264
      %v269 = vmax.bf16 %v261, %v265
      %v270 = vld [vmem:[%s247] sm:$0xff]
      %v271 = vld [vmem:[%s247 + $0x8] sm:$0xff]
      %v272 = vld [vmem:[%s247 + $0x10] sm:$0x77]
      %v273 = vld [vmem:[%s247 + $0x18] sm:$0x77]
      %v274 = vld [vmem:[%s252] sm:$0xff]
      %v275 = vld [vmem:[%s252 + $0x8] sm:$0xff]
      %v276 = vld [vmem:[%s252 + $0x10] sm:$0x77]
      %v277 = vld [vmem:[%s252 + $0x18] sm:$0x77]
      %v278 = vmax.bf16 %v270, %v274
      %v279 = vmax.bf16 %v271, %v275
      %v280 = vmax.bf16 %v272, %v276
      %v281 = vmax.bf16 %v273, %v277
      %v282 = vmax.bf16 %v266, %v278
      %v283 = vmax.bf16 %v267, %v279
      %v284 = vmax.bf16 %v268, %v280
      %v285 = vmax.bf16 %v269, %v281
      %286 = vst [vmem:[%s257] sm:$0xff] %v282
      %vm287 = vcmask 1043456
      %vm288 = vcmask 261124
      %vm289 = vmor %vm288, %vm287
      %290 = vst.msk [vmem:[%s257 + $0x8] sm:$0xff] %vm289, %v283
      %vm291 = vcmask 1042432
      %vm292 = vsmask.f32 2304
      %vm293 = vmand %vm291, %vm292
      %vm294 = vcmask 1046532
      %vm295 = vsmask.f32 6400
      %vm296 = vmand %vm294, %vm295
      %vm297 = vmor %vm296, %vm293
      %v298 = vld [vmem:[%s257 + $0x10] sm:$0x77]
      %v299 = vsel %vm297, %v284, %v298
      %300 = vst [vmem:[%s257 + $0x10] sm:$0x77] %v299
      %vm301 = vcmask 260100
      %vm302 = vmand %vm301, %vm295
      %vm303 = vmor %vm302, %vm293
      %v304 = vld [vmem:[%s257 + $0x18] sm:$0x77]
      %v305 = vsel %vm303, %v285, %v304
      %306 = vst [vmem:[%s257 + $0x18] sm:$0x77] %v305
      %p307 = scmp.lt.s32.totalorder %s15, 1
      %s308 = scalar_select %p307, %s15, 1
      %s309 = smul.addr %s308, 8
      %s310 = smul.addr %s309, 4
      %s311 = scalar_lea.vmem %s4, %s310
      // Predicated region
      $region37: #{teacher_forward.8} parent=35 // pred_check
        %p312 = pneg %p137
      $region38: #{teacher_forward.8} parent=35 // pred_check_branch
        %314 = sbr.rel (%p312) target = $region40
      $region39: #{teacher_forward.8} parent=35 // pred_region
        _
      $region40: #{teacher_forward.8} parent=35 // pred_fallthru
        _
    $region36: #{teacher_forward.8} parent=5 // pred_fallthru
      _
    %p315 = scmp.le.s32.totalorder 2, %s10
    // Predicated region
    $region41: #{teacher_forward.8} parent=5 // pred_check
      %p316 = pneg %p315
    $region42: #{teacher_forward.8} parent=5 // pred_check_branch
      %318 = sbr.rel (%p316) target = $region44
    $region43: #{teacher_forward.8} parent=5 // pred_region
      %s319 = ssub.s32 %s10, 2
      // Predicated region
      $region45: #{teacher_forward.8} parent=43 // pred_check
        %p320 = pneg %p143
      $region46: #{teacher_forward.8} parent=43 // pred_check_branch
        %322 = sbr.rel (%p320) target = $region48
      $region47: #{teacher_forward.8} parent=43 // pred_region
        %p323 = scmp.lt.s32.totalorder %s16, 1
        %s324 = scalar_select %p323, %s16, 1
        %s325 = smul.addr %s324, 8
        %s326 = smul.addr %s325, 4
        %s327 = scalar_lea.vmem %s4, %s326
      $region48: #{teacher_forward.8} parent=43 // pred_fallthru
        _
    $region44: #{teacher_forward.8} parent=5 // pred_fallthru
      _
  $region6: #{teacher_forward.8} parent=0 // loop_footer
    %s14 = sadd.s32 1, %s10
  $region7: #{teacher_forward.8} parent=0 // loop_footer_branch
    %9 = sbr.rel target = $region3
  $region8: #{teacher_forward.8} parent=0 // loop_exit
    _

// kernel: teacher_forward.10
$region0: #{teacher_forward.10}
  #allocation0 [shape = 'u32[]', space=smem, size = 0x4, offset = 0x4, fixed_abs, tag = 'smem constant byte address 0x4 - core index']
  #allocation1 [shape = 'u32[144,128]{1,0:T(1,128)}', space=vmem, size = 0x12000, scoped, tag = 'internal scratch']
  %s0 = inlined_call_operand.vmem [shape: bf16[2,5,320], index: 0, kind: input, shape index: {}]
  %s1 = inlined_call_operand.vmem [shape: bf16[2,5,320], index: 1, kind: input, shape index: {}]
  %s2 = inlined_call_operand.vmem [shape: bf16[2,5,320], index: 2, kind: input, shape index: {}]
  %s3 = inlined_call_operand.vmem [shape: bf16[2,5,320], index: 3, kind: input, shape index: {}]
  %s4 = inlined_call_operand.vmem [shape: bf16[2,5,320], index: 4, kind: output, shape index: {}]
  %s5 = sld [smem:[#allocation0]]
  $region49: #{teacher_forward.10} parent=0
    _
  %s7 = ssub.s32 1, %s5
  %s8 = scalar_select 0, %s7, %s5
  loop: start=0, step=1, limit=4
  $region2: #{teacher_forward.10} parent=0 // loop_pre_header
    _
  $region3: #{teacher_forward.10} parent=0 // loop_header
    %s10 = sphi 0, %s14
    %p11 = scmp.ge.s32.totalorder %s10, 4
    %s20 = sphi 0, %s22
    %s23 = sphi 0, %s20
    %s24 = sphi 0, %s23
    %s40 = sphi 0, %s24
    %s46 = sphi 0, %s48
    %s49 = sphi 0, %s46
    %s50 = sphi 0, %s49
    %s66 = sphi 0, %s50
    %s72 = sphi 0, %s74
    %s75 = sphi 0, %s72
    %s76 = sphi 0, %s75
    %s92 = sphi 0, %s76
    %s98 = sphi 0, %s100
    %s101 = sphi 0, %s98
    %s102 = sphi 0, %s101
    %s118 = sphi 0, %s102
    %s124 = sphi 0, %s126
    %s127 = sphi 0, %s124
    %s128 = sphi 0, %s127
    %s144 = sphi 0, %s128
  $region4: #{teacher_forward.10} parent=0 // loop_header_branch
    %13 = sbr.rel (%p11) target = $region8
  $region5: #{teacher_forward.10} parent=0 // loop_body
    %s15 = ssub.s32 %s10, 1
    %s16 = ssub.s32 %s10, 2
    %s17 = sadd.s32 %s10, 1
    %s18 = ssub.s32 %s10, %s17
    %p19 = scmp.eq.s32.totalorder %s18, 0
    %s21 = sadd.s32 %s20, 1
    %s22 = scalar_select %p19, %s20, %s21
    %p25 = pneg %p19
    %p26 = scmp.eq.s32.totalorder %s10, 1
    %p27 = por %p25, %p26
    %p28 = scmp.ne.s32.totalorder %s20, %s23
    %p29 = scmp.eq.s32.totalorder %s10, 0
    %p30 = por %p28, %p29
    %p31 = scmp.ne.s32.totalorder %s20, %s23
    %p32 = scmp.eq.s32.totalorder %s15, 1
    %p33 = por %p31, %p32
    %p34 = scmp.ne.s32.totalorder %s23, %s24
    %p35 = scmp.eq.s32.totalorder %s15, 0
    %p36 = por %p34, %p35
    %p37 = scmp.ne.s32.totalorder %s23, %s24
    %p38 = scmp.eq.s32.totalorder %s16, 1
    %p39 = por %p37, %p38
    %p41 = scmp.ne.s32.totalorder %s24, %s40
    %p42 = scmp.eq.s32.totalorder %s16, 0
    %p43 = por %p41, %p42
    %s44 = ssub.s32 %s10, %s17
    %p45 = scmp.eq.s32.totalorder %s44, 0
    %s47 = sadd.s32 %s46, 1
    %s48 = scalar_select %p45, %s46, %s47
    %p51 = pneg %p45
    %p52 = scmp.eq.s32.totalorder %s10, 1
    %p53 = por %p51, %p52
    %p54 = scmp.ne.s32.totalorder %s46, %s49
    %p55 = scmp.eq.s32.totalorder %s10, 0
    %p56 = por %p54, %p55
    %p57 = scmp.ne.s32.totalorder %s46, %s49
    %p58 = scmp.eq.s32.totalorder %s15, 1
    %p59 = por %p57, %p58
    %p60 = scmp.ne.s32.totalorder %s49, %s50
    %p61 = scmp.eq.s32.totalorder %s15, 0
    %p62 = por %p60, %p61
    %p63 = scmp.ne.s32.totalorder %s49, %s50
    %p64 = scmp.eq.s32.totalorder %s16, 1
    %p65 = por %p63, %p64
    %p67 = scmp.ne.s32.totalorder %s50, %s66
    %p68 = scmp.eq.s32.totalorder %s16, 0
    %p69 = por %p67, %p68
    %s70 = ssub.s32 %s10, %s17
    %p71 = scmp.eq.s32.totalorder %s70, 0
    %s73 = sadd.s32 %s72, 1
    %s74 = scalar_select %p71, %s72, %s73
    %p77 = pneg %p71
    %p78 = scmp.eq.s32.totalorder %s10, 1
    %p79 = por %p77, %p78
    %p80 = scmp.ne.s32.totalorder %s72, %s75
    %p81 = scmp.eq.s32.totalorder %s10, 0
    %p82 = por %p80, %p81
    %p83 = scmp.ne.s32.totalorder %s72, %s75
    %p84 = scmp.eq.s32.totalorder %s15, 1
    %p85 = por %p83, %p84
    %p86 = scmp.ne.s32.totalorder %s75, %s76
    %p87 = scmp.eq.s32.totalorder %s15, 0
    %p88 = por %p86, %p87
    %p89 = scmp.ne.s32.totalorder %s75, %s76
    %p90 = scmp.eq.s32.totalorder %s16, 1
    %p91 = por %p89, %p90
    %p93 = scmp.ne.s32.totalorder %s76, %s92
    %p94 = scmp.eq.s32.totalorder %s16, 0
    %p95 = por %p93, %p94
    %s96 = ssub.s32 %s10, %s17
    %p97 = scmp.eq.s32.totalorder %s96, 0
    %s99 = sadd.s32 %s98, 1
    %s100 = scalar_select %p97, %s98, %s99
    %p103 = pneg %p97
    %p104 = scmp.eq.s32.totalorder %s10, 1
    %p105 = por %p103, %p104
    %p106 = scmp.ne.s32.totalorder %s98, %s101
    %p107 = scmp.eq.s32.totalorder %s10, 0
    %p108 = por %p106, %p107
    %p109 = scmp.ne.s32.totalorder %s98, %s101
    %p110 = scmp.eq.s32.totalorder %s15, 1
    %p111 = por %p109, %p110
    %p112 = scmp.ne.s32.totalorder %s101, %s102
    %p113 = scmp.eq.s32.totalorder %s15, 0
    %p114 = por %p112, %p113
    %p115 = scmp.ne.s32.totalorder %s101, %s102
    %p116 = scmp.eq.s32.totalorder %s16, 1
    %p117 = por %p115, %p116
    %p119 = scmp.ne.s32.totalorder %s102, %s118
    %p120 = scmp.eq.s32.totalorder %s16, 0
    %p121 = por %p119, %p120
    %s122 = ssub.s32 %s10, %s17
    %p123 = scmp.eq.s32.totalorder %s122, 0
    %s125 = sadd.s32 %s124, 1
    %s126 = scalar_select %p123, %s124, %s125
    %p129 = pneg %p123
    %p130 = scmp.eq.s32.totalorder %s10, 1
    %p131 = por %p129, %p130
    %p132 = scmp.ne.s32.totalorder %s124, %s127
    %p133 = scmp.eq.s32.totalorder %s10, 0
    %p134 = por %p132, %p133
    %p135 = scmp.ne.s32.totalorder %s124, %s127
    %p136 = scmp.eq.s32.totalorder %s15, 1
    %p137 = por %p135, %p136
    %p138 = scmp.ne.s32.totalorder %s127, %s128
    %p139 = scmp.eq.s32.totalorder %s15, 0
    %p140 = por %p138, %p139
    %p141 = scmp.ne.s32.totalorder %s127, %s128
    %p142 = scmp.eq.s32.totalorder %s16, 1
    %p143 = por %p141, %p142
    %p145 = scmp.ne.s32.totalorder %s128, %s144
    %p146 = scmp.eq.s32.totalorder %s16, 0
    %p147 = por %p145, %p146
    %p148 = scmp.le.s32.totalorder 1, %s10
    %p149 = scmp.lt.s32.totalorder %s10, 3
    %p150 = pnand %p148, %p149
    %p151 = pneg %p150
    // Predicated region
    $region9: #{teacher_forward.10} parent=5 // pred_check
      _
    $region10: #{teacher_forward.10} parent=5 // pred_check_branch
      %153 = sbr.rel (%p150) target = $region12
    $region11: #{teacher_forward.10} parent=5 // pred_region
      %s154 = ssub.s32 %s10, 1
    $region12: #{teacher_forward.10} parent=5 // pred_fallthru
      _
    %p155 = scmp.lt.s32.totalorder %s10, 2
    // Predicated region
    $region13: #{teacher_forward.10} parent=5 // pred_check
      %p156 = pneg %p155
    $region14: #{teacher_forward.10} parent=5 // pred_check_branch
      %158 = sbr.rel (%p156) target = $region16
    $region15: #{teacher_forward.10} parent=5 // pred_region
      // Predicated region
      $region17: #{teacher_forward.10} parent=15 // pred_check
        %p159 = pneg %p30
      $region18: #{teacher_forward.10} parent=15 // pred_check_branch
        %161 = sbr.rel (%p159) target = $region20
      $region19: #{teacher_forward.10} parent=15 // pred_region
        %p162 = scmp.lt.s32.totalorder %s10, 1
        %s163 = scalar_select %p162, %s10, 1
        %s164 = smul.addr %s163, 3
        %s165 = smul.addr %s164, 4
        %s166 = scalar_lea.vmem %s0, %s165
      $region20: #{teacher_forward.10} parent=15 // pred_fallthru
        _
      // Predicated region
      $region21: #{teacher_forward.10} parent=15 // pred_check
        %p167 = pneg %p56
      $region22: #{teacher_forward.10} parent=15 // pred_check_branch
        %169 = sbr.rel (%p167) target = $region24
      $region23: #{teacher_forward.10} parent=15 // pred_region
        %p170 = scmp.lt.s32.totalorder %s10, 1
        %s171 = scalar_select %p170, %s10, 1
        %s172 = smul.addr %s171, 3
        %s173 = smul.addr %s172, 4
        %s174 = scalar_lea.vmem %s1, %s173
      $region24: #{teacher_forward.10} parent=15 // pred_fallthru
        _
      // Predicated region
      $region25: #{teacher_forward.10} parent=15 // pred_check
        %p175 = pneg %p82
      $region26: #{teacher_forward.10} parent=15 // pred_check_branch
        %177 = sbr.rel (%p175) target = $region28
      $region27: #{teacher_forward.10} parent=15 // pred_region
        %p178 = scmp.lt.s32.totalorder %s10, 1
        %s179 = scalar_select %p178, %s10, 1
        %s180 = smul.addr %s179, 3
        %s181 = smul.addr %s180, 4
        %s182 = scalar_lea.vmem %s2, %s181
      $region28: #{teacher_forward.10} parent=15 // pred_fallthru
        _
      // Predicated region
      $region29: #{teacher_forward.10} parent=15 // pred_check
        %p183 = pneg %p108
      $region30: #{teacher_forward.10} parent=15 // pred_check_branch
        %185 = sbr.rel (%p183) target = $region32
      $region31: #{teacher_forward.10} parent=15 // pred_region
        %p186 = scmp.lt.s32.totalorder %s10, 1
        %s187 = scalar_select %p186, %s10, 1
        %s188 = smul.addr %s187, 3
        %s189 = smul.addr %s188, 4
        %s190 = scalar_lea.vmem %s3, %s189
      $region32: #{teacher_forward.10} parent=15 // pred_fallthru
        _
    $region16: #{teacher_forward.10} parent=5 // pred_fallthru
      _
    %p191 = scmp.le.s32.totalorder 1, %s10
    %p192 = scmp.lt.s32.totalorder %s10, 3
    %p193 = pnand %p191, %p192
    %p194 = pneg %p193
    // Predicated region
    $region33: #{teacher_forward.10} parent=5 // pred_check
      _
    $region34: #{teacher_forward.10} parent=5 // pred_check_branch
      %196 = sbr.rel (%p193) target = $region36
    $region35: #{teacher_forward.10} parent=5 // pred_region
      %s197 = ssub.s32 %s10, 1
      %p198 = scmp.lt.s32.totalorder %s15, 1
      %s199 = scalar_select %p198, %s15, 1
      %s200 = smul.addr %s199, 3
      %s201 = smul.addr %s200, 4
      %s202 = scalar_lea.vmem %s0, %s201
      %p203 = pneg %p36
      %p204 = pneg %p33
      %p205 = scmp.lt.s32.totalorder %s15, 1
      %s206 = scalar_select %p205, %s15, 1
      %s207 = smul.addr %s206, 3
      %s208 = smul.addr %s207, 4
      %s209 = scalar_lea.vmem %s1, %s208
      %p210 = pneg %p62
      %p211 = pneg %p59
      %p212 = scmp.lt.s32.totalorder %s15, 1
      %s213 = scalar_select %p212, %s15, 1
      %s214 = smul.addr %s213, 3
      %s215 = smul.addr %s214, 4
      %s216 = scalar_lea.vmem %s2, %s215
      %p217 = pneg %p88
      %p218 = pneg %p85
      %p219 = scmp.lt.s32.totalorder %s15, 1
      %s220 = scalar_select %p219, %s15, 1
      %s221 = smul.addr %s220, 3
      %s222 = smul.addr %s221, 4
      %s223 = scalar_lea.vmem %s3, %s222
      %p224 = pneg %p114
      %p225 = pneg %p111
      %p226 = pneg %p140
      %p227 = pneg %p137
      %p228 = scmp.lt.s32.totalorder %s15, 1
      %s229 = scalar_select %p228, %s15, 1
      %s230 = smul.addr %s229, 3
      %s231 = smul.addr %s230, 4
      %s232 = scalar_lea.vmem %s4, %s231
      %p233 = scmp.lt.s32.totalorder %s15, 1
      %s234 = scalar_select %p233, %s15, 1
      %s235 = smul.addr %s234, 3
      %s236 = smul.addr %s235, 4
      %s237 = scalar_lea.vmem %s0, %s236
      %p238 = scmp.lt.s32.totalorder %s15, 1
      %s239 = scalar_select %p238, %s15, 1
      %s240 = smul.addr %s239, 3
      %s241 = smul.addr %s240, 4
      %s242 = scalar_lea.vmem %s1, %s241
      %p243 = scmp.lt.s32.totalorder %s15, 1
      %s244 = scalar_select %p243, %s15, 1
      %s245 = smul.addr %s244, 3
      %s246 = smul.addr %s245, 4
      %s247 = scalar_lea.vmem %s2, %s246
      %p248 = scmp.lt.s32.totalorder %s15, 1
      %s249 = scalar_select %p248, %s15, 1
      %s250 = smul.addr %s249, 3
      %s251 = smul.addr %s250, 4
      %s252 = scalar_lea.vmem %s3, %s251
      %p253 = scmp.lt.s32.totalorder %s15, 1
      %s254 = scalar_select %p253, %s15, 1
      %s255 = smul.addr %s254, 3
      %s256 = smul.addr %s255, 4
      %s257 = scalar_lea.vmem %s4, %s256
      %v258 = vld [vmem:[%s237] sm:$0x77]
      %v259 = vld [vmem:[%s237 + $0x8] sm:$0x7]
      %v260 = vld [vmem:[%s242] sm:$0x77]
      %v261 = vld [vmem:[%s242 + $0x8] sm:$0x7]
      %v262 = vmax.bf16 %v258, %v260
      %v263 = vmax.bf16 %v259, %v261
      %v264 = vld [vmem:[%s247] sm:$0x77]
      %v265 = vld [vmem:[%s247 + $0x8] sm:$0x7]
      %v266 = vld [vmem:[%s252] sm:$0x77]
      %v267 = vld [vmem:[%s252 + $0x8] sm:$0x7]
      %v268 = vmax.bf16 %v264, %v266
      %v269 = vmax.bf16 %v265, %v267
      %v270 = vmax.bf16 %v262, %v268
      %v271 = vmax.bf16 %v263, %v269
      %vm272 = vcmask 1042432
      %vm273 = vsmask.f32 2304
      %vm274 = vmand %vm272, %vm273
      %vm275 = vcmask 1046532
      %vm276 = vsmask.f32 6400
      %vm277 = vmand %vm275, %vm276
      %vm278 = vmor %vm277, %vm274
      %v279 = vld [vmem:[%s257] sm:$0x77]
      %v280 = vsel %vm278, %v270, %v279
      %281 = vst [vmem:[%s257] sm:$0x77] %v280
      %vm282 = vcmask 518144
      %vm283 = vmand %vm282, %vm273
      %v284 = vld [vmem:[%s257 + $0x8] sm:$0x7]
      %v285 = vsel %vm283, %v271, %v284
      %286 = vst [vmem:[%s257 + $0x8] sm:$0x7] %v285
      %p287 = scmp.lt.s32.totalorder %s15, 1
      %s288 = scalar_select %p287, %s15, 1
      %s289 = smul.addr %s288, 3
      %s290 = smul.addr %s289, 4
      %s291 = scalar_lea.vmem %s4, %s290
      // Predicated region
      $region37: #{teacher_forward.10} parent=35 // pred_check
        %p292 = pneg %p137
      $region38: #{teacher_forward.10} parent=35 // pred_check_branch
        %294 = sbr.rel (%p292) target = $region40
      $region39: #{teacher_forward.10} parent=35 // pred_region
        _
      $region40: #{teacher_forward.10} parent=35 // pred_fallthru
        _
    $region36: #{teacher_forward.10} parent=5 // pred_fallthru
      _
    %p295 = scmp.le.s32.totalorder 2, %s10
    // Predicated region
    $region41: #{teacher_forward.10} parent=5 // pred_check
      %p296 = pneg %p295
    $region42: #{teacher_forward.10} parent=5 // pred_check_branch
      %298 = sbr.rel (%p296) target = $region44
    $region43: #{teacher_forward.10} parent=5 // pred_region
      %s299 = ssub.s32 %s10, 2
      // Predicated region
      $region45: #{teacher_forward.10} parent=43 // pred_check
        %p300 = pneg %p143
      $region46: #{teacher_forward.10} parent=43 // pred_check_branch
        %302 = sbr.rel (%p300) target = $region48
      $region47: #{teacher_forward.10} parent=43 // pred_region
        %p303 = scmp.lt.s32.totalorder %s16, 1
        %s304 = scalar_select %p303, %s16, 1
        %s305 = smul.addr %s304, 3
        %s306 = smul.addr %s305, 4
        %s307 = scalar_lea.vmem %s4, %s306
      $region48: #{teacher_forward.10} parent=43 // pred_fallthru
        _
    $region44: #{teacher_forward.10} parent=5 // pred_fallthru
      _
  $region6: #{teacher_forward.10} parent=0 // loop_footer
    %s14 = sadd.s32 1, %s10
  $region7: #{teacher_forward.10} parent=0 // loop_footer_branch
    %9 = sbr.rel target = $region3
  $region8: #{teacher_forward.10} parent=0 // loop_exit
    _

// kernel: teacher_forward.9
$region0: #{teacher_forward.9}
  #allocation0 [shape = 'u32[]', space=smem, size = 0x4, offset = 0x4, fixed_abs, tag = 'smem constant byte address 0x4 - core index']
  #allocation1 [shape = 'u32[144,128]{1,0:T(1,128)}', space=vmem, size = 0x12000, scoped, tag = 'internal scratch']
  %s0 = inlined_call_operand.vmem [shape: bf16[242,288], index: 0, kind: input, shape index: {}]
  %s1 = inlined_call_operand.vmem [shape: bf16[288,128], index: 1, kind: input, shape index: {}]
  %s2 = inlined_call_operand.vmem [shape: f32[1,128], index: 2, kind: input, shape index: {}]
  %s3 = inlined_call_operand.vmem [shape: bf16[242,128], index: 3, kind: output, shape index: {}]
  %s4 = sld [smem:[#allocation0]]
  $region22: #{teacher_forward.9} parent=0
    _
  %s6 = ssub.s32 1, %s4
  %s7 = scalar_select 0, %s6, %s4
  // Predicated region
  $region2: #{teacher_forward.9} parent=0 // pred_check
    _
  $region3: #{teacher_forward.9} parent=0 // pred_check_branch
    %9 = sbr.rel (0) target = $region5
  $region4: #{teacher_forward.9} parent=0 // pred_region
    _
  $region5: #{teacher_forward.9} parent=0 // pred_fallthru
    _
  // Predicated region
  $region6: #{teacher_forward.9} parent=0 // pred_check
    _
  $region7: #{teacher_forward.9} parent=0 // pred_check_branch
    %11 = sbr.rel (0) target = $region9
  $region8: #{teacher_forward.9} parent=0 // pred_region
    _
  $region9: #{teacher_forward.9} parent=0 // pred_fallthru
    _
  // Predicated region
  $region10: #{teacher_forward.9} parent=0 // pred_check
    _
  $region11: #{teacher_forward.9} parent=0 // pred_check_branch
    %13 = sbr.rel (0) target = $region13
  $region12: #{teacher_forward.9} parent=0 // pred_region
    _
  $region13: #{teacher_forward.9} parent=0 // pred_fallthru
    _
  %v15 = vld [vmem:[%s0] sm:$0xff]
  %v16 = vld [vmem:[%s0 + $0x8] sm:$0xf]
  %v17 = vld [vmem:[%s0 + $0xc] sm:$0xff]
  %v18 = vld [vmem:[%s0 + $0x14] sm:$0xf]
  %v19 = vld [vmem:[%s0 + $0x18] sm:$0xff]
  %v20 = vld [vmem:[%s0 + $0x20] sm:$0xf]
  %v21 = vld [vmem:[%s0 + $0x24] sm:$0xff]
  %v22 = vld [vmem:[%s0 + $0x2c] sm:$0xf]
  %v23 = vld [vmem:[%s0 + $0x30] sm:$0xff]
  %v24 = vld [vmem:[%s0 + $0x38] sm:$0xf]
  %v25 = vld [vmem:[%s0 + $0x3c] sm:$0xff]
  %v26 = vld [vmem:[%s0 + $0x44] sm:$0xf]
  %v27 = vld [vmem:[%s0 + $0x48] sm:$0xff]
  %v28 = vld [vmem:[%s0 + $0x50] sm:$0xf]
  %v29 = vld [vmem:[%s0 + $0x54] sm:$0xff]
  %v30 = vld [vmem:[%s0 + $0x5c] sm:$0xf]
  %v31 = vld [vmem:[%s0 + $0x60] sm:$0xff]
  %v32 = vld [vmem:[%s0 + $0x68] sm:$0xf]
  %v33 = vld [vmem:[%s0 + $0x6c] sm:$0xff]
  %v34 = vld [vmem:[%s0 + $0x74] sm:$0xf]
  %v35 = vld [vmem:[%s0 + $0x78] sm:$0xff]
  %v36 = vld [vmem:[%s0 + $0x80] sm:$0xf]
  %v37 = vld [vmem:[%s0 + $0x84] sm:$0xff]
  %v38 = vld [vmem:[%s0 + $0x8c] sm:$0xf]
  %v39 = vld [vmem:[%s0 + $0x90] sm:$0xff]
  %v40 = vld [vmem:[%s0 + $0x98] sm:$0xf]
  %v41 = vld [vmem:[%s0 + $0x9c] sm:$0xff]
  %v42 = vld [vmem:[%s0 + $0xa4] sm:$0xf]
  %v43 = vld [vmem:[%s0 + $0xa8] sm:$0xff]
  %v44 = vld [vmem:[%s0 + $0xb0] sm:$0xf]
  %v45 = vld [vmem:[%s0 + $0xb4] sm:$0xff]
  %v46 = vld [vmem:[%s0 + $0xbc] sm:$0xf]
  %v47 = vld [vmem:[%s0 + $0xc0] sm:$0xff]
  %v48 = vld [vmem:[%s0 + $0xc8] sm:$0xf]
  %v49 = vld [vmem:[%s0 + $0xcc] sm:$0xff]
  %v50 = vld [vmem:[%s0 + $0xd4] sm:$0xf]
  %v51 = vld [vmem:[%s0 + $0xd8] sm:$0xff]
  %v52 = vld [vmem:[%s0 + $0xe0] sm:$0xf]
  %v53 = vld [vmem:[%s0 + $0xe4] sm:$0xff]
  %v54 = vld [vmem:[%s0 + $0xec] sm:$0xf]
  %v55 = vld [vmem:[%s0 + $0xf0] sm:$0xff]
  %v56 = vld [vmem:[%s0 + $0xf8] sm:$0xf]
  %v57 = vld [vmem:[%s0 + $0xfc] sm:$0xff]
  %v58 = vld [vmem:[%s0 + $0x104] sm:$0xf]
  %v59 = vld [vmem:[%s0 + $0x108] sm:$0xff]
  %v60 = vld [vmem:[%s0 + $0x110] sm:$0xf]
  %v61 = vld [vmem:[%s0 + $0x114] sm:$0xff]
  %v62 = vld [vmem:[%s0 + $0x11c] sm:$0xf]
  %v63 = vld [vmem:[%s0 + $0x120] sm:$0xff]
  %v64 = vld [vmem:[%s0 + $0x128] sm:$0xf]
  %v65 = vld [vmem:[%s0 + $0x12c] sm:$0xff]
  %v66 = vld [vmem:[%s0 + $0x134] sm:$0xf]
  %v67 = vld [vmem:[%s0 + $0x138] sm:$0xff]
  %v68 = vld [vmem:[%s0 + $0x140] sm:$0xf]
  %v69 = vld [vmem:[%s0 + $0x144] sm:$0xff]
  %v70 = vld [vmem:[%s0 + $0x14c] sm:$0xf]
  %v71 = vld [vmem:[%s0 + $0x150] sm:$0xff]
  %v72 = vld [vmem:[%s0 + $0x158] sm:$0xf]
  %v73 = vld [vmem:[%s0 + $0x15c] sm:$0xff]
  %v74 = vld [vmem:[%s0 + $0x164] sm:$0xf]
  %v75 = vld [vmem:[%s0 + $0x168] sm:$0x11]
  %v76 = vld [vmem:[%s0 + $0x170] sm:$0x1]
  %v77 = vld [vmem:[%s1] sm:$0xf]
  %v78 = vld [vmem:[%s1 + $0x4] sm:$0xf]
  %v79 = vld [vmem:[%s1 + $0x8] sm:$0xf]
  %v80 = vld [vmem:[%s1 + $0xc] sm:$0xf]
  %v81 = vld [vmem:[%s1 + $0x10] sm:$0xf]
  %v82 = vld [vmem:[%s1 + $0x14] sm:$0xf]
  %v83 = vld [vmem:[%s1 + $0x18] sm:$0xf]
  %v84 = vld [vmem:[%s1 + $0x1c] sm:$0xf]
  %v85 = vld [vmem:[%s1 + $0x20] sm:$0xf]
  %v86 = vld [vmem:[%s1 + $0x24] sm:$0xf]
  %v87 = vld [vmem:[%s1 + $0x28] sm:$0xf]
  %v88 = vld [vmem:[%s1 + $0x2c] sm:$0xf]
  %v89 = vld [vmem:[%s1 + $0x30] sm:$0xf]
  %v90 = vld [vmem:[%s1 + $0x34] sm:$0xf]
  %v91 = vld [vmem:[%s1 + $0x38] sm:$0xf]
  %v92 = vld [vmem:[%s1 + $0x3c] sm:$0xf]
  %v93 = vld [vmem:[%s1 + $0x40] sm:$0xf]
  %v94 = vld [vmem:[%s1 + $0x44] sm:$0xf]
  %v95 = vld [vmem:[%s1 + $0x48] sm:$0xf]
  %v96 = vld [vmem:[%s1 + $0x4c] sm:$0xf]
  %v97 = vld [vmem:[%s1 + $0x50] sm:$0xf]
  %v98 = vld [vmem:[%s1 + $0x54] sm:$0xf]
  %v99 = vld [vmem:[%s1 + $0x58] sm:$0xf]
  %v100 = vld [vmem:[%s1 + $0x5c] sm:$0xf]
  %v101 = vld [vmem:[%s1 + $0x60] sm:$0xf]
  %v102 = vld [vmem:[%s1 + $0x64] sm:$0xf]
  %v103 = vld [vmem:[%s1 + $0x68] sm:$0xf]
  %v104 = vld [vmem:[%s1 + $0x6c] sm:$0xf]
  %v105 = vld [vmem:[%s1 + $0x70] sm:$0xf]
  %v106 = vld [vmem:[%s1 + $0x74] sm:$0xf]
  %v107 = vld [vmem:[%s1 + $0x78] sm:$0xf]
  %v108 = vld [vmem:[%s1 + $0x7c] sm:$0xf]
  %v109 = vld [vmem:[%s1 + $0x80] sm:$0xf]
  %v110 = vld [vmem:[%s1 + $0x84] sm:$0xf]
  %v111 = vld [vmem:[%s1 + $0x88] sm:$0xf]
  %v112 = vld [vmem:[%s1 + $0x8c] sm:$0xf]
  %v113 = vld [vmem:[%s2] sm:$0x1]
  %v115 = vlaneseq
  %v116 = vshrl.u32 %v115, 7
  %v117 = vsub.s32 0, %v116
  %v118 = vrot.slane %v113, %v117
  %v182 = vunpack.c.l.b16 %v15
  %v183 = vunpack.c.h.b16 %v15
  %v184 = vunpack.c.l.b16 %v16
  %v185 = vunpack.c.l.b16 %v17
  %v186 = vunpack.c.h.b16 %v17
  %v187 = vunpack.c.l.b16 %v18
  %v188 = vunpack.c.l.b16 %v19
  %v189 = vunpack.c.h.b16 %v19
  %v190 = vunpack.c.l.b16 %v20
  %v191 = vunpack.c.l.b16 %v21
  %v192 = vunpack.c.h.b16 %v21
  %v193 = vunpack.c.l.b16 %v22
  %v194 = vunpack.c.l.b16 %v23
  %v195 = vunpack.c.h.b16 %v23
  %v196 = vunpack.c.l.b16 %v24
  %v197 = vunpack.c.l.b16 %v25
  %v198 = vunpack.c.h.b16 %v25
  %v199 = vunpack.c.l.b16 %v26
  %v200 = vunpack.c.l.b16 %v27
  %v201 = vunpack.c.h.b16 %v27
  %v202 = vunpack.c.l.b16 %v28
  %v203 = vunpack.c.l.b16 %v29
  %v204 = vunpack.c.h.b16 %v29
  %v205 = vunpack.c.l.b16 %v30
  %v206 = vunpack.c.l.b16 %v31
  %v207 = vunpack.c.h.b16 %v31
  %v208 = vunpack.c.l.b16 %v32
  %v209 = vunpack.c.l.b16 %v33
  %v210 = vunpack.c.h.b16 %v33
  %v211 = vunpack.c.l.b16 %v34
  %v212 = vunpack.c.l.b16 %v35
  %v213 = vunpack.c.h.b16 %v35
  %v214 = vunpack.c.l.b16 %v36
  %v215 = vunpack.c.l.b16 %v37
  %v216 = vunpack.c.h.b16 %v37
  %v217 = vunpack.c.l.b16 %v38
  %v218 = vunpack.c.l.b16 %v39
  %v219 = vunpack.c.h.b16 %v39
  %v220 = vunpack.c.l.b16 %v40
  %v221 = vunpack.c.l.b16 %v41
  %v222 = vunpack.c.h.b16 %v41
  %v223 = vunpack.c.l.b16 %v42
  %v224 = vunpack.c.l.b16 %v43
  %v225 = vunpack.c.h.b16 %v43
  %v226 = vunpack.c.l.b16 %v44
  %v227 = vunpack.c.l.b16 %v45
  %v228 = vunpack.c.h.b16 %v45
  %v229 = vunpack.c.l.b16 %v46
  %v230 = vunpack.c.l.b16 %v47
  %v231 = vunpack.c.h.b16 %v47
  %v232 = vunpack.c.l.b16 %v48
  %v233 = vunpack.c.l.b16 %v49
  %v234 = vunpack.c.h.b16 %v49
  %v235 = vunpack.c.l.b16 %v50
  %v236 = vunpack.c.l.b16 %v51
  %v237 = vunpack.c.h.b16 %v51
  %v238 = vunpack.c.l.b16 %v52
  %v239 = vunpack.c.l.b16 %v53
  %v240 = vunpack.c.h.b16 %v53
  %v241 = vunpack.c.l.b16 %v54
  %v242 = vunpack.c.l.b16 %v55
  %v243 = vunpack.c.h.b16 %v55
  %v244 = vunpack.c.l.b16 %v56
  %v245 = vunpack.c.l.b16 %v57
  %v246 = vunpack.c.h.b16 %v57
  %v247 = vunpack.c.l.b16 %v58
  %v248 = vunpack.c.l.b16 %v59
  %v249 = vunpack.c.h.b16 %v59
  %v250 = vunpack.c.l.b16 %v60
  %v251 = vunpack.c.l.b16 %v61
  %v252 = vunpack.c.h.b16 %v61
  %v253 = vunpack.c.l.b16 %v62
  %v254 = vunpack.c.l.b16 %v63
  %v255 = vunpack.c.h.b16 %v63
  %v256 = vunpack.c.l.b16 %v64
  %v257 = vunpack.c.l.b16 %v65
  %v258 = vunpack.c.h.b16 %v65
  %v259 = vunpack.c.l.b16 %v66
  %v260 = vunpack.c.l.b16 %v67
  %v261 = vunpack.c.h.b16 %v67
  %v262 = vunpack.c.l.b16 %v68
  %v263 = vunpack.c.l.b16 %v69
  %v264 = vunpack.c.h.b16 %v69
  %v265 = vunpack.c.l.b16 %v70
  %v266 = vunpack.c.l.b16 %v71
  %v267 = vunpack.c.h.b16 %v71
  %v268 = vunpack.c.l.b16 %v72
  %v269 = vunpack.c.l.b16 %v73
  %v270 = vunpack.c.h.b16 %v73
  %v271 = vunpack.c.l.b16 %v74
  %v272 = vunpack.c.l.b16 %v75
  %v273 = vunpack.c.h.b16 %v75
  %v274 = vunpack.c.l.b16 %v76
  %v275 = vpack.c.b16 %v185, %v182
  %v276 = vpack.c.b16 %v186, %v183
  %v277 = vpack.c.b16 %v187, %v184
  %v278 = vpack.c.b16 %v191, %v188
  %v279 = vpack.c.b16 %v192, %v189
  %v280 = vpack.c.b16 %v193, %v190
  %v281 = vpack.c.b16 %v197, %v194
  %v282 = vpack.c.b16 %v198, %v195
  %v283 = vpack.c.b16 %v199, %v196
  %v284 = vpack.c.b16 %v203, %v200
  %v285 = vpack.c.b16 %v204, %v201
  %v286 = vpack.c.b16 %v205, %v202
  %v287 = vpack.c.b16 %v209, %v206
  %v288 = vpack.c.b16 %v210, %v207
  %v289 = vpack.c.b16 %v211, %v208
  %v290 = vpack.c.b16 %v215, %v212
  %v291 = vpack.c.b16 %v216, %v213
  %v292 = vpack.c.b16 %v217, %v214
  %v293 = vpack.c.b16 %v221, %v218
  %v294 = vpack.c.b16 %v222, %v219
  %v295 = vpack.c.b16 %v223, %v220
  %v296 = vpack.c.b16 %v227, %v224
  %v297 = vpack.c.b16 %v228, %v225
  %v298 = vpack.c.b16 %v229, %v226
  %v299 = vpack.c.b16 %v233, %v230
  %v300 = vpack.c.b16 %v234, %v231
  %v301 = vpack.c.b16 %v235, %v232
  %v302 = vpack.c.b16 %v239, %v236
  %v303 = vpack.c.b16 %v240, %v237
  %v304 = vpack.c.b16 %v241, %v238
  %v305 = vpack.c.b16 %v245, %v242
  %v306 = vpack.c.b16 %v246, %v243
  %v307 = vpack.c.b16 %v247, %v244
  %v308 = vpack.c.b16 %v251, %v248
  %v309 = vpack.c.b16 %v252, %v249
  %v310 = vpack.c.b16 %v253, %v250
  %v311 = vpack.c.b16 %v257, %v254
  %v312 = vpack.c.b16 %v258, %v255
  %v313 = vpack.c.b16 %v259, %v256
  %v314 = vpack.c.b16 %v263, %v260
  %v315 = vpack.c.b16 %v264, %v261
  %v316 = vpack.c.b16 %v265, %v262
  %v317 = vpack.c.b16 %v269, %v266
  %v318 = vpack.c.b16 %v270, %v267
  %v319 = vpack.c.b16 %v271, %v268
  %v320 = vpack.c.b16 %v272, %v272
  %v321 = vpack.c.b16 %v273, %v273
  %v322 = vpack.c.b16 %v274, %v274
  %v391 = vunpack.c.l.b16 %v77
  %v392 = vunpack.c.l.b16 %v78
  %v393 = vunpack.c.l.b16 %v79
  %v394 = vunpack.c.l.b16 %v80
  %v395 = vunpack.c.l.b16 %v81
  %v396 = vunpack.c.l.b16 %v82
  %v397 = vunpack.c.l.b16 %v83
  %v398 = vunpack.c.l.b16 %v84
  %v399 = vunpack.c.l.b16 %v85
  %v400 = vunpack.c.l.b16 %v86
  %v401 = vunpack.c.l.b16 %v87
  %v402 = vunpack.c.l.b16 %v88
  %v403 = vunpack.c.l.b16 %v89
  %v404 = vunpack.c.l.b16 %v90
  %v405 = vunpack.c.l.b16 %v91
  %v406 = vunpack.c.l.b16 %v92
  %v407 = vunpack.c.l.b16 %v93
  %v408 = vunpack.c.l.b16 %v94
  %v409 = vunpack.c.l.b16 %v95
  %v410 = vunpack.c.l.b16 %v96
  %v411 = vunpack.c.l.b16 %v97
  %v412 = vunpack.c.l.b16 %v98
  %v413 = vunpack.c.l.b16 %v99
  %v414 = vunpack.c.l.b16 %v100
  %v415 = vunpack.c.l.b16 %v101
  %v416 = vunpack.c.l.b16 %v102
  %v417 = vunpack.c.l.b16 %v103
  %v418 = vunpack.c.l.b16 %v104
  %v419 = vunpack.c.l.b16 %v105
  %v420 = vunpack.c.l.b16 %v106
  %v421 = vunpack.c.l.b16 %v107
  %v422 = vunpack.c.l.b16 %v108
  %v423 = vunpack.c.l.b16 %v109
  %v424 = vunpack.c.l.b16 %v110
  %v425 = vunpack.c.l.b16 %v111
  %v426 = vunpack.c.l.b16 %v112
  %v427 = vpack.c.b16 %v392, %v391
  %v428 = vpack.c.b16 %v394, %v393
  %v429 = vpack.c.b16 %v396, %v395
  %v430 = vpack.c.b16 %v398, %v397
  %v431 = vpack.c.b16 %v400, %v399
  %v432 = vpack.c.b16 %v402, %v401
  %v433 = vpack.c.b16 %v404, %v403
  %v434 = vpack.c.b16 %v406, %v405
  %v435 = vpack.c.b16 %v408, %v407
  %v436 = vpack.c.b16 %v410, %v409
  %v437 = vpack.c.b16 %v412, %v411
  %v438 = vpack.c.b16 %v414, %v413
  %v439 = vpack.c.b16 %v416, %v415
  %v440 = vpack.c.b16 %v418, %v417
  %v441 = vpack.c.b16 %v420, %v419
  %v442 = vpack.c.b16 %v422, %v421
  %v443 = vpack.c.b16 %v424, %v423
  %v444 = vpack.c.b16 %v426, %v425
  %vm463 = vcmask 261120
  %v465 = vsel %vm463, %v277, 0
  %v468 = vsel %vm463, %v280, 0
  %v471 = vsel %vm463, %v283, 0
  %v474 = vsel %vm463, %v286, 0
  %v477 = vsel %vm463, %v289, 0
  %v480 = vsel %vm463, %v292, 0
  %v483 = vsel %vm463, %v295, 0
  %v486 = vsel %vm463, %v298, 0
  %v489 = vsel %vm463, %v301, 0
  %v492 = vsel %vm463, %v304, 0
  %v495 = vsel %vm463, %v307, 0
  %v498 = vsel %vm463, %v310, 0
  %v501 = vsel %vm463, %v313, 0
  %v504 = vsel %vm463, %v316, 0
  %v507 = vsel %vm463, %v319, 0
  %v510 = vsel %vm463, %v322, 0
  %512 = vmatprep.subr.bf16.mxu0 0
  %513 = vmatpush1.bf16.msra.mxu0 %v427
  %514 = vmatprep.subr.bf16.mxu0 0
  %515 = vmatpush1.bf16.msra.mxu0 %v428
  %516 = vmatprep.subr.bf16.mxu0 0
  %517 = vmatpush1.bf16.msra.mxu0 %v429
  %518 = vmatprep.subr.bf16.mxu0 0
  %519 = vmatpush1.bf16.msra.mxu0 %v430
  %520 = vmatprep.subr.bf16.mxu0 0
  %521 = vmatpush1.bf16.msra.mxu0 %v431
  %522 = vmatprep.subr.bf16.mxu0 0
  %523 = vmatpush1.bf16.msra.mxu0 %v432
  %524 = vmatprep.subr.bf16.mxu0 0
  %525 = vmatpush1.bf16.msra.mxu0 %v433
  %526 = vmatprep.subr.bf16.mxu0 0
  %527 = vmatpush1.bf16.msra.mxu0 %v434
  %528 = vmatprep.subr.bf16.mxu0 0
  %529 = vmatpush1.bf16.msra.mxu0 %v435
  %530 = vmatprep.subr.bf16.mxu0 0
  %531 = vmatpush1.bf16.msra.mxu0 %v436
  %532 = vmatprep.subr.bf16.mxu0 0
  %533 = vmatpush1.bf16.msra.mxu0 %v437
  %534 = vmatprep.subr.bf16.mxu0 0
  %535 = vmatpush1.bf16.msra.mxu0 %v438
  %536 = vmatprep.subr.bf16.mxu0 0
  %537 = vmatpush1.bf16.msra.mxu0 %v439
  %538 = vmatprep.subr.bf16.mxu0 0
  %539 = vmatpush1.bf16.msra.mxu0 %v440
  %540 = vmatprep.subr.bf16.mxu0 0
  %541 = vmatpush1.bf16.msra.mxu0 %v441
  %542 = vmatprep.subr.bf16.mxu0 0
  %543 = vmatpush1.bf16.msra.mxu0 %v442
  %544 = vmatprep.mubr.bf16.mxu0 %v276
  %545 = vmatmul.mubr.bf16.gmra.mrb[0].mxu0 %v275
  %v546 = vpop.f32.mrb[0].mxu0
  %v547 = vadd.f32 %v118, %v546
  %v548 = vpop.f32.mrb[0].mxu0
  %v549 = vpop.f32.mrb[0].mxu0
  %v550 = vadd.f32 %v118, %v549
  %v551 = vpop.f32.mrb[0].mxu0
  %552 = vmatprep.mubr.bf16.mxu0 %v279
  %553 = vmatmul.mubr.bf16.gmra.mrb[0].mxu0 %v278
  %v554 = vpop.f32.mrb[0].mxu0
  %v555 = vadd.f32 %v118, %v554
  %v556 = vpop.f32.mrb[0].mxu0
  %v557 = vpop.f32.mrb[0].mxu0
  %v558 = vadd.f32 %v118, %v557
  %v559 = vpop.f32.mrb[0].mxu0
  %560 = vmatprep.mubr.bf16.mxu0 %v282
  %561 = vmatmul.mubr.bf16.gmra.mrb[0].mxu0 %v281
  %v562 = vpop.f32.mrb[0].mxu0
  %v563 = vadd.f32 %v118, %v562
  %v564 = vpop.f32.mrb[0].mxu0
  %v565 = vpop.f32.mrb[0].mxu0
  %v566 = vadd.f32 %v118, %v565
  %v567 = vpop.f32.mrb[0].mxu0
  %568 = vmatprep.mubr.bf16.mxu0 %v285
  %569 = vmatmul.mubr.bf16.gmra.mrb[0].mxu0 %v284
  %v570 = vpop.f32.mrb[0].mxu0
  %v571 = vadd.f32 %v118, %v570
  %v572 = vpop.f32.mrb[0].mxu0
  %v573 = vpop.f32.mrb[0].mxu0
  %v574 = vadd.f32 %v118, %v573
  %v575 = vpop.f32.mrb[0].mxu0
  %576 = vmatprep.mubr.bf16.mxu0 %v288
  %577 = vmatmul.mubr.bf16.gmra.mrb[0].mxu0 %v287
  %v578 = vpop.f32.mrb[0].mxu0
  %v579 = vadd.f32 %v118, %v578
  %v580 = vpop.f32.mrb[0].mxu0
  %v581 = vpop.f32.mrb[0].mxu0
  %v582 = vadd.f32 %v118, %v581
  %v583 = vpop.f32.mrb[0].mxu0
  %584 = vmatprep.mubr.bf16.mxu0 %v291
  %585 = vmatmul.mubr.bf16.gmra.mrb[0].mxu0 %v290
  %v586 = vpop.f32.mrb[0].mxu0
  %v587 = vadd.f32 %v118, %v586
  %v588 = vpop.f32.mrb[0].mxu0
  %v589 = vpop.f32.mrb[0].mxu0
  %v590 = vadd.f32 %v118, %v589
  %v591 = vpop.f32.mrb[0].mxu0
  %592 = vmatprep.mubr.bf16.mxu0 %v294
  %593 = vmatmul.mubr.bf16.gmra.mrb[0].mxu0 %v293
  %v594 = vpop.f32.mrb[0].mxu0
  %v595 = vadd.f32 %v118, %v594
  %v596 = vpop.f32.mrb[0].mxu0
  %v597 = vpop.f32.mrb[0].mxu0
  %v598 = vadd.f32 %v118, %v597
  %v599 = vpop.f32.mrb[0].mxu0
  %600 = vmatprep.mubr.bf16.mxu0 %v297
  %601 = vmatmul.mubr.bf16.gmra.mrb[0].mxu0 %v296
  %v602 = vpop.f32.mrb[0].mxu0
  %v603 = vadd.f32 %v118, %v602
  %v604 = vpop.f32.mrb[0].mxu0
  %v605 = vpop.f32.mrb[0].mxu0
  %v606 = vadd.f32 %v118, %v605
  %v607 = vpop.f32.mrb[0].mxu0
  %608 = vmatprep.mubr.bf16.mxu0 %v300
  %609 = vmatmul.mubr.bf16.gmra.mrb[0].mxu0 %v299
  %v610 = vpop.f32.mrb[0].mxu0
  %v611 = vadd.f32 %v118, %v610
  %v612 = vpop.f32.mrb[0].mxu0
  %v613 = vpop.f32.mrb[0].mxu0
  %v614 = vadd.f32 %v118, %v613
  %v615 = vpop.f32.mrb[0].mxu0
  %616 = vmatprep.mubr.bf16.mxu0 %v303
  %617 = vmatmul.mubr.bf16.gmra.mrb[0].mxu0 %v302
  %v618 = vpop.f32.mrb[0].mxu0
  %v619 = vadd.f32 %v118, %v618
  %v620 = vpop.f32.mrb[0].mxu0
  %v621 = vpop.f32.mrb[0].mxu0
  %v622 = vadd.f32 %v118, %v621
  %v623 = vpop.f32.mrb[0].mxu0
  %624 = vmatprep.mubr.bf16.mxu0 %v306
  %625 = vmatmul.mubr.bf16.gmra.mrb[0].mxu0 %v305
  %v626 = vpop.f32.mrb[0].mxu0
  %v627 = vadd.f32 %v118, %v626
  %v628 = vpop.f32.mrb[0].mxu0
  %v629 = vpop.f32.mrb[0].mxu0
  %v630 = vadd.f32 %v118, %v629
  %v631 = vpop.f32.mrb[0].mxu0
  %632 = vmatprep.mubr.bf16.mxu0 %v309
  %633 = vmatmul.mubr.bf16.gmra.mrb[0].mxu0 %v308
  %v634 = vpop.f32.mrb[0].mxu0
  %v635 = vadd.f32 %v118, %v634
  %v636 = vpop.f32.mrb[0].mxu0
  %v637 = vpop.f32.mrb[0].mxu0
  %v638 = vadd.f32 %v118, %v637
  %v639 = vpop.f32.mrb[0].mxu0
  %640 = vmatprep.mubr.bf16.mxu0 %v312
  %641 = vmatmul.mubr.bf16.gmra.mrb[0].mxu0 %v311
  %v642 = vpop.f32.mrb[0].mxu0
  %v643 = vadd.f32 %v118, %v642
  %v644 = vpop.f32.mrb[0].mxu0
  %v645 = vpop.f32.mrb[0].mxu0
  %v646 = vadd.f32 %v118, %v645
  %v647 = vpop.f32.mrb[0].mxu0
  %648 = vmatprep.mubr.bf16.mxu0 %v315
  %649 = vmatmul.mubr.bf16.gmra.mrb[0].mxu0 %v314
  %v650 = vpop.f32.mrb[0].mxu0
  %v651 = vadd.f32 %v118, %v650
  %v652 = vpop.f32.mrb[0].mxu0
  %v653 = vpop.f32.mrb[0].mxu0
  %v654 = vadd.f32 %v118, %v653
  %v655 = vpop.f32.mrb[0].mxu0
  %656 = vmatprep.mubr.bf16.mxu0 %v318
  %657 = vmatmul.mubr.bf16.gmra.mrb[0].mxu0 %v317
  %v658 = vpop.f32.mrb[0].mxu0
  %v659 = vadd.f32 %v118, %v658
  %v660 = vpop.f32.mrb[0].mxu0
  %v661 = vpop.f32.mrb[0].mxu0
  %v662 = vadd.f32 %v118, %v661
  %v663 = vpop.f32.mrb[0].mxu0
  %664 = vmatprep.mubr.bf16.mxu0 %v321
  %665 = vmatmul.mubr.bf16.gmra.mrb[0].mxu0 %v320
  %v666 = vpop.f32.mrb[0].mxu0
  %v667 = vadd.f32 %v118, %v666
  %v668 = vpop.f32.mrb[0].mxu0
  %v669 = vpop.f32.mrb[0].mxu0
  %v670 = vpop.f32.mrb[0].mxu0
  %671 = vdwg.mxu0
  %672 = vmatprep.subr.bf16.mxu0 0
  %673 = vmatpush1.bf16.msra.mxu0 %v443
  %674 = vmatprep.subr.bf16.mxu0 0
  %675 = vmatpush1.bf16.msra.mxu0 %v444
  %676 = vmatprep.subr.bf16.mxu0 0
  %677 = vmatpush1.bf16.msra.mxu0 0
  %678 = vmatprep.subr.bf16.mxu0 0
  %679 = vmatpush1.bf16.msra.mxu0 0
  %680 = vmatprep.subr.bf16.mxu0 0
  %681 = vmatpush1.bf16.msra.mxu0 0
  %682 = vmatprep.subr.bf16.mxu0 0
  %683 = vmatpush1.bf16.msra.mxu0 0
  %684 = vmatprep.subr.bf16.mxu0 0
  %685 = vmatpush1.bf16.msra.mxu0 0
  %686 = vmatprep.subr.bf16.mxu0 0
  %687 = vmatpush1.bf16.msra.mxu0 0
  %688 = vmatprep.subr.bf16.mxu0 0
  %689 = vmatpush1.bf16.msra.mxu0 0
  %690 = vmatprep.subr.bf16.mxu0 0
  %691 = vmatpush1.bf16.msra.mxu0 0
  %692 = vmatprep.subr.bf16.mxu0 0
  %693 = vmatpush1.bf16.msra.mxu0 0
  %694 = vmatprep.subr.bf16.mxu0 0
  %695 = vmatpush1.bf16.msra.mxu0 0
  %696 = vmatprep.subr.bf16.mxu0 0
  %697 = vmatpush1.bf16.msra.mxu0 0
  %698 = vmatprep.subr.bf16.mxu0 0
  %699 = vmatpush1.bf16.msra.mxu0 0
  %700 = vmatprep.subr.bf16.mxu0 0
  %701 = vmatpush1.bf16.msra.mxu0 0
  %702 = vmatprep.subr.bf16.mxu0 0
  %703 = vmatpush1.bf16.msra.mxu0 0
  %704 = vmatprep.mubr.bf16.mxu0 0
  %705 = vmatmul.mubr.bf16.gmra.mrb[0].mxu0 %v465
  %v706 = vpop.f32.mrb[0].mxu0
  %v707 = vadd.f32 %v547, %v706
  %v708 = vpop.f32.mrb[0].mxu0
  %v709 = vpop.f32.mrb[0].mxu0
  %v710 = vadd.f32 %v550, %v709
  %v711 = vpop.f32.mrb[0].mxu0
  %712 = vmatprep.mubr.bf16.mxu0 0
  %713 = vmatmul.mubr.bf16.gmra.mrb[0].mxu0 %v468
  %v714 = vpop.f32.mrb[0].mxu0
  %v715 = vadd.f32 %v555, %v714
  %v716 = vpop.f32.mrb[0].mxu0
  %v717 = vpop.f32.mrb[0].mxu0
  %v718 = vadd.f32 %v558, %v717
  %v719 = vpop.f32.mrb[0].mxu0
  %720 = vmatprep.mubr.bf16.mxu0 0
  %721 = vmatmul.mubr.bf16.gmra.mrb[0].mxu0 %v471
  %v722 = vpop.f32.mrb[0].mxu0
  %v723 = vadd.f32 %v563, %v722
  %v724 = vpop.f32.mrb[0].mxu0
  %v725 = vpop.f32.mrb[0].mxu0
  %v726 = vadd.f32 %v566, %v725
  %v727 = vpop.f32.mrb[0].mxu0
  %728 = vmatprep.mubr.bf16.mxu0 0
  %729 = vmatmul.mubr.bf16.gmra.mrb[0].mxu0 %v474
  %v730 = vpop.f32.mrb[0].mxu0
  %v731 = vadd.f32 %v571, %v730
  %v732 = vpop.f32.mrb[0].mxu0
  %v733 = vpop.f32.mrb[0].mxu0
  %v734 = vadd.f32 %v574, %v733
  %v735 = vpop.f32.mrb[0].mxu0
  %736 = vmatprep.mubr.bf16.mxu0 0
  %737 = vmatmul.mubr.bf16.gmra.mrb[0].mxu0 %v477
  %v738 = vpop.f32.mrb[0].mxu0
  %v739 = vadd.f32 %v579, %v738
  %v740 = vpop.f32.mrb[0].mxu0
  %v741 = vpop.f32.mrb[0].mxu0
  %v742 = vadd.f32 %v582, %v741
  %v743 = vpop.f32.mrb[0].mxu0
  %744 = vmatprep.mubr.bf16.mxu0 0
  %745 = vmatmul.mubr.bf16.gmra.mrb[0].mxu0 %v480
  %v746 = vpop.f32.mrb[0].mxu0
  %v747 = vadd.f32 %v587, %v746
  %v748 = vpop.f32.mrb[0].mxu0
  %v749 = vpop.f32.mrb[0].mxu0
  %v750 = vadd.f32 %v590, %v749
  %v751 = vpop.f32.mrb[0].mxu0
  %752 = vmatprep.mubr.bf16.mxu0 0
  %753 = vmatmul.mubr.bf16.gmra.mrb[0].mxu0 %v483
  %v754 = vpop.f32.mrb[0].mxu0
  %v755 = vadd.f32 %v595, %v754
  %v756 = vpop.f32.mrb[0].mxu0
  %v757 = vpop.f32.mrb[0].mxu0
  %v758 = vadd.f32 %v598, %v757
  %v759 = vpop.f32.mrb[0].mxu0
  %760 = vmatprep.mubr.bf16.mxu0 0
  %761 = vmatmul.mubr.bf16.gmra.mrb[0].mxu0 %v486
  %v762 = vpop.f32.mrb[0].mxu0
  %v763 = vadd.f32 %v603, %v762
  %v764 = vpop.f32.mrb[0].mxu0
  %v765 = vpop.f32.mrb[0].mxu0
  %v766 = vadd.f32 %v606, %v765
  %v767 = vpop.f32.mrb[0].mxu0
  %768 = vmatprep.mubr.bf16.mxu0 0
  %769 = vmatmul.mubr.bf16.gmra.mrb[0].mxu0 %v489
  %v770 = vpop.f32.mrb[0].mxu0
  %v771 = vadd.f32 %v611, %v770
  %v772 = vpop.f32.mrb[0].mxu0
  %v773 = vpop.f32.mrb[0].mxu0
  %v774 = vadd.f32 %v614, %v773
  %v775 = vpop.f32.mrb[0].mxu0
  %776 = vmatprep.mubr.bf16.mxu0 0
  %777 = vmatmul.mubr.bf16.gmra.mrb[0].mxu0 %v492
  %v778 = vpop.f32.mrb[0].mxu0
  %v779 = vadd.f32 %v619, %v778
  %v780 = vpop.f32.mrb[0].mxu0
  %v781 = vpop.f32.mrb[0].mxu0
  %v782 = vadd.f32 %v622, %v781
  %v783 = vpop.f32.mrb[0].mxu0
  %784 = vmatprep.mubr.bf16.mxu0 0
  %785 = vmatmul.mubr.bf16.gmra.mrb[0].mxu0 %v495
  %v786 = vpop.f32.mrb[0].mxu0
  %v787 = vadd.f32 %v627, %v786
  %v788 = vpop.f32.mrb[0].mxu0
  %v789 = vpop.f32.mrb[0].mxu0
  %v790 = vadd.f32 %v630, %v789
  %v791 = vpop.f32.mrb[0].mxu0
  %792 = vmatprep.mubr.bf16.mxu0 0
  %793 = vmatmul.mubr.bf16.gmra.mrb[0].mxu0 %v498
  %v794 = vpop.f32.mrb[0].mxu0
  %v795 = vadd.f32 %v635, %v794
  %v796 = vpop.f32.mrb[0].mxu0
  %v797 = vpop.f32.mrb[0].mxu0
  %v798 = vadd.f32 %v638, %v797
  %v799 = vpop.f32.mrb[0].mxu0
  %800 = vmatprep.mubr.bf16.mxu0 0
  %801 = vmatmul.mubr.bf16.gmra.mrb[0].mxu0 %v501
  %v802 = vpop.f32.mrb[0].mxu0
  %v803 = vadd.f32 %v643, %v802
  %v804 = vpop.f32.mrb[0].mxu0
  %v805 = vpop.f32.mrb[0].mxu0
  %v806 = vadd.f32 %v646, %v805
  %v807 = vpop.f32.mrb[0].mxu0
  %808 = vmatprep.mubr.bf16.mxu0 0
  %809 = vmatmul.mubr.bf16.gmra.mrb[0].mxu0 %v504
  %v810 = vpop.f32.mrb[0].mxu0
  %v811 = vadd.f32 %v651, %v810
  %v812 = vpop.f32.mrb[0].mxu0
  %v813 = vpop.f32.mrb[0].mxu0
  %v814 = vadd.f32 %v654, %v813
  %v815 = vpop.f32.mrb[0].mxu0
  %816 = vmatprep.mubr.bf16.mxu0 0
  %817 = vmatmul.mubr.bf16.gmra.mrb[0].mxu0 %v507
  %v818 = vpop.f32.mrb[0].mxu0
  %v819 = vadd.f32 %v659, %v818
  %v820 = vpop.f32.mrb[0].mxu0
  %v821 = vpop.f32.mrb[0].mxu0
  %v822 = vadd.f32 %v662, %v821
  %v823 = vpop.f32.mrb[0].mxu0
  %824 = vmatprep.mubr.bf16.mxu0 0
  %825 = vmatmul.mubr.bf16.gmra.mrb[0].mxu0 %v510
  %v826 = vpop.f32.mrb[0].mxu0
  %v827 = vadd.f32 %v667, %v826
  %v828 = vpop.f32.mrb[0].mxu0
  %v829 = vpop.f32.mrb[0].mxu0
  %v830 = vpop.f32.mrb[0].mxu0
  %831 = vdwg.mxu0
  %v832 = vmax.f32 %v707, 0.0
  %v833 = vmax.f32 %v710, 0.0
  %v834 = vmax.f32 %v715, 0.0
  %v835 = vmax.f32 %v718, 0.0
  %v836 = vmax.f32 %v723, 0.0
  %v837 = vmax.f32 %v726, 0.0
  %v838 = vmax.f32 %v731, 0.0
  %v839 = vmax.f32 %v734, 0.0
  %v840 = vmax.f32 %v739, 0.0
  %v841 = vmax.f32 %v742, 0.0
  %v842 = vmax.f32 %v747, 0.0
  %v843 = vmax.f32 %v750, 0.0
  %v844 = vmax.f32 %v755, 0.0
  %v845 = vmax.f32 %v758, 0.0
  %v846 = vmax.f32 %v763, 0.0
  %v847 = vmax.f32 %v766, 0.0
  %v848 = vmax.f32 %v771, 0.0
  %v849 = vmax.f32 %v774, 0.0
  %v850 = vmax.f32 %v779, 0.0
  %v851 = vmax.f32 %v782, 0.0
  %v852 = vmax.f32 %v787, 0.0
  %v853 = vmax.f32 %v790, 0.0
  %v854 = vmax.f32 %v795, 0.0
  %v855 = vmax.f32 %v798, 0.0
  %v856 = vmax.f32 %v803, 0.0
  %v857 = vmax.f32 %v806, 0.0
  %v858 = vmax.f32 %v811, 0.0
  %v859 = vmax.f32 %v814, 0.0
  %v860 = vmax.f32 %v819, 0.0
  %v861 = vmax.f32 %v822, 0.0
  %v862 = vmax.f32 %v827, 0.0
  %v863 = vpack.c.bf16 %v833, %v832
  %v864 = vpack.c.bf16 %v835, %v834
  %v865 = vpack.c.bf16 %v837, %v836
  %v866 = vpack.c.bf16 %v839, %v838
  %v867 = vpack.c.bf16 %v841, %v840
  %v868 = vpack.c.bf16 %v843, %v842
  %v869 = vpack.c.bf16 %v845, %v844
  %v870 = vpack.c.bf16 %v847, %v846
  %v871 = vpack.c.bf16 %v849, %v848
  %v872 = vpack.c.bf16 %v851, %v850
  %v873 = vpack.c.bf16 %v853, %v852
  %v874 = vpack.c.bf16 %v855, %v854
  %v875 = vpack.c.bf16 %v857, %v856
  %v876 = vpack.c.bf16 %v859, %v858
  %v877 = vpack.c.bf16 %v861, %v860
  %v878 = vpack.c.bf16 %v862, %v862
  %v895 = vunpack.c.l.b16 %v863
  %v896 = vunpack.c.h.b16 %v863
  %v897 = vunpack.c.l.b16 %v864
  %v898 = vunpack.c.h.b16 %v864
  %v899 = vunpack.c.l.b16 %v865
  %v900 = vunpack.c.h.b16 %v865
  %v901 = vunpack.c.l.b16 %v866
  %v902 = vunpack.c.h.b16 %v866
  %v903 = vunpack.c.l.b16 %v867
  %v904 = vunpack.c.h.b16 %v867
  %v905 = vunpack.c.l.b16 %v868
  %v906 = vunpack.c.h.b16 %v868
  %v907 = vunpack.c.l.b16 %v869
  %v908 = vunpack.c.h.b16 %v869
  %v909 = vunpack.c.l.b16 %v870
  %v910 = vunpack.c.h.b16 %v870
  %v911 = vunpack.c.l.b16 %v871
  %v912 = vunpack.c.h.b16 %v871
  %v913 = vunpack.c.l.b16 %v872
  %v914 = vunpack.c.h.b16 %v872
  %v915 = vunpack.c.l.b16 %v873
  %v916 = vunpack.c.h.b16 %v873
  %v917 = vunpack.c.l.b16 %v874
  %v918 = vunpack.c.h.b16 %v874
  %v919 = vunpack.c.l.b16 %v875
  %v920 = vunpack.c.h.b16 %v875
  %v921 = vunpack.c.l.b16 %v876
  %v922 = vunpack.c.h.b16 %v876
  %v923 = vunpack.c.l.b16 %v877
  %v924 = vunpack.c.h.b16 %v877
  %v925 = vunpack.c.l.b16 %v878
  %v926 = vpack.c.b16 %v895, %v895
  %v927 = vpack.c.b16 %v896, %v896
  %v928 = vpack.c.b16 %v897, %v897
  %v929 = vpack.c.b16 %v898, %v898
  %v930 = vpack.c.b16 %v899, %v899
  %v931 = vpack.c.b16 %v900, %v900
  %v932 = vpack.c.b16 %v901, %v901
  %v933 = vpack.c.b16 %v902, %v902
  %v934 = vpack.c.b16 %v903, %v903
  %v935 = vpack.c.b16 %v904, %v904
  %v936 = vpack.c.b16 %v905, %v905
  %v937 = vpack.c.b16 %v906, %v906
  %v938 = vpack.c.b16 %v907, %v907
  %v939 = vpack.c.b16 %v908, %v908
  %v940 = vpack.c.b16 %v909, %v909
  %v941 = vpack.c.b16 %v910, %v910
  %v942 = vpack.c.b16 %v911, %v911
  %v943 = vpack.c.b16 %v912, %v912
  %v944 = vpack.c.b16 %v913, %v913
  %v945 = vpack.c.b16 %v914, %v914
  %v946 = vpack.c.b16 %v915, %v915
  %v947 = vpack.c.b16 %v916, %v916
  %v948 = vpack.c.b16 %v917, %v917
  %v949 = vpack.c.b16 %v918, %v918
  %v950 = vpack.c.b16 %v919, %v919
  %v951 = vpack.c.b16 %v920, %v920
  %v952 = vpack.c.b16 %v921, %v921
  %v953 = vpack.c.b16 %v922, %v922
  %v954 = vpack.c.b16 %v923, %v923
  %v955 = vpack.c.b16 %v924, %v924
  %v956 = vpack.c.b16 %v925, %v925
  %988 = vst [vmem:[%s3] sm:$0xf] %v926
  %989 = vst [vmem:[%s3 + $0x4] sm:$0xf] %v927
  %990 = vst [vmem:[%s3 + $0x8] sm:$0xf] %v928
  %991 = vst [vmem:[%s3 + $0xc] sm:$0xf] %v929
  %992 = vst [vmem:[%s3 + $0x10] sm:$0xf] %v930
  %993 = vst [vmem:[%s3 + $0x14] sm:$0xf] %v931
  %994 = vst [vmem:[%s3 + $0x18] sm:$0xf] %v932
  %995 = vst [vmem:[%s3 + $0x1c] sm:$0xf] %v933
  %996 = vst [vmem:[%s3 + $0x20] sm:$0xf] %v934
  %997 = vst [vmem:[%s3 + $0x24] sm:$0xf] %v935
  %998 = vst [vmem:[%s3 + $0x28] sm:$0xf] %v936
  %999 = vst [vmem:[%s3 + $0x2c] sm:$0xf] %v937
  %1000 = vst [vmem:[%s3 + $0x30] sm:$0xf] %v938
  %1001 = vst [vmem:[%s3 + $0x34] sm:$0xf] %v939
  %1002 = vst [vmem:[%s3 + $0x38] sm:$0xf] %v940
  %1003 = vst [vmem:[%s3 + $0x3c] sm:$0xf] %v941
  %1004 = vst [vmem:[%s3 + $0x40] sm:$0xf] %v942
  %1005 = vst [vmem:[%s3 + $0x44] sm:$0xf] %v943
  %1006 = vst [vmem:[%s3 + $0x48] sm:$0xf] %v944
  %1007 = vst [vmem:[%s3 + $0x4c] sm:$0xf] %v945
  %1008 = vst [vmem:[%s3 + $0x50] sm:$0xf] %v946
  %1009 = vst [vmem:[%s3 + $0x54] sm:$0xf] %v947
  %1010 = vst [vmem:[%s3 + $0x58] sm:$0xf] %v948
  %1011 = vst [vmem:[%s3 + $0x5c] sm:$0xf] %v949
  %1012 = vst [vmem:[%s3 + $0x60] sm:$0xf] %v950
  %1013 = vst [vmem:[%s3 + $0x64] sm:$0xf] %v951
  %1014 = vst [vmem:[%s3 + $0x68] sm:$0xf] %v952
  %1015 = vst [vmem:[%s3 + $0x6c] sm:$0xf] %v953
  %1016 = vst [vmem:[%s3 + $0x70] sm:$0xf] %v954
  %1017 = vst [vmem:[%s3 + $0x74] sm:$0xf] %v955
  %1018 = vst [vmem:[%s3 + $0x78] sm:$0x1] %v956
  // Predicated region
  $region14: #{teacher_forward.9} parent=0 // pred_check
    _
  $region15: #{teacher_forward.9} parent=0 // pred_check_branch
    %1020 = sbr.rel (0) target = $region17
  $region16: #{teacher_forward.9} parent=0 // pred_region
    _
  $region17: #{teacher_forward.9} parent=0 // pred_fallthru
    _
  // Predicated region
  $region18: #{teacher_forward.9} parent=0 // pred_check
    _
  $region19: #{teacher_forward.9} parent=0 // pred_check_branch
    %1022 = sbr.rel (0) target = $region21
  $region20: #{teacher_forward.9} parent=0 // pred_region
    _
  $region21: #{teacher_forward.9} parent=0 // pred_fallthru
    _

// kernel: teacher_forward.11
$region0: #{teacher_forward.11}
  #allocation0 [shape = 'u32[]', space=smem, size = 0x4, offset = 0x4, fixed_abs, tag = 'smem constant byte address 0x4 - core index']
  #allocation1 [shape = 'u32[144,128]{1,0:T(1,128)}', space=vmem, size = 0x12000, scoped, tag = 'internal scratch']
  %s0 = inlined_call_operand.vmem [shape: bf16[18,576], index: 0, kind: input, shape index: {}]
  %s1 = inlined_call_operand.vmem [shape: bf16[576,128], index: 1, kind: input, shape index: {}]
  %s2 = inlined_call_operand.vmem [shape: f32[1,128], index: 2, kind: input, shape index: {}]
  %s3 = inlined_call_operand.vmem [shape: bf16[18,128], index: 3, kind: output, shape index: {}]
  %s4 = sld [smem:[#allocation0]]
  $region22: #{teacher_forward.11} parent=0
    _
  %s6 = ssub.s32 1, %s4
  %s7 = scalar_select 0, %s6, %s4
  // Predicated region
  $region2: #{teacher_forward.11} parent=0 // pred_check
    _
  $region3: #{teacher_forward.11} parent=0 // pred_check_branch
    %9 = sbr.rel (0) target = $region5
  $region4: #{teacher_forward.11} parent=0 // pred_region
    _
  $region5: #{teacher_forward.11} parent=0 // pred_fallthru
    _
  // Predicated region
  $region6: #{teacher_forward.11} parent=0 // pred_check
    _
  $region7: #{teacher_forward.11} parent=0 // pred_check_branch
    %11 = sbr.rel (0) target = $region9
  $region8: #{teacher_forward.11} parent=0 // pred_region
    _
  $region9: #{teacher_forward.11} parent=0 // pred_fallthru
    _
  // Predicated region
  $region10: #{teacher_forward.11} parent=0 // pred_check
    _
  $region11: #{teacher_forward.11} parent=0 // pred_check_branch
    %13 = sbr.rel (0) target = $region13
  $region12: #{teacher_forward.11} parent=0 // pred_region
    _
  $region13: #{teacher_forward.11} parent=0 // pred_fallthru
    _
  %v15 = vld [vmem:[%s0] sm:$0xff]
  %v16 = vld [vmem:[%s0 + $0x8] sm:$0xff]
  %v17 = vld [vmem:[%s0 + $0x10] sm:$0xf]
  %v18 = vld [vmem:[%s0 + $0x14] sm:$0xff]
  %v19 = vld [vmem:[%s0 + $0x1c] sm:$0xff]
  %v20 = vld [vmem:[%s0 + $0x24] sm:$0xf]
  %v21 = vld [vmem:[%s0 + $0x28] sm:$0x11]
  %v22 = vld [vmem:[%s0 + $0x30] sm:$0x11]
  %v23 = vld [vmem:[%s0 + $0x38] sm:$0x1]
  %v24 = vld [vmem:[%s1] sm:$0xf]
  %v25 = vld [vmem:[%s1 + $0x4] sm:$0xf]
  %v26 = vld [vmem:[%s1 + $0x8] sm:$0xf]
  %v27 = vld [vmem:[%s1 + $0xc] sm:$0xf]
  %v28 = vld [vmem:[%s1 + $0x10] sm:$0xf]
  %v29 = vld [vmem:[%s1 + $0x14] sm:$0xf]
  %v30 = vld [vmem:[%s1 + $0x18] sm:$0xf]
  %v31 = vld [vmem:[%s1 + $0x1c] sm:$0xf]
  %v32 = vld [vmem:[%s1 + $0x20] sm:$0xf]
  %v33 = vld [vmem:[%s1 + $0x24] sm:$0xf]
  %v34 = vld [vmem:[%s1 + $0x28] sm:$0xf]
  %v35 = vld [vmem:[%s1 + $0x2c] sm:$0xf]
  %v36 = vld [vmem:[%s1 + $0x30] sm:$0xf]
  %v37 = vld [vmem:[%s1 + $0x34] sm:$0xf]
  %v38 = vld [vmem:[%s1 + $0x38] sm:$0xf]
  %v39 = vld [vmem:[%s1 + $0x3c] sm:$0xf]
  %v40 = vld [vmem:[%s1 + $0x40] sm:$0xf]
  %v41 = vld [vmem:[%s1 + $0x44] sm:$0xf]
  %v42 = vld [vmem:[%s1 + $0x48] sm:$0xf]
  %v43 = vld [vmem:[%s1 + $0x4c] sm:$0xf]
  %v44 = vld [vmem:[%s1 + $0x50] sm:$0xf]
  %v45 = vld [vmem:[%s1 + $0x54] sm:$0xf]
  %v46 = vld [vmem:[%s1 + $0x58] sm:$0xf]
  %v47 = vld [vmem:[%s1 + $0x5c] sm:$0xf]
  %v48 = vld [vmem:[%s1 + $0x60] sm:$0xf]
  %v49 = vld [vmem:[%s1 + $0x64] sm:$0xf]
  %v50 = vld [vmem:[%s1 + $0x68] sm:$0xf]
  %v51 = vld [vmem:[%s1 + $0x6c] sm:$0xf]
  %v52 = vld [vmem:[%s1 + $0x70] sm:$0xf]
  %v53 = vld [vmem:[%s1 + $0x74] sm:$0xf]
  %v54 = vld [vmem:[%s1 + $0x78] sm:$0xf]
  %v55 = vld [vmem:[%s1 + $0x7c] sm:$0xf]
  %v56 = vld [vmem:[%s1 + $0x80] sm:$0xf]
  %v57 = vld [vmem:[%s1 + $0x84] sm:$0xf]
  %v58 = vld [vmem:[%s1 + $0x88] sm:$0xf]
  %v59 = vld [vmem:[%s1 + $0x8c] sm:$0xf]
  %v60 = vld [vmem:[%s1 + $0x90] sm:$0xf]
  %v61 = vld [vmem:[%s1 + $0x94] sm:$0xf]
  %v62 = vld [vmem:[%s1 + $0x98] sm:$0xf]
  %v63 = vld [vmem:[%s1 + $0x9c] sm:$0xf]
  %v64 = vld [vmem:[%s1 + $0xa0] sm:$0xf]
  %v65 = vld [vmem:[%s1 + $0xa4] sm:$0xf]
  %v66 = vld [vmem:[%s1 + $0xa8] sm:$0xf]
  %v67 = vld [vmem:[%s1 + $0xac] sm:$0xf]
  %v68 = vld [vmem:[%s1 + $0xb0] sm:$0xf]
  %v69 = vld [vmem:[%s1 + $0xb4] sm:$0xf]
  %v70 = vld [vmem:[%s1 + $0xb8] sm:$0xf]
  %v71 = vld [vmem:[%s1 + $0xbc] sm:$0xf]
  %v72 = vld [vmem:[%s1 + $0xc0] sm:$0xf]
  %v73 = vld [vmem:[%s1 + $0xc4] sm:$0xf]
  %v74 = vld [vmem:[%s1 + $0xc8] sm:$0xf]
  %v75 = vld [vmem:[%s1 + $0xcc] sm:$0xf]
  %v76 = vld [vmem:[%s1 + $0xd0] sm:$0xf]
  %v77 = vld [vmem:[%s1 + $0xd4] sm:$0xf]
  %v78 = vld [vmem:[%s1 + $0xd8] sm:$0xf]
  %v79 = vld [vmem:[%s1 + $0xdc] sm:$0xf]
  %v80 = vld [vmem:[%s1 + $0xe0] sm:$0xf]
  %v81 = vld [vmem:[%s1 + $0xe4] sm:$0xf]
  %v82 = vld [vmem:[%s1 + $0xe8] sm:$0xf]
  %v83 = vld [vmem:[%s1 + $0xec] sm:$0xf]
  %v84 = vld [vmem:[%s1 + $0xf0] sm:$0xf]
  %v85 = vld [vmem:[%s1 + $0xf4] sm:$0xf]
  %v86 = vld [vmem:[%s1 + $0xf8] sm:$0xf]
  %v87 = vld [vmem:[%s1 + $0xfc] sm:$0xf]
  %v88 = vld [vmem:[%s1 + $0x100] sm:$0xf]
  %v89 = vld [vmem:[%s1 + $0x104] sm:$0xf]
  %v90 = vld [vmem:[%s1 + $0x108] sm:$0xf]
  %v91 = vld [vmem:[%s1 + $0x10c] sm:$0xf]
  %v92 = vld [vmem:[%s1 + $0x110] sm:$0xf]
  %v93 = vld [vmem:[%s1 + $0x114] sm:$0xf]
  %v94 = vld [vmem:[%s1 + $0x118] sm:$0xf]
  %v95 = vld [vmem:[%s1 + $0x11c] sm:$0xf]
  %v96 = vld [vmem:[%s2] sm:$0x1]
  %v98 = vlaneseq
  %v99 = vshrl.u32 %v98, 7
  %v100 = vsub.s32 0, %v99
  %v101 = vrot.slane %v96, %v100
  %v112 = vunpack.c.l.b16 %v15
  %v113 = vunpack.c.h.b16 %v15
  %v114 = vunpack.c.l.b16 %v16
  %v115 = vunpack.c.h.b16 %v16
  %v116 = vunpack.c.l.b16 %v17
  %v117 = vunpack.c.l.b16 %v18
  %v118 = vunpack.c.h.b16 %v18
  %v119 = vunpack.c.l.b16 %v19
  %v120 = vunpack.c.h.b16 %v19
  %v121 = vunpack.c.l.b16 %v20
  %v122 = vunpack.c.l.b16 %v21
  %v123 = vunpack.c.h.b16 %v21
  %v124 = vunpack.c.l.b16 %v22
  %v125 = vunpack.c.h.b16 %v22
  %v126 = vunpack.c.l.b16 %v23
  %v127 = vpack.c.b16 %v117, %v112
  %v128 = vpack.c.b16 %v118, %v113
  %v129 = vpack.c.b16 %v119, %v114
  %v130 = vpack.c.b16 %v120, %v115
  %v131 = vpack.c.b16 %v121, %v116
  %v132 = vpack.c.b16 %v122, %v122
  %v133 = vpack.c.b16 %v123, %v123
  %v134 = vpack.c.b16 %v124, %v124
  %v135 = vpack.c.b16 %v125, %v125
  %v136 = vpack.c.b16 %v126, %v126
  %v217 = vunpack.c.l.b16 %v24
  %v218 = vunpack.c.l.b16 %v25
  %v219 = vunpack.c.l.b16 %v26
  %v220 = vunpack.c.l.b16 %v27
  %v221 = vunpack.c.l.b16 %v28
  %v222 = vunpack.c.l.b16 %v29
  %v223 = vunpack.c.l.b16 %v30
  %v224 = vunpack.c.l.b16 %v31
  %v225 = vunpack.c.l.b16 %v32
  %v226 = vunpack.c.l.b16 %v33
  %v227 = vunpack.c.l.b16 %v34
  %v228 = vunpack.c.l.b16 %v35
  %v229 = vunpack.c.l.b16 %v36
  %v230 = vunpack.c.l.b16 %v37
  %v231 = vunpack.c.l.b16 %v38
  %v232 = vunpack.c.l.b16 %v39
  %v233 = vunpack.c.l.b16 %v40
  %v234 = vunpack.c.l.b16 %v41
  %v235 = vunpack.c.l.b16 %v42
  %v236 = vunpack.c.l.b16 %v43
  %v237 = vunpack.c.l.b16 %v44
  %v238 = vunpack.c.l.b16 %v45
  %v239 = vunpack.c.l.b16 %v46
  %v240 = vunpack.c.l.b16 %v47
  %v241 = vunpack.c.l.b16 %v48
  %v242 = vunpack.c.l.b16 %v49
  %v243 = vunpack.c.l.b16 %v50
  %v244 = vunpack.c.l.b16 %v51
  %v245 = vunpack.c.l.b16 %v52
  %v246 = vunpack.c.l.b16 %v53
  %v247 = vunpack.c.l.b16 %v54
  %v248 = vunpack.c.l.b16 %v55
  %v249 = vunpack.c.l.b16 %v56
  %v250 = vunpack.c.l.b16 %v57
  %v251 = vunpack.c.l.b16 %v58
  %v252 = vunpack.c.l.b16 %v59
  %v253 = vunpack.c.l.b16 %v60
  %v254 = vunpack.c.l.b16 %v61
  %v255 = vunpack.c.l.b16 %v62
  %v256 = vunpack.c.l.b16 %v63
  %v257 = vunpack.c.l.b16 %v64
  %v258 = vunpack.c.l.b16 %v65
  %v259 = vunpack.c.l.b16 %v66
  %v260 = vunpack.c.l.b16 %v67
  %v261 = vunpack.c.l.b16 %v68
  %v262 = vunpack.c.l.b16 %v69
  %v263 = vunpack.c.l.b16 %v70
  %v264 = vunpack.c.l.b16 %v71
  %v265 = vunpack.c.l.b16 %v72
  %v266 = vunpack.c.l.b16 %v73
  %v267 = vunpack.c.l.b16 %v74
  %v268 = vunpack.c.l.b16 %v75
  %v269 = vunpack.c.l.b16 %v76
  %v270 = vunpack.c.l.b16 %v77
  %v271 = vunpack.c.l.b16 %v78
  %v272 = vunpack.c.l.b16 %v79
  %v273 = vunpack.c.l.b16 %v80
  %v274 = vunpack.c.l.b16 %v81
  %v275 = vunpack.c.l.b16 %v82
  %v276 = vunpack.c.l.b16 %v83
  %v277 = vunpack.c.l.b16 %v84
  %v278 = vunpack.c.l.b16 %v85
  %v279 = vunpack.c.l.b16 %v86
  %v280 = vunpack.c.l.b16 %v87
  %v281 = vunpack.c.l.b16 %v88
  %v282 = vunpack.c.l.b16 %v89
  %v283 = vunpack.c.l.b16 %v90
  %v284 = vunpack.c.l.b16 %v91
  %v285 = vunpack.c.l.b16 %v92
  %v286 = vunpack.c.l.b16 %v93
  %v287 = vunpack.c.l.b16 %v94
  %v288 = vunpack.c.l.b16 %v95
  %v289 = vpack.c.b16 %v218, %v217
  %v290 = vpack.c.b16 %v220, %v219
  %v291 = vpack.c.b16 %v222, %v221
  %v292 = vpack.c.b16 %v224, %v223
  %v293 = vpack.c.b16 %v226, %v225
  %v294 = vpack.c.b16 %v228, %v227
  %v295 = vpack.c.b16 %v230, %v229
  %v296 = vpack.c.b16 %v232, %v231
  %v297 = vpack.c.b16 %v234, %v233
  %v298 = vpack.c.b16 %v236, %v235
  %v299 = vpack.c.b16 %v238, %v237
  %v300 = vpack.c.b16 %v240, %v239
  %v301 = vpack.c.b16 %v242, %v241
  %v302 = vpack.c.b16 %v244, %v243
  %v303 = vpack.c.b16 %v246, %v245
  %v304 = vpack.c.b16 %v248, %v247
  %v305 = vpack.c.b16 %v250, %v249
  %v306 = vpack.c.b16 %v252, %v251
  %v307 = vpack.c.b16 %v254, %v253
  %v308 = vpack.c.b16 %v256, %v255
  %v309 = vpack.c.b16 %v258, %v257
  %v310 = vpack.c.b16 %v260, %v259
  %v311 = vpack.c.b16 %v262, %v261
  %v312 = vpack.c.b16 %v264, %v263
  %v313 = vpack.c.b16 %v266, %v265
  %v314 = vpack.c.b16 %v268, %v267
  %v315 = vpack.c.b16 %v270, %v269
  %v316 = vpack.c.b16 %v272, %v271
  %v317 = vpack.c.b16 %v274, %v273
  %v318 = vpack.c.b16 %v276, %v275
  %v319 = vpack.c.b16 %v278, %v277
  %v320 = vpack.c.b16 %v280, %v279
  %v321 = vpack.c.b16 %v282, %v281
  %v322 = vpack.c.b16 %v284, %v283
  %v323 = vpack.c.b16 %v286, %v285
  %v324 = vpack.c.b16 %v288, %v287
  %vm361 = vcmask 523264
  %v363 = vsel %vm361, %v131, 0
  %v366 = vsel %vm361, %v136, 0
  %368 = vmatprep.subr.bf16.mxu0 0
  %369 = vmatpush1.bf16.msra.mxu0 %v289
  %370 = vmatprep.subr.bf16.mxu0 0
  %371 = vmatpush1.bf16.msra.mxu0 %v290
  %372 = vmatprep.subr.bf16.mxu0 0
  %373 = vmatpush1.bf16.msra.mxu0 %v291
  %374 = vmatprep.subr.bf16.mxu0 0
  %375 = vmatpush1.bf16.msra.mxu0 %v292
  %376 = vmatprep.subr.bf16.mxu0 0
  %377 = vmatpush1.bf16.msra.mxu0 %v293
  %378 = vmatprep.subr.bf16.mxu0 0
  %379 = vmatpush1.bf16.msra.mxu0 %v294
  %380 = vmatprep.subr.bf16.mxu0 0
  %381 = vmatpush1.bf16.msra.mxu0 %v295
  %382 = vmatprep.subr.bf16.mxu0 0
  %383 = vmatpush1.bf16.msra.mxu0 %v296
  %384 = vmatprep.subr.bf16.mxu0 0
  %385 = vmatpush1.bf16.msra.mxu0 %v297
  %386 = vmatprep.subr.bf16.mxu0 0
  %387 = vmatpush1.bf16.msra.mxu0 %v298
  %388 = vmatprep.subr.bf16.mxu0 0
  %389 = vmatpush1.bf16.msra.mxu0 %v299
  %390 = vmatprep.subr.bf16.mxu0 0
  %391 = vmatpush1.bf16.msra.mxu0 %v300
  %392 = vmatprep.subr.bf16.mxu0 0
  %393 = vmatpush1.bf16.msra.mxu0 %v301
  %394 = vmatprep.subr.bf16.mxu0 0
  %395 = vmatpush1.bf16.msra.mxu0 %v302
  %396 = vmatprep.subr.bf16.mxu0 0
  %397 = vmatpush1.bf16.msra.mxu0 %v303
  %398 = vmatprep.subr.bf16.mxu0 0
  %399 = vmatpush1.bf16.msra.mxu0 %v304
  %400 = vmatprep.mubr.bf16.mxu0 %v128
  %401 = vmatmul.mubr.bf16.gmra.mrb[0].mxu0 %v127
  %v402 = vpop.f32.mrb[0].mxu0
  %v403 = vadd.f32 %v101, %v402
  %v404 = vpop.f32.mrb[0].mxu0
  %v405 = vpop.f32.mrb[0].mxu0
  %v406 = vadd.f32 %v101, %v405
  %v407 = vpop.f32.mrb[0].mxu0
  %408 = vmatprep.mubr.bf16.mxu0 %v133
  %409 = vmatmul.mubr.bf16.gmra.mrb[0].mxu0 %v132
  %v410 = vpop.f32.mrb[0].mxu0
  %v411 = vadd.f32 %v101, %v410
  %v412 = vpop.f32.mrb[0].mxu0
  %v413 = vpop.f32.mrb[0].mxu0
  %v414 = vpop.f32.mrb[0].mxu0
  %415 = vdwg.mxu0
  %416 = vmatprep.subr.bf16.mxu0 0
  %417 = vmatpush1.bf16.msra.mxu0 %v305
  %418 = vmatprep.subr.bf16.mxu0 0
  %419 = vmatpush1.bf16.msra.mxu0 %v306
  %420 = vmatprep.subr.bf16.mxu0 0
  %421 = vmatpush1.bf16.msra.mxu0 %v307
  %422 = vmatprep.subr.bf16.mxu0 0
  %423 = vmatpush1.bf16.msra.mxu0 %v308
  %424 = vmatprep.subr.bf16.mxu0 0
  %425 = vmatpush1.bf16.msra.mxu0 %v309
  %426 = vmatprep.subr.bf16.mxu0 0
  %427 = vmatpush1.bf16.msra.mxu0 %v310
  %428 = vmatprep.subr.bf16.mxu0 0
  %429 = vmatpush1.bf16.msra.mxu0 %v311
  %430 = vmatprep.subr.bf16.mxu0 0
  %431 = vmatpush1.bf16.msra.mxu0 %v312
  %432 = vmatprep.subr.bf16.mxu0 0
  %433 = vmatpush1.bf16.msra.mxu0 %v313
  %434 = vmatprep.subr.bf16.mxu0 0
  %435 = vmatpush1.bf16.msra.mxu0 %v314
  %436 = vmatprep.subr.bf16.mxu0 0
  %437 = vmatpush1.bf16.msra.mxu0 %v315
  %438 = vmatprep.subr.bf16.mxu0 0
  %439 = vmatpush1.bf16.msra.mxu0 %v316
  %440 = vmatprep.subr.bf16.mxu0 0
  %441 = vmatpush1.bf16.msra.mxu0 %v317
  %442 = vmatprep.subr.bf16.mxu0 0
  %443 = vmatpush1.bf16.msra.mxu0 %v318
  %444 = vmatprep.subr.bf16.mxu0 0
  %445 = vmatpush1.bf16.msra.mxu0 %v319
  %446 = vmatprep.subr.bf16.mxu0 0
  %447 = vmatpush1.bf16.msra.mxu0 %v320
  %448 = vmatprep.mubr.bf16.mxu0 %v130
  %449 = vmatmul.mubr.bf16.gmra.mrb[0].mxu0 %v129
  %v450 = vpop.f32.mrb[0].mxu0
  %v451 = vadd.f32 %v403, %v450
  %v452 = vpop.f32.mrb[0].mxu0
  %v453 = vpop.f32.mrb[0].mxu0
  %v454 = vadd.f32 %v406, %v453
  %v455 = vpop.f32.mrb[0].mxu0
  %456 = vmatprep.mubr.bf16.mxu0 %v135
  %457 = vmatmul.mubr.bf16.gmra.mrb[0].mxu0 %v134
  %v458 = vpop.f32.mrb[0].mxu0
  %v459 = vadd.f32 %v411, %v458
  %v460 = vpop.f32.mrb[0].mxu0
  %v461 = vpop.f32.mrb[0].mxu0
  %v462 = vpop.f32.mrb[0].mxu0
  %463 = vdwg.mxu0
  %464 = vmatprep.subr.bf16.mxu0 0
  %465 = vmatpush1.bf16.msra.mxu0 %v321
  %466 = vmatprep.subr.bf16.mxu0 0
  %467 = vmatpush1.bf16.msra.mxu0 %v322
  %468 = vmatprep.subr.bf16.mxu0 0
  %469 = vmatpush1.bf16.msra.mxu0 %v323
  %470 = vmatprep.subr.bf16.mxu0 0
  %471 = vmatpush1.bf16.msra.mxu0 %v324
  %472 = vmatprep.subr.bf16.mxu0 0
  %473 = vmatpush1.bf16.msra.mxu0 0
  %474 = vmatprep.subr.bf16.mxu0 0
  %475 = vmatpush1.bf16.msra.mxu0 0
  %476 = vmatprep.subr.bf16.mxu0 0
  %477 = vmatpush1.bf16.msra.mxu0 0
  %478 = vmatprep.subr.bf16.mxu0 0
  %479 = vmatpush1.bf16.msra.mxu0 0
  %480 = vmatprep.subr.bf16.mxu0 0
  %481 = vmatpush1.bf16.msra.mxu0 0
  %482 = vmatprep.subr.bf16.mxu0 0
  %483 = vmatpush1.bf16.msra.mxu0 0
  %484 = vmatprep.subr.bf16.mxu0 0
  %485 = vmatpush1.bf16.msra.mxu0 0
  %486 = vmatprep.subr.bf16.mxu0 0
  %487 = vmatpush1.bf16.msra.mxu0 0
  %488 = vmatprep.subr.bf16.mxu0 0
  %489 = vmatpush1.bf16.msra.mxu0 0
  %490 = vmatprep.subr.bf16.mxu0 0
  %491 = vmatpush1.bf16.msra.mxu0 0
  %492 = vmatprep.subr.bf16.mxu0 0
  %493 = vmatpush1.bf16.msra.mxu0 0
  %494 = vmatprep.subr.bf16.mxu0 0
  %495 = vmatpush1.bf16.msra.mxu0 0
  %496 = vmatprep.mubr.bf16.mxu0 0
  %497 = vmatmul.mubr.bf16.gmra.mrb[0].mxu0 %v363
  %v498 = vpop.f32.mrb[0].mxu0
  %v499 = vadd.f32 %v451, %v498
  %v500 = vpop.f32.mrb[0].mxu0
  %v501 = vpop.f32.mrb[0].mxu0
  %v502 = vadd.f32 %v454, %v501
  %v503 = vpop.f32.mrb[0].mxu0
  %504 = vmatprep.mubr.bf16.mxu0 0
  %505 = vmatmul.mubr.bf16.gmra.mrb[0].mxu0 %v366
  %v506 = vpop.f32.mrb[0].mxu0
  %v507 = vadd.f32 %v459, %v506
  %v508 = vpop.f32.mrb[0].mxu0
  %v509 = vpop.f32.mrb[0].mxu0
  %v510 = vpop.f32.mrb[0].mxu0
  %511 = vdwg.mxu0
  %v512 = vmax.f32 %v499, 0.0
  %v513 = vmax.f32 %v502, 0.0
  %v514 = vmax.f32 %v507, 0.0
  %v515 = vpack.c.bf16 %v513, %v512
  %v516 = vpack.c.bf16 %v514, %v514
  %v519 = vunpack.c.l.b16 %v515
  %v520 = vunpack.c.h.b16 %v515
  %v521 = vunpack.c.l.b16 %v516
  %v522 = vpack.c.b16 %v519, %v519
  %v523 = vpack.c.b16 %v520, %v520
  %v524 = vpack.c.b16 %v521, %v521
  %528 = vst [vmem:[%s3] sm:$0xf] %v522
  %529 = vst [vmem:[%s3 + $0x4] sm:$0xf] %v523
  %530 = vst [vmem:[%s3 + $0x8] sm:$0x1] %v524
  // Predicated region
  $region14: #{teacher_forward.11} parent=0 // pred_check
    _
  $region15: #{teacher_forward.11} parent=0 // pred_check_branch
    %532 = sbr.rel (0) target = $region17
  $region16: #{teacher_forward.11} parent=0 // pred_region
    _
  $region17: #{teacher_forward.11} parent=0 // pred_fallthru
    _
  // Predicated region
  $region18: #{teacher_forward.11} parent=0 // pred_check
    _
  $region19: #{teacher_forward.11} parent=0 // pred_check_branch
    %534 = sbr.rel (0) target = $region21
  $region20: #{teacher_forward.11} parent=0 // pred_region
    _
  $region21: #{teacher_forward.11} parent=0 // pred_fallthru
    _

// kernel: teacher_forward.12
$region0: #{teacher_forward.12}
  #allocation0 [shape = 'u32[]', space=smem, size = 0x4, offset = 0x4, fixed_abs, tag = 'smem constant byte address 0x4 - core index']
  #allocation1 [shape = 'u32[144,128]{1,0:T(1,128)}', space=vmem, size = 0x12000, scoped, tag = 'internal scratch']
  %s0 = inlined_call_operand.vmem [shape: bf16[2,1152], index: 0, kind: input, shape index: {}]
  %s1 = inlined_call_operand.vmem [shape: bf16[1152,128], index: 1, kind: input, shape index: {}]
  %s2 = inlined_call_operand.vmem [shape: f32[1,128], index: 2, kind: input, shape index: {}]
  %s3 = inlined_call_operand.vmem [shape: bf16[2,128], index: 3, kind: output, shape index: {}]
  %s4 = sld [smem:[#allocation0]]
  $region22: #{teacher_forward.12} parent=0
    _
  %s6 = ssub.s32 1, %s4
  %s7 = scalar_select 0, %s6, %s4
  // Predicated region
  $region2: #{teacher_forward.12} parent=0 // pred_check
    _
  $region3: #{teacher_forward.12} parent=0 // pred_check_branch
    %9 = sbr.rel (0) target = $region5
  $region4: #{teacher_forward.12} parent=0 // pred_region
    _
  $region5: #{teacher_forward.12} parent=0 // pred_fallthru
    _
  // Predicated region
  $region6: #{teacher_forward.12} parent=0 // pred_check
    _
  $region7: #{teacher_forward.12} parent=0 // pred_check_branch
    %11 = sbr.rel (0) target = $region9
  $region8: #{teacher_forward.12} parent=0 // pred_region
    _
  $region9: #{teacher_forward.12} parent=0 // pred_fallthru
    _
  // Predicated region
  $region10: #{teacher_forward.12} parent=0 // pred_check
    _
  $region11: #{teacher_forward.12} parent=0 // pred_check_branch
    %13 = sbr.rel (0) target = $region13
  $region12: #{teacher_forward.12} parent=0 // pred_region
    _
  $region13: #{teacher_forward.12} parent=0 // pred_fallthru
    _
  %v15 = vld [vmem:[%s0] sm:$0xff]
  %v16 = vld [vmem:[%s0 + $0x8] sm:$0x1]
  %v17 = vld [vmem:[%s1] sm:$0xf]
  %v18 = vld [vmem:[%s1 + $0x4] sm:$0xf]
  %v19 = vld [vmem:[%s1 + $0x8] sm:$0xf]
  %v20 = vld [vmem:[%s1 + $0xc] sm:$0xf]
  %v21 = vld [vmem:[%s1 + $0x10] sm:$0xf]
  %v22 = vld [vmem:[%s1 + $0x14] sm:$0xf]
  %v23 = vld [vmem:[%s1 + $0x18] sm:$0xf]
  %v24 = vld [vmem:[%s1 + $0x1c] sm:$0xf]
  %v25 = vld [vmem:[%s1 + $0x20] sm:$0xf]
  %v26 = vld [vmem:[%s1 + $0x24] sm:$0xf]
  %v27 = vld [vmem:[%s1 + $0x28] sm:$0xf]
  %v28 = vld [vmem:[%s1 + $0x2c] sm:$0xf]
  %v29 = vld [vmem:[%s1 + $0x30] sm:$0xf]
  %v30 = vld [vmem:[%s1 + $0x34] sm:$0xf]
  %v31 = vld [vmem:[%s1 + $0x38] sm:$0xf]
  %v32 = vld [vmem:[%s1 + $0x3c] sm:$0xf]
  %v33 = vld [vmem:[%s1 + $0x40] sm:$0xf]
  %v34 = vld [vmem:[%s1 + $0x44] sm:$0xf]
  %v35 = vld [vmem:[%s1 + $0x48] sm:$0xf]
  %v36 = vld [vmem:[%s1 + $0x4c] sm:$0xf]
  %v37 = vld [vmem:[%s1 + $0x50] sm:$0xf]
  %v38 = vld [vmem:[%s1 + $0x54] sm:$0xf]
  %v39 = vld [vmem:[%s1 + $0x58] sm:$0xf]
  %v40 = vld [vmem:[%s1 + $0x5c] sm:$0xf]
  %v41 = vld [vmem:[%s1 + $0x60] sm:$0xf]
  %v42 = vld [vmem:[%s1 + $0x64] sm:$0xf]
  %v43 = vld [vmem:[%s1 + $0x68] sm:$0xf]
  %v44 = vld [vmem:[%s1 + $0x6c] sm:$0xf]
  %v45 = vld [vmem:[%s1 + $0x70] sm:$0xf]
  %v46 = vld [vmem:[%s1 + $0x74] sm:$0xf]
  %v47 = vld [vmem:[%s1 + $0x78] sm:$0xf]
  %v48 = vld [vmem:[%s1 + $0x7c] sm:$0xf]
  %v49 = vld [vmem:[%s1 + $0x80] sm:$0xf]
  %v50 = vld [vmem:[%s1 + $0x84] sm:$0xf]
  %v51 = vld [vmem:[%s1 + $0x88] sm:$0xf]
  %v52 = vld [vmem:[%s1 + $0x8c] sm:$0xf]
  %v53 = vld [vmem:[%s1 + $0x90] sm:$0xf]
  %v54 = vld [vmem:[%s1 + $0x94] sm:$0xf]
  %v55 = vld [vmem:[%s1 + $0x98] sm:$0xf]
  %v56 = vld [vmem:[%s1 + $0x9c] sm:$0xf]
  %v57 = vld [vmem:[%s1 + $0xa0] sm:$0xf]
  %v58 = vld [vmem:[%s1 + $0xa4] sm:$0xf]
  %v59 = vld [vmem:[%s1 + $0xa8] sm:$0xf]
  %v60 = vld [vmem:[%s1 + $0xac] sm:$0xf]
  %v61 = vld [vmem:[%s1 + $0xb0] sm:$0xf]
  %v62 = vld [vmem:[%s1 + $0xb4] sm:$0xf]
  %v63 = vld [vmem:[%s1 + $0xb8] sm:$0xf]
  %v64 = vld [vmem:[%s1 + $0xbc] sm:$0xf]
  %v65 = vld [vmem:[%s1 + $0xc0] sm:$0xf]
  %v66 = vld [vmem:[%s1 + $0xc4] sm:$0xf]
  %v67 = vld [vmem:[%s1 + $0xc8] sm:$0xf]
  %v68 = vld [vmem:[%s1 + $0xcc] sm:$0xf]
  %v69 = vld [vmem:[%s1 + $0xd0] sm:$0xf]
  %v70 = vld [vmem:[%s1 + $0xd4] sm:$0xf]
  %v71 = vld [vmem:[%s1 + $0xd8] sm:$0xf]
  %v72 = vld [vmem:[%s1 + $0xdc] sm:$0xf]
  %v73 = vld [vmem:[%s1 + $0xe0] sm:$0xf]
  %v74 = vld [vmem:[%s1 + $0xe4] sm:$0xf]
  %v75 = vld [vmem:[%s1 + $0xe8] sm:$0xf]
  %v76 = vld [vmem:[%s1 + $0xec] sm:$0xf]
  %v77 = vld [vmem:[%s1 + $0xf0] sm:$0xf]
  %v78 = vld [vmem:[%s1 + $0xf4] sm:$0xf]
  %v79 = vld [vmem:[%s1 + $0xf8] sm:$0xf]
  %v80 = vld [vmem:[%s1 + $0xfc] sm:$0xf]
  %v81 = vld [vmem:[%s1 + $0x100] sm:$0xf]
  %v82 = vld [vmem:[%s1 + $0x104] sm:$0xf]
  %v83 = vld [vmem:[%s1 + $0x108] sm:$0xf]
  %v84 = vld [vmem:[%s1 + $0x10c] sm:$0xf]
  %v85 = vld [vmem:[%s1 + $0x110] sm:$0xf]
  %v86 = vld [vmem:[%s1 + $0x114] sm:$0xf]
  %v87 = vld [vmem:[%s1 + $0x118] sm:$0xf]
  %v88 = vld [vmem:[%s1 + $0x11c] sm:$0xf]
  %v89 = vld [vmem:[%s1 + $0x120] sm:$0xf]
  %v90 = vld [vmem:[%s1 + $0x124] sm:$0xf]
  %v91 = vld [vmem:[%s1 + $0x128] sm:$0xf]
  %v92 = vld [vmem:[%s1 + $0x12c] sm:$0xf]
  %v93 = vld [vmem:[%s1 + $0x130] sm:$0xf]
  %v94 = vld [vmem:[%s1 + $0x134] sm:$0xf]
  %v95 = vld [vmem:[%s1 + $0x138] sm:$0xf]
  %v96 = vld [vmem:[%s1 + $0x13c] sm:$0xf]
  %v97 = vld [vmem:[%s1 + $0x140] sm:$0xf]
  %v98 = vld [vmem:[%s1 + $0x144] sm:$0xf]
  %v99 = vld [vmem:[%s1 + $0x148] sm:$0xf]
  %v100 = vld [vmem:[%s1 + $0x14c] sm:$0xf]
  %v101 = vld [vmem:[%s1 + $0x150] sm:$0xf]
  %v102 = vld [vmem:[%s1 + $0x154] sm:$0xf]
  %v103 = vld [vmem:[%s1 + $0x158] sm:$0xf]
  %v104 = vld [vmem:[%s1 + $0x15c] sm:$0xf]
  %v105 = vld [vmem:[%s1 + $0x160] sm:$0xf]
  %v106 = vld [vmem:[%s1 + $0x164] sm:$0xf]
  %v107 = vld [vmem:[%s1 + $0x168] sm:$0xf]
  %v108 = vld [vmem:[%s1 + $0x16c] sm:$0xf]
  %v109 = vld [vmem:[%s1 + $0x170] sm:$0xf]
  %v110 = vld [vmem:[%s1 + $0x174] sm:$0xf]
  %v111 = vld [vmem:[%s1 + $0x178] sm:$0xf]
  %v112 = vld [vmem:[%s1 + $0x17c] sm:$0xf]
  %v113 = vld [vmem:[%s1 + $0x180] sm:$0xf]
  %v114 = vld [vmem:[%s1 + $0x184] sm:$0xf]
  %v115 = vld [vmem:[%s1 + $0x188] sm:$0xf]
  %v116 = vld [vmem:[%s1 + $0x18c] sm:$0xf]
  %v117 = vld [vmem:[%s1 + $0x190] sm:$0xf]
  %v118 = vld [vmem:[%s1 + $0x194] sm:$0xf]
  %v119 = vld [vmem:[%s1 + $0x198] sm:$0xf]
  %v120 = vld [vmem:[%s1 + $0x19c] sm:$0xf]
  %v121 = vld [vmem:[%s1 + $0x1a0] sm:$0xf]
  %v122 = vld [vmem:[%s1 + $0x1a4] sm:$0xf]
  %v123 = vld [vmem:[%s1 + $0x1a8] sm:$0xf]
  %v124 = vld [vmem:[%s1 + $0x1ac] sm:$0xf]
  %v125 = vld [vmem:[%s1 + $0x1b0] sm:$0xf]
  %v126 = vld [vmem:[%s1 + $0x1b4] sm:$0xf]
  %v127 = vld [vmem:[%s1 + $0x1b8] sm:$0xf]
  %v128 = vld [vmem:[%s1 + $0x1bc] sm:$0xf]
  %v129 = vld [vmem:[%s1 + $0x1c0] sm:$0xf]
  %v130 = vld [vmem:[%s1 + $0x1c4] sm:$0xf]
  %v131 = vld [vmem:[%s1 + $0x1c8] sm:$0xf]
  %v132 = vld [vmem:[%s1 + $0x1cc] sm:$0xf]
  %v133 = vld [vmem:[%s1 + $0x1d0] sm:$0xf]
  %v134 = vld [vmem:[%s1 + $0x1d4] sm:$0xf]
  %v135 = vld [vmem:[%s1 + $0x1d8] sm:$0xf]
  %v136 = vld [vmem:[%s1 + $0x1dc] sm:$0xf]
  %v137 = vld [vmem:[%s1 + $0x1e0] sm:$0xf]
  %v138 = vld [vmem:[%s1 + $0x1e4] sm:$0xf]
  %v139 = vld [vmem:[%s1 + $0x1e8] sm:$0xf]
  %v140 = vld [vmem:[%s1 + $0x1ec] sm:$0xf]
  %v141 = vld [vmem:[%s1 + $0x1f0] sm:$0xf]
  %v142 = vld [vmem:[%s1 + $0x1f4] sm:$0xf]
  %v143 = vld [vmem:[%s1 + $0x1f8] sm:$0xf]
  %v144 = vld [vmem:[%s1 + $0x1fc] sm:$0xf]
  %v145 = vld [vmem:[%s1 + $0x200] sm:$0xf]
  %v146 = vld [vmem:[%s1 + $0x204] sm:$0xf]
  %v147 = vld [vmem:[%s1 + $0x208] sm:$0xf]
  %v148 = vld [vmem:[%s1 + $0x20c] sm:$0xf]
  %v149 = vld [vmem:[%s1 + $0x210] sm:$0xf]
  %v150 = vld [vmem:[%s1 + $0x214] sm:$0xf]
  %v151 = vld [vmem:[%s1 + $0x218] sm:$0xf]
  %v152 = vld [vmem:[%s1 + $0x21c] sm:$0xf]
  %v153 = vld [vmem:[%s1 + $0x220] sm:$0xf]
  %v154 = vld [vmem:[%s1 + $0x224] sm:$0xf]
  %v155 = vld [vmem:[%s1 + $0x228] sm:$0xf]
  %v156 = vld [vmem:[%s1 + $0x22c] sm:$0xf]
  %v157 = vld [vmem:[%s1 + $0x230] sm:$0xf]
  %v158 = vld [vmem:[%s1 + $0x234] sm:$0xf]
  %v159 = vld [vmem:[%s1 + $0x238] sm:$0xf]
  %v160 = vld [vmem:[%s1 + $0x23c] sm:$0xf]
  %v161 = vld [vmem:[%s2] sm:$0x1]
  %v163 = vlaneseq
  %v164 = vshrl.u32 %v163, 7
  %v165 = vsub.s32 0, %v164
  %v166 = vrot.slane %v161, %v165
  %v170 = vcombine.high %v15, %v15
  %v172 = vunpack.c.l.s4 1966171168
  %v173 = vunpack.c.0.s8 %v172
  %v174 = vlaneseq
  %v175 = vshrl.u32 %v174, 7
  %v176 = vsub.s32 %v173, %v175
  %v177 = vrot.slane %v15, %v176
  %v179 = vunpack.c.l.s4 1966171168
  %v180 = vunpack.c.0.s8 %v179
  %v181 = vlaneseq
  %v182 = vshrl.u32 %v181, 7
  %v183 = vsub.s32 %v180, %v182
  %v184 = vrot.slane %v170, %v183
  %v185 = vcombine.high %v177, %v177
  %v186 = vcombine.high %v184, %v184
  %v188 = vunpack.c.l.s4 1966171168
  %v189 = vunpack.c.0.s8 %v188
  %v190 = vlaneseq
  %v191 = vshrl.u32 %v190, 7
  %v192 = vsub.s32 %v189, %v191
  %v193 = vrot.slane %v177, %v192
  %v195 = vunpack.c.l.s4 1966171168
  %v196 = vunpack.c.0.s8 %v195
  %v197 = vlaneseq
  %v198 = vshrl.u32 %v197, 7
  %v199 = vsub.s32 %v196, %v198
  %v200 = vrot.slane %v184, %v199
  %v202 = vunpack.c.l.s4 1966171168
  %v203 = vunpack.c.0.s8 %v202
  %v204 = vlaneseq
  %v205 = vshrl.u32 %v204, 7
  %v206 = vsub.s32 %v203, %v205
  %v207 = vrot.slane %v185, %v206
  %v209 = vunpack.c.l.s4 1966171168
  %v210 = vunpack.c.0.s8 %v209
  %v211 = vlaneseq
  %v212 = vshrl.u32 %v211, 7
  %v213 = vsub.s32 %v210, %v212
  %v214 = vrot.slane %v186, %v213
  %v215 = vcombine.high %v193, %v193
  %v216 = vcombine.high %v200, %v200
  %v217 = vcombine.high %v207, %v207
  %v218 = vcombine.high %v214, %v214
  %v220 = vunpack.c.l.s4 1966171168
  %v221 = vunpack.c.0.s8 %v220
  %v222 = vlaneseq
  %v223 = vshrl.u32 %v222, 7
  %v224 = vsub.s32 %v221, %v223
  %v225 = vrot.slane %v16, %v224
  %v227 = vunpack.c.l.s4 1966171168
  %v228 = vunpack.c.0.s8 %v227
  %v229 = vlaneseq
  %v230 = vshrl.u32 %v229, 7
  %v231 = vsub.s32 %v228, %v230
  %v232 = vrot.slane %v225, %v231
  %v386 = vunpack.c.l.b16 %v17
  %v387 = vunpack.c.l.b16 %v18
  %v388 = vunpack.c.l.b16 %v19
  %v389 = vunpack.c.l.b16 %v20
  %v390 = vunpack.c.l.b16 %v21
  %v391 = vunpack.c.l.b16 %v22
  %v392 = vunpack.c.l.b16 %v23
  %v393 = vunpack.c.l.b16 %v24
  %v394 = vunpack.c.l.b16 %v25
  %v395 = vunpack.c.l.b16 %v26
  %v396 = vunpack.c.l.b16 %v27
  %v397 = vunpack.c.l.b16 %v28
  %v398 = vunpack.c.l.b16 %v29
  %v399 = vunpack.c.l.b16 %v30
  %v400 = vunpack.c.l.b16 %v31
  %v401 = vunpack.c.l.b16 %v32
  %v402 = vunpack.c.l.b16 %v33
  %v403 = vunpack.c.l.b16 %v34
  %v404 = vunpack.c.l.b16 %v35
  %v405 = vunpack.c.l.b16 %v36
  %v406 = vunpack.c.l.b16 %v37
  %v407 = vunpack.c.l.b16 %v38
  %v408 = vunpack.c.l.b16 %v39
  %v409 = vunpack.c.l.b16 %v40
  %v410 = vunpack.c.l.b16 %v41
  %v411 = vunpack.c.l.b16 %v42
  %v412 = vunpack.c.l.b16 %v43
  %v413 = vunpack.c.l.b16 %v44
  %v414 = vunpack.c.l.b16 %v45
  %v415 = vunpack.c.l.b16 %v46
  %v416 = vunpack.c.l.b16 %v47
  %v417 = vunpack.c.l.b16 %v48
  %v418 = vunpack.c.l.b16 %v49
  %v419 = vunpack.c.l.b16 %v50
  %v420 = vunpack.c.l.b16 %v51
  %v421 = vunpack.c.l.b16 %v52
  %v422 = vunpack.c.l.b16 %v53
  %v423 = vunpack.c.l.b16 %v54
  %v424 = vunpack.c.l.b16 %v55
  %v425 = vunpack.c.l.b16 %v56
  %v426 = vunpack.c.l.b16 %v57
  %v427 = vunpack.c.l.b16 %v58
  %v428 = vunpack.c.l.b16 %v59
  %v429 = vunpack.c.l.b16 %v60
  %v430 = vunpack.c.l.b16 %v61
  %v431 = vunpack.c.l.b16 %v62
  %v432 = vunpack.c.l.b16 %v63
  %v433 = vunpack.c.l.b16 %v64
  %v434 = vunpack.c.l.b16 %v65
  %v435 = vunpack.c.l.b16 %v66
  %v436 = vunpack.c.l.b16 %v67
  %v437 = vunpack.c.l.b16 %v68
  %v438 = vunpack.c.l.b16 %v69
  %v439 = vunpack.c.l.b16 %v70
  %v440 = vunpack.c.l.b16 %v71
  %v441 = vunpack.c.l.b16 %v72
  %v442 = vunpack.c.l.b16 %v73
  %v443 = vunpack.c.l.b16 %v74
  %v444 = vunpack.c.l.b16 %v75
  %v445 = vunpack.c.l.b16 %v76
  %v446 = vunpack.c.l.b16 %v77
  %v447 = vunpack.c.l.b16 %v78
  %v448 = vunpack.c.l.b16 %v79
  %v449 = vunpack.c.l.b16 %v80
  %v450 = vunpack.c.l.b16 %v81
  %v451 = vunpack.c.l.b16 %v82
  %v452 = vunpack.c.l.b16 %v83
  %v453 = vunpack.c.l.b16 %v84
  %v454 = vunpack.c.l.b16 %v85
  %v455 = vunpack.c.l.b16 %v86
  %v456 = vunpack.c.l.b16 %v87
  %v457 = vunpack.c.l.b16 %v88
  %v458 = vunpack.c.l.b16 %v89
  %v459 = vunpack.c.l.b16 %v90
  %v460 = vunpack.c.l.b16 %v91
  %v461 = vunpack.c.l.b16 %v92
  %v462 = vunpack.c.l.b16 %v93
  %v463 = vunpack.c.l.b16 %v94
  %v464 = vunpack.c.l.b16 %v95
  %v465 = vunpack.c.l.b16 %v96
  %v466 = vunpack.c.l.b16 %v97
  %v467 = vunpack.c.l.b16 %v98
  %v468 = vunpack.c.l.b16 %v99
  %v469 = vunpack.c.l.b16 %v100
  %v470 = vunpack.c.l.b16 %v101
  %v471 = vunpack.c.l.b16 %v102
  %v472 = vunpack.c.l.b16 %v103
  %v473 = vunpack.c.l.b16 %v104
  %v474 = vunpack.c.l.b16 %v105
  %v475 = vunpack.c.l.b16 %v106
  %v476 = vunpack.c.l.b16 %v107
  %v477 = vunpack.c.l.b16 %v108
  %v478 = vunpack.c.l.b16 %v109
  %v479 = vunpack.c.l.b16 %v110
  %v480 = vunpack.c.l.b16 %v111
  %v481 = vunpack.c.l.b16 %v112
  %v482 = vunpack.c.l.b16 %v113
  %v483 = vunpack.c.l.b16 %v114
  %v484 = vunpack.c.l.b16 %v115
  %v485 = vunpack.c.l.b16 %v116
  %v486 = vunpack.c.l.b16 %v117
  %v487 = vunpack.c.l.b16 %v118
  %v488 = vunpack.c.l.b16 %v119
  %v489 = vunpack.c.l.b16 %v120
  %v490 = vunpack.c.l.b16 %v121
  %v491 = vunpack.c.l.b16 %v122
  %v492 = vunpack.c.l.b16 %v123
  %v493 = vunpack.c.l.b16 %v124
  %v494 = vunpack.c.l.b16 %v125
  %v495 = vunpack.c.l.b16 %v126
  %v496 = vunpack.c.l.b16 %v127
  %v497 = vunpack.c.l.b16 %v128
  %v498 = vunpack.c.l.b16 %v129
  %v499 = vunpack.c.l.b16 %v130
  %v500 = vunpack.c.l.b16 %v131
  %v501 = vunpack.c.l.b16 %v132
  %v502 = vunpack.c.l.b16 %v133
  %v503 = vunpack.c.l.b16 %v134
  %v504 = vunpack.c.l.b16 %v135
  %v505 = vunpack.c.l.b16 %v136
  %v506 = vunpack.c.l.b16 %v137
  %v507 = vunpack.c.l.b16 %v138
  %v508 = vunpack.c.l.b16 %v139
  %v509 = vunpack.c.l.b16 %v140
  %v510 = vunpack.c.l.b16 %v141
  %v511 = vunpack.c.l.b16 %v142
  %v512 = vunpack.c.l.b16 %v143
  %v513 = vunpack.c.l.b16 %v144
  %v514 = vunpack.c.l.b16 %v145
  %v515 = vunpack.c.l.b16 %v146
  %v516 = vunpack.c.l.b16 %v147
  %v517 = vunpack.c.l.b16 %v148
  %v518 = vunpack.c.l.b16 %v149
  %v519 = vunpack.c.l.b16 %v150
  %v520 = vunpack.c.l.b16 %v151
  %v521 = vunpack.c.l.b16 %v152
  %v522 = vunpack.c.l.b16 %v153
  %v523 = vunpack.c.l.b16 %v154
  %v524 = vunpack.c.l.b16 %v155
  %v525 = vunpack.c.l.b16 %v156
  %v526 = vunpack.c.l.b16 %v157
  %v527 = vunpack.c.l.b16 %v158
  %v528 = vunpack.c.l.b16 %v159
  %v529 = vunpack.c.l.b16 %v160
  %v530 = vpack.c.b16 %v387, %v386
  %v531 = vpack.c.b16 %v389, %v388
  %v532 = vpack.c.b16 %v391, %v390
  %v533 = vpack.c.b16 %v393, %v392
  %v534 = vpack.c.b16 %v395, %v394
  %v535 = vpack.c.b16 %v397, %v396
  %v536 = vpack.c.b16 %v399, %v398
  %v537 = vpack.c.b16 %v401, %v400
  %v538 = vpack.c.b16 %v403, %v402
  %v539 = vpack.c.b16 %v405, %v404
  %v540 = vpack.c.b16 %v407, %v406
  %v541 = vpack.c.b16 %v409, %v408
  %v542 = vpack.c.b16 %v411, %v410
  %v543 = vpack.c.b16 %v413, %v412
  %v544 = vpack.c.b16 %v415, %v414
  %v545 = vpack.c.b16 %v417, %v416
  %v546 = vpack.c.b16 %v419, %v418
  %v547 = vpack.c.b16 %v421, %v420
  %v548 = vpack.c.b16 %v423, %v422
  %v549 = vpack.c.b16 %v425, %v424
  %v550 = vpack.c.b16 %v427, %v426
  %v551 = vpack.c.b16 %v429, %v428
  %v552 = vpack.c.b16 %v431, %v430
  %v553 = vpack.c.b16 %v433, %v432
  %v554 = vpack.c.b16 %v435, %v434
  %v555 = vpack.c.b16 %v437, %v436
  %v556 = vpack.c.b16 %v439, %v438
  %v557 = vpack.c.b16 %v441, %v440
  %v558 = vpack.c.b16 %v443, %v442
  %v559 = vpack.c.b16 %v445, %v444
  %v560 = vpack.c.b16 %v447, %v446
  %v561 = vpack.c.b16 %v449, %v448
  %v562 = vpack.c.b16 %v451, %v450
  %v563 = vpack.c.b16 %v453, %v452
  %v564 = vpack.c.b16 %v455, %v454
  %v565 = vpack.c.b16 %v457, %v456
  %v566 = vpack.c.b16 %v459, %v458
  %v567 = vpack.c.b16 %v461, %v460
  %v568 = vpack.c.b16 %v463, %v462
  %v569 = vpack.c.b16 %v465, %v464
  %v570 = vpack.c.b16 %v467, %v466
  %v571 = vpack.c.b16 %v469, %v468
  %v572 = vpack.c.b16 %v471, %v470
  %v573 = vpack.c.b16 %v473, %v472
  %v574 = vpack.c.b16 %v475, %v474
  %v575 = vpack.c.b16 %v477, %v476
  %v576 = vpack.c.b16 %v479, %v478
  %v577 = vpack.c.b16 %v481, %v480
  %v578 = vpack.c.b16 %v483, %v482
  %v579 = vpack.c.b16 %v485, %v484
  %v580 = vpack.c.b16 %v487, %v486
  %v581 = vpack.c.b16 %v489, %v488
  %v582 = vpack.c.b16 %v491, %v490
  %v583 = vpack.c.b16 %v493, %v492
  %v584 = vpack.c.b16 %v495, %v494
  %v585 = vpack.c.b16 %v497, %v496
  %v586 = vpack.c.b16 %v499, %v498
  %v587 = vpack.c.b16 %v501, %v500
  %v588 = vpack.c.b16 %v503, %v502
  %v589 = vpack.c.b16 %v505, %v504
  %v590 = vpack.c.b16 %v507, %v506
  %v591 = vpack.c.b16 %v509, %v508
  %v592 = vpack.c.b16 %v511, %v510
  %v593 = vpack.c.b16 %v513, %v512
  %v594 = vpack.c.b16 %v515, %v514
  %v595 = vpack.c.b16 %v517, %v516
  %v596 = vpack.c.b16 %v519, %v518
  %v597 = vpack.c.b16 %v521, %v520
  %v598 = vpack.c.b16 %v523, %v522
  %v599 = vpack.c.b16 %v525, %v524
  %v600 = vpack.c.b16 %v527, %v526
  %v601 = vpack.c.b16 %v529, %v528
  %674 = vmatprep.subr.bf16.mxu0 0
  %675 = vmatpush1.bf16.msra.mxu0 %v530
  %676 = vmatprep.subr.bf16.mxu0 0
  %677 = vmatpush1.bf16.msra.mxu0 %v531
  %678 = vmatprep.subr.bf16.mxu0 0
  %679 = vmatpush1.bf16.msra.mxu0 %v532
  %680 = vmatprep.subr.bf16.mxu0 0
  %681 = vmatpush1.bf16.msra.mxu0 %v533
  %682 = vmatprep.subr.bf16.mxu0 0
  %683 = vmatpush1.bf16.msra.mxu0 %v534
  %684 = vmatprep.subr.bf16.mxu0 0
  %685 = vmatpush1.bf16.msra.mxu0 %v535
  %686 = vmatprep.subr.bf16.mxu0 0
  %687 = vmatpush1.bf16.msra.mxu0 %v536
  %688 = vmatprep.subr.bf16.mxu0 0
  %689 = vmatpush1.bf16.msra.mxu0 %v537
  %690 = vmatprep.subr.bf16.mxu0 0
  %691 = vmatpush1.bf16.msra.mxu0 %v538
  %692 = vmatprep.subr.bf16.mxu0 0
  %693 = vmatpush1.bf16.msra.mxu0 %v539
  %694 = vmatprep.subr.bf16.mxu0 0
  %695 = vmatpush1.bf16.msra.mxu0 %v540
  %696 = vmatprep.subr.bf16.mxu0 0
  %697 = vmatpush1.bf16.msra.mxu0 %v541
  %698 = vmatprep.subr.bf16.mxu0 0
  %699 = vmatpush1.bf16.msra.mxu0 %v542
  %700 = vmatprep.subr.bf16.mxu0 0
  %701 = vmatpush1.bf16.msra.mxu0 %v543
  %702 = vmatprep.subr.bf16.mxu0 0
  %703 = vmatpush1.bf16.msra.mxu0 %v544
  %704 = vmatprep.subr.bf16.mxu0 0
  %705 = vmatpush1.bf16.msra.mxu0 %v545
  %706 = vmatprep.mubr.bf16.mxu0 %v207
  %707 = vmatmul.mubr.bf16.gmra.mrb[0].mxu0 %v193
  %v708 = vpop.f32.mrb[0].mxu0
  %v709 = vadd.f32 %v166, %v708
  %v710 = vpop.f32.mrb[0].mxu0
  %v711 = vpop.f32.mrb[0].mxu0
  %v712 = vpop.f32.mrb[0].mxu0
  %713 = vdwg.mxu0
  %714 = vmatprep.subr.bf16.mxu0 0
  %715 = vmatpush1.bf16.msra.mxu0 %v546
  %716 = vmatprep.subr.bf16.mxu0 0
  %717 = vmatpush1.bf16.msra.mxu0 %v547
  %718 = vmatprep.subr.bf16.mxu0 0
  %719 = vmatpush1.bf16.msra.mxu0 %v548
  %720 = vmatprep.subr.bf16.mxu0 0
  %721 = vmatpush1.bf16.msra.mxu0 %v549
  %722 = vmatprep.subr.bf16.mxu0 0
  %723 = vmatpush1.bf16.msra.mxu0 %v550
  %724 = vmatprep.subr.bf16.mxu0 0
  %725 = vmatpush1.bf16.msra.mxu0 %v551
  %726 = vmatprep.subr.bf16.mxu0 0
  %727 = vmatpush1.bf16.msra.mxu0 %v552
  %728 = vmatprep.subr.bf16.mxu0 0
  %729 = vmatpush1.bf16.msra.mxu0 %v553
  %730 = vmatprep.subr.bf16.mxu0 0
  %731 = vmatpush1.bf16.msra.mxu0 %v554
  %732 = vmatprep.subr.bf16.mxu0 0
  %733 = vmatpush1.bf16.msra.mxu0 %v555
  %734 = vmatprep.subr.bf16.mxu0 0
  %735 = vmatpush1.bf16.msra.mxu0 %v556
  %736 = vmatprep.subr.bf16.mxu0 0
  %737 = vmatpush1.bf16.msra.mxu0 %v557
  %738 = vmatprep.subr.bf16.mxu0 0
  %739 = vmatpush1.bf16.msra.mxu0 %v558
  %740 = vmatprep.subr.bf16.mxu0 0
  %741 = vmatpush1.bf16.msra.mxu0 %v559
  %742 = vmatprep.subr.bf16.mxu0 0
  %743 = vmatpush1.bf16.msra.mxu0 %v560
  %744 = vmatprep.subr.bf16.mxu0 0
  %745 = vmatpush1.bf16.msra.mxu0 %v561
  %746 = vmatprep.mubr.bf16.mxu0 %v217
  %747 = vmatmul.mubr.bf16.gmra.mrb[0].mxu0 %v215
  %v748 = vpop.f32.mrb[0].mxu0
  %v749 = vadd.f32 %v709, %v748
  %v750 = vpop.f32.mrb[0].mxu0
  %v751 = vpop.f32.mrb[0].mxu0
  %v752 = vpop.f32.mrb[0].mxu0
  %753 = vdwg.mxu0
  %754 = vmatprep.subr.bf16.mxu0 0
  %755 = vmatpush1.bf16.msra.mxu0 %v562
  %756 = vmatprep.subr.bf16.mxu0 0
  %757 = vmatpush1.bf16.msra.mxu0 %v563
  %758 = vmatprep.subr.bf16.mxu0 0
  %759 = vmatpush1.bf16.msra.mxu0 %v564
  %760 = vmatprep.subr.bf16.mxu0 0
  %761 = vmatpush1.bf16.msra.mxu0 %v565
  %762 = vmatprep.subr.bf16.mxu0 0
  %763 = vmatpush1.bf16.msra.mxu0 %v566
  %764 = vmatprep.subr.bf16.mxu0 0
  %765 = vmatpush1.bf16.msra.mxu0 %v567
  %766 = vmatprep.subr.bf16.mxu0 0
  %767 = vmatpush1.bf16.msra.mxu0 %v568
  %768 = vmatprep.subr.bf16.mxu0 0
  %769 = vmatpush1.bf16.msra.mxu0 %v569
  %770 = vmatprep.subr.bf16.mxu0 0
  %771 = vmatpush1.bf16.msra.mxu0 %v570
  %772 = vmatprep.subr.bf16.mxu0 0
  %773 = vmatpush1.bf16.msra.mxu0 %v571
  %774 = vmatprep.subr.bf16.mxu0 0
  %775 = vmatpush1.bf16.msra.mxu0 %v572
  %776 = vmatprep.subr.bf16.mxu0 0
  %777 = vmatpush1.bf16.msra.mxu0 %v573
  %778 = vmatprep.subr.bf16.mxu0 0
  %779 = vmatpush1.bf16.msra.mxu0 %v574
  %780 = vmatprep.subr.bf16.mxu0 0
  %781 = vmatpush1.bf16.msra.mxu0 %v575
  %782 = vmatprep.subr.bf16.mxu0 0
  %783 = vmatpush1.bf16.msra.mxu0 %v576
  %784 = vmatprep.subr.bf16.mxu0 0
  %785 = vmatpush1.bf16.msra.mxu0 %v577
  %786 = vmatprep.mubr.bf16.mxu0 %v214
  %787 = vmatmul.mubr.bf16.gmra.mrb[0].mxu0 %v200
  %v788 = vpop.f32.mrb[0].mxu0
  %v789 = vadd.f32 %v749, %v788
  %v790 = vpop.f32.mrb[0].mxu0
  %v791 = vpop.f32.mrb[0].mxu0
  %v792 = vpop.f32.mrb[0].mxu0
  %793 = vdwg.mxu0
  %794 = vmatprep.subr.bf16.mxu0 0
  %795 = vmatpush1.bf16.msra.mxu0 %v578
  %796 = vmatprep.subr.bf16.mxu0 0
  %797 = vmatpush1.bf16.msra.mxu0 %v579
  %798 = vmatprep.subr.bf16.mxu0 0
  %799 = vmatpush1.bf16.msra.mxu0 %v580
  %800 = vmatprep.subr.bf16.mxu0 0
  %801 = vmatpush1.bf16.msra.mxu0 %v581
  %802 = vmatprep.subr.bf16.mxu0 0
  %803 = vmatpush1.bf16.msra.mxu0 %v582
  %804 = vmatprep.subr.bf16.mxu0 0
  %805 = vmatpush1.bf16.msra.mxu0 %v583
  %806 = vmatprep.subr.bf16.mxu0 0
  %807 = vmatpush1.bf16.msra.mxu0 %v584
  %808 = vmatprep.subr.bf16.mxu0 0
  %809 = vmatpush1.bf16.msra.mxu0 %v585
  %810 = vmatprep.subr.bf16.mxu0 0
  %811 = vmatpush1.bf16.msra.mxu0 %v586
  %812 = vmatprep.subr.bf16.mxu0 0
  %813 = vmatpush1.bf16.msra.mxu0 %v587
  %814 = vmatprep.subr.bf16.mxu0 0
  %815 = vmatpush1.bf16.msra.mxu0 %v588
  %816 = vmatprep.subr.bf16.mxu0 0
  %817 = vmatpush1.bf16.msra.mxu0 %v589
  %818 = vmatprep.subr.bf16.mxu0 0
  %819 = vmatpush1.bf16.msra.mxu0 %v590
  %820 = vmatprep.subr.bf16.mxu0 0
  %821 = vmatpush1.bf16.msra.mxu0 %v591
  %822 = vmatprep.subr.bf16.mxu0 0
  %823 = vmatpush1.bf16.msra.mxu0 %v592
  %824 = vmatprep.subr.bf16.mxu0 0
  %825 = vmatpush1.bf16.msra.mxu0 %v593
  %826 = vmatprep.mubr.bf16.mxu0 %v218
  %827 = vmatmul.mubr.bf16.gmra.mrb[0].mxu0 %v216
  %v828 = vpop.f32.mrb[0].mxu0
  %v829 = vadd.f32 %v789, %v828
  %v830 = vpop.f32.mrb[0].mxu0
  %v831 = vpop.f32.mrb[0].mxu0
  %v832 = vpop.f32.mrb[0].mxu0
  %833 = vdwg.mxu0
  %834 = vmatprep.subr.bf16.mxu0 0
  %835 = vmatpush1.bf16.msra.mxu0 %v594
  %836 = vmatprep.subr.bf16.mxu0 0
  %837 = vmatpush1.bf16.msra.mxu0 %v595
  %838 = vmatprep.subr.bf16.mxu0 0
  %839 = vmatpush1.bf16.msra.mxu0 %v596
  %840 = vmatprep.subr.bf16.mxu0 0
  %841 = vmatpush1.bf16.msra.mxu0 %v597
  %842 = vmatprep.subr.bf16.mxu0 0
  %843 = vmatpush1.bf16.msra.mxu0 %v598
  %844 = vmatprep.subr.bf16.mxu0 0
  %845 = vmatpush1.bf16.msra.mxu0 %v599
  %846 = vmatprep.subr.bf16.mxu0 0
  %847 = vmatpush1.bf16.msra.mxu0 %v600
  %848 = vmatprep.subr.bf16.mxu0 0
  %849 = vmatpush1.bf16.msra.mxu0 %v601
  %850 = vmatprep.subr.bf16.mxu0 0
  %851 = vmatpush1.bf16.msra.mxu0 0
  %852 = vmatprep.subr.bf16.mxu0 0
  %853 = vmatpush1.bf16.msra.mxu0 0
  %854 = vmatprep.subr.bf16.mxu0 0
  %855 = vmatpush1.bf16.msra.mxu0 0
  %856 = vmatprep.subr.bf16.mxu0 0
  %857 = vmatpush1.bf16.msra.mxu0 0
  %858 = vmatprep.subr.bf16.mxu0 0
  %859 = vmatpush1.bf16.msra.mxu0 0
  %860 = vmatprep.subr.bf16.mxu0 0
  %861 = vmatpush1.bf16.msra.mxu0 0
  %862 = vmatprep.subr.bf16.mxu0 0
  %863 = vmatpush1.bf16.msra.mxu0 0
  %864 = vmatprep.subr.bf16.mxu0 0
  %865 = vmatpush1.bf16.msra.mxu0 0
  %866 = vmatprep.mubr.bf16.mxu0 0
  %867 = vmatmul.mubr.bf16.gmra.mrb[0].mxu0 %v232
  %v868 = vpop.f32.mrb[0].mxu0
  %v869 = vadd.f32 %v829, %v868
  %v870 = vpop.f32.mrb[0].mxu0
  %v871 = vpop.f32.mrb[0].mxu0
  %v872 = vpop.f32.mrb[0].mxu0
  %873 = vdwg.mxu0
  %v874 = vmax.f32 %v869, 0.0
  %v875 = vpack.c.bf16 %v874, %v874
  %876 = vst [vmem:[%s3] sm:$0x1] %v875
  // Predicated region
  $region14: #{teacher_forward.12} parent=0 // pred_check
    _
  $region15: #{teacher_forward.12} parent=0 // pred_check_branch
    %878 = sbr.rel (0) target = $region17
  $region16: #{teacher_forward.12} parent=0 // pred_region
    _
  $region17: #{teacher_forward.12} parent=0 // pred_fallthru
    _
  // Predicated region
  $region18: #{teacher_forward.12} parent=0 // pred_check
    _
  $region19: #{teacher_forward.12} parent=0 // pred_check_branch
    %880 = sbr.rel (0) target = $region21
  $region20: #{teacher_forward.12} parent=0 // pred_region
    _
  $region21: #{teacher_forward.12} parent=0 // pred_fallthru
    _

// kernel: teacher_forward.13
$region0: #{teacher_forward.13}
  #allocation0 [shape = 'u32[]', space=smem, size = 0x4, offset = 0x4, fixed_abs, tag = 'smem constant byte address 0x4 - core index']
  #allocation1 [shape = 'u32[144,128]{1,0:T(1,128)}', space=vmem, size = 0x12000, scoped, tag = 'internal scratch']
  %s0 = inlined_call_operand.vmem [shape: bf16[2,128], index: 0, kind: input, shape index: {}]
  %s1 = inlined_call_operand.vmem [shape: bf16[128,128], index: 1, kind: input, shape index: {}]
  %s2 = inlined_call_operand.vmem [shape: f32[1,128], index: 2, kind: input, shape index: {}]
  %s3 = inlined_call_operand.hbm [shape: f32[2,128], index: 3, kind: output, shape index: {}]
  %s4 = sld [smem:[#allocation0]]
  $region22: #{teacher_forward.13} parent=0
    _
  %s6 = ssub.s32 1, %s4
  %s7 = scalar_select 0, %s6, %s4
  $region1: #{teacher_forward.13} parent=0
    #allocation2 [shape = 'u8[1024]{0}', space=vmem, size = 0x400, scoped, tag = 'output window, operand 0, single buffered']
    #allocation3 [shape = 's32[1]{0}', space=sflag, size = 0x4, scoped, tag = 'scoped memory for teacher_forward.13']
    %8 = vsyncpa [#allocation3], 0
    // Predicated region
    $region2: #{teacher_forward.13} parent=1 // pred_check
      _
    $region3: #{teacher_forward.13} parent=1 // pred_check_branch
      %10 = sbr.rel (0) target = $region5
    $region4: #{teacher_forward.13} parent=1 // pred_region
      _
    $region5: #{teacher_forward.13} parent=1 // pred_fallthru
      _
    // Predicated region
    $region6: #{teacher_forward.13} parent=1 // pred_check
      _
    $region7: #{teacher_forward.13} parent=1 // pred_check_branch
      %12 = sbr.rel (0) target = $region9
    $region8: #{teacher_forward.13} parent=1 // pred_region
      _
    $region9: #{teacher_forward.13} parent=1 // pred_fallthru
      _
    // Predicated region
    $region10: #{teacher_forward.13} parent=1 // pred_check
      _
    $region11: #{teacher_forward.13} parent=1 // pred_check_branch
      %14 = sbr.rel (0) target = $region13
    $region12: #{teacher_forward.13} parent=1 // pred_region
      _
    $region13: #{teacher_forward.13} parent=1 // pred_fallthru
      _
    %v16 = vld [vmem:[%s0] sm:$0x1]
    %v17 = vld [vmem:[%s1] sm:$0xf]
    %v18 = vld [vmem:[%s1 + $0x4] sm:$0xf]
    %v19 = vld [vmem:[%s1 + $0x8] sm:$0xf]
    %v20 = vld [vmem:[%s1 + $0xc] sm:$0xf]
    %v21 = vld [vmem:[%s1 + $0x10] sm:$0xf]
    %v22 = vld [vmem:[%s1 + $0x14] sm:$0xf]
    %v23 = vld [vmem:[%s1 + $0x18] sm:$0xf]
    %v24 = vld [vmem:[%s1 + $0x1c] sm:$0xf]
    %v25 = vld [vmem:[%s1 + $0x20] sm:$0xf]
    %v26 = vld [vmem:[%s1 + $0x24] sm:$0xf]
    %v27 = vld [vmem:[%s1 + $0x28] sm:$0xf]
    %v28 = vld [vmem:[%s1 + $0x2c] sm:$0xf]
    %v29 = vld [vmem:[%s1 + $0x30] sm:$0xf]
    %v30 = vld [vmem:[%s1 + $0x34] sm:$0xf]
    %v31 = vld [vmem:[%s1 + $0x38] sm:$0xf]
    %v32 = vld [vmem:[%s1 + $0x3c] sm:$0xf]
    %v33 = vld [vmem:[%s2] sm:$0x1]
    %v35 = vlaneseq
    %v36 = vshrl.u32 %v35, 7
    %v37 = vsub.s32 0, %v36
    %v38 = vrot.slane %v33, %v37
    %v56 = vunpack.c.l.b16 %v17
    %v57 = vunpack.c.l.b16 %v18
    %v58 = vunpack.c.l.b16 %v19
    %v59 = vunpack.c.l.b16 %v20
    %v60 = vunpack.c.l.b16 %v21
    %v61 = vunpack.c.l.b16 %v22
    %v62 = vunpack.c.l.b16 %v23
    %v63 = vunpack.c.l.b16 %v24
    %v64 = vunpack.c.l.b16 %v25
    %v65 = vunpack.c.l.b16 %v26
    %v66 = vunpack.c.l.b16 %v27
    %v67 = vunpack.c.l.b16 %v28
    %v68 = vunpack.c.l.b16 %v29
    %v69 = vunpack.c.l.b16 %v30
    %v70 = vunpack.c.l.b16 %v31
    %v71 = vunpack.c.l.b16 %v32
    %v72 = vpack.c.b16 %v57, %v56
    %v73 = vpack.c.b16 %v59, %v58
    %v74 = vpack.c.b16 %v61, %v60
    %v75 = vpack.c.b16 %v63, %v62
    %v76 = vpack.c.b16 %v65, %v64
    %v77 = vpack.c.b16 %v67, %v66
    %v78 = vpack.c.b16 %v69, %v68
    %v79 = vpack.c.b16 %v71, %v70
    %88 = vmatprep.subr.bf16.mxu0 0
    %89 = vmatpush1.bf16.msra.mxu0 %v72
    %90 = vmatprep.subr.bf16.mxu0 0
    %91 = vmatpush1.bf16.msra.mxu0 %v73
    %92 = vmatprep.subr.bf16.mxu0 0
    %93 = vmatpush1.bf16.msra.mxu0 %v74
    %94 = vmatprep.subr.bf16.mxu0 0
    %95 = vmatpush1.bf16.msra.mxu0 %v75
    %96 = vmatprep.subr.bf16.mxu0 0
    %97 = vmatpush1.bf16.msra.mxu0 %v76
    %98 = vmatprep.subr.bf16.mxu0 0
    %99 = vmatpush1.bf16.msra.mxu0 %v77
    %100 = vmatprep.subr.bf16.mxu0 0
    %101 = vmatpush1.bf16.msra.mxu0 %v78
    %102 = vmatprep.subr.bf16.mxu0 0
    %103 = vmatpush1.bf16.msra.mxu0 %v79
    %104 = vmatprep.subr.bf16.mxu0 0
    %105 = vmatpush1.bf16.msra.mxu0 0
    %106 = vmatprep.subr.bf16.mxu0 0
    %107 = vmatpush1.bf16.msra.mxu0 0
    %108 = vmatprep.subr.bf16.mxu0 0
    %109 = vmatpush1.bf16.msra.mxu0 0
    %110 = vmatprep.subr.bf16.mxu0 0
    %111 = vmatpush1.bf16.msra.mxu0 0
    %112 = vmatprep.subr.bf16.mxu0 0
    %113 = vmatpush1.bf16.msra.mxu0 0
    %114 = vmatprep.subr.bf16.mxu0 0
    %115 = vmatpush1.bf16.msra.mxu0 0
    %116 = vmatprep.subr.bf16.mxu0 0
    %117 = vmatpush1.bf16.msra.mxu0 0
    %118 = vmatprep.subr.bf16.mxu0 0
    %119 = vmatpush1.bf16.msra.mxu0 0
    %120 = vmatprep.mubr.bf16.mxu0 0
    %121 = vmatmul.mubr.bf16.gmra.mrb[0].mxu0 %v16
    %v122 = vpop.f32.mrb[0].mxu0
    %v123 = vadd.f32 %v38, %v122
    %v124 = vpop.f32.mrb[0].mxu0
    %v125 = vpop.f32.mrb[0].mxu0
    %v126 = vpop.f32.mrb[0].mxu0
    %127 = vdwg.mxu0
    %128 = vst [vmem:[#allocation2] sm:$0x3] %v123
    // Predicated region
    $region14: #{teacher_forward.13} parent=1 // pred_check
      _
    $region15: #{teacher_forward.13} parent=1 // pred_check_branch
      %130 = sbr.rel (0) target = $region17
    $region16: #{teacher_forward.13} parent=1 // pred_region
      %s132 = ssub.s32 32, 32
      %133 = vsyncadd [#allocation3], %s132
      %s135 = sshll.u32 [#allocation2], 4
      %s136 = int_to_ptr.vmem [resolvable:$true] %s135
      %138 = dma.vmem_to_hbm [thread:$0]  %s136, 32, %s3, [#allocation3]
    $region17: #{teacher_forward.13} parent=1 // pred_fallthru
      _
    // Predicated region
    $region18: #{teacher_forward.13} parent=1 // pred_check
      _
    $region19: #{teacher_forward.13} parent=1 // pred_check_branch
      %140 = sbr.rel (0) target = $region21
    $region20: #{teacher_forward.13} parent=1 // pred_region
      %141 = dma.done [#allocation3], 32
    $region21: #{teacher_forward.13} parent=1 // pred_fallthru
      _
    %142 = vsyncpa [#allocation3], 1

</llo_original>
